<compile_context>
chip_gen: v5e
topology: v5e:2x2
jax: 0.10.0
libtpu: 0.0.40
codegen_flags: <defaults>
</compile_context>

<pallas_src>
import numpy as np
import jax
import jax.numpy as jnp
from jax.experimental import pallas as pl
from jax.experimental.pallas import tpu as pltpu


# ---------------------------------------------------------------------------
# Exact 1-D resize factors (match PyTorch semantics), built at trace time.
# ---------------------------------------------------------------------------
def _adaptive_avg_pool_matrix(in_size: int, out_size: int) -> np.ndarray:
    """1-D factor of F.adaptive_avg_pool2d (bins: [floor(i*s/t), ceil((i+1)s/t)))."""
    m = np.zeros((out_size, in_size), dtype=np.float32)
    for i in range(out_size):
        start = (i * in_size) // out_size
        end = -((-(i + 1) * in_size) // out_size)          # ceil
        m[i, start:end] = 1.0 / float(end - start)
    return m


def _bilinear_matrix(in_size: int, out_size: int) -> np.ndarray:
    """1-D factor of F.interpolate(mode='bilinear', align_corners=True)."""
    m = np.zeros((out_size, in_size), dtype=np.float32)
    if out_size == 1 or in_size == 1:
        m[:, 0] = 1.0
        return m
    scale = (in_size - 1) / (out_size - 1)
    for i in range(out_size):
        src = i * scale
        i0 = min(int(np.floor(src)), in_size - 1)
        i1 = min(i0 + 1, in_size - 1)
        frac = src - i0
        m[i, i0] += 1.0 - frac
        m[i, i1] += frac
    return m


def _resize_1d(in_size: int, target: int, mode: str) -> np.ndarray:
    if mode == "pool":
        return _adaptive_avg_pool_matrix(in_size, target)
    if mode == "bilinear":
        return _bilinear_matrix(in_size, target)
    assert in_size == target, "identity branch requires matching size"
    return np.eye(target, dtype=np.float32)


def _padded_resize_1d(in_size: int, target: int, mode: str) -> np.ndarray:
    """Resize matrix with one extra zero row on each side -> fused zero-pad."""
    p = np.zeros((target + 2, in_size), dtype=np.float32)
    p[1:target + 1, :] = _resize_1d(in_size, target, mode)
    return p


# ---------------------------------------------------------------------------
# Pallas kernels: fused 4 x (conv3x3 + bias) followed by elementwise product.
# ---------------------------------------------------------------------------
def _im2col_slab(x_ref):
    """(1, Hp, Wp, C) zero-padded NHWC ref -> (Ht*Wt, 9C) patch slab.

    Column order is tap-major (dy, dx) / channel-minor, matching _pack_weight.
    """
    _, hp, wp, c = x_ref.shape
    ht, wt = hp - 2, wp - 2
    x = x_ref[0]                                     # (hp, wp, c)
    cols = [x[dy:dy + ht, dx:dx + wt, :] for dy in range(3) for dx in range(3)]
    return jnp.concatenate(cols, axis=-1).reshape(ht * wt, 9 * c)


def _sdi_kernel_shared(x0_ref, x1_ref, x2_ref, x3_ref, w_ref, b_ref, out_ref):
    """Shared-conv (the real module: [conv]*4).

    x*_ref: (1, Hp, Wp, C) bf16;  w_ref: (9C, C) bf16;  b_ref: (1, C) f32;
    out_ref: (1, C, Ht*Wt) f32 (lane-dense, flat NCHW).
    """
    _, hp, wp, c = x0_ref.shape
    m = (hp - 2) * (wp - 2)
    # One big matmul for all four inputs: (4m, 9C) @ (9C, C), f32 accumulate.
    slab = jnp.concatenate(
        [_im2col_slab(r) for r in (x0_ref, x1_ref, x2_ref, x3_ref)], axis=0)
    y = jnp.dot(slab, w_ref[...], preferred_element_type=jnp.float32)
    y = y + b_ref[...]                                   # (4m, C) + (1, C)
    prod = y[0:m] * y[m:2 * m] * y[2 * m:3 * m] * y[3 * m:4 * m]   # (m, C)
    out_ref[0] = prod.T.astype(out_ref.dtype)            # (C, m): dense stores


def _sdi_kernel_multi(x0_ref, x1_ref, x2_ref, x3_ref, w_ref, b_ref, out_ref):
    """Per-input convs (generalization).  w_ref: (4, 9C, C); b_ref: (4, C)."""
    _, hp, wp, c = x0_ref.shape
    m = (hp - 2) * (wp - 2)
    prod = None
    for i, x_ref in enumerate((x0_ref, x1_ref, x2_ref, x3_ref)):
        # Static-index ref read: only one (9C, C) weight slab live at a time.
        y = jnp.dot(_im2col_slab(x_ref), w_ref[i],
                    preferred_element_type=jnp.float32)
        y = y + b_ref[i:i + 1, :]
        prod = y if prod is None else prod * y
    out_ref[0] = prod.T.astype(out_ref.dtype)


# ---------------------------------------------------------------------------
# Wrapper (forward pass of SDI)
# ---------------------------------------------------------------------------
def _pack_weight(w):
    """OIHW (C, C, 3, 3) -> im2col (9C, C), tap-major / input-channel-minor."""
    c = int(w.shape[0])
    return jnp.transpose(w, (2, 3, 1, 0)).reshape(9 * c, c).astype(jnp.bfloat16)


def sdi_forward(xs, anchor, weights, biases):
    """xs: list of 4 NCHW arrays (N, C, Hi, Wi); anchor: (N, C, T, T) (shape/
    dtype only).  weights/biases: a single (C,C,3,3)/(C,) pair (the module's
    true [conv]*4 sharing) or lists of 4 such pairs.  Returns NCHW output."""
    assert len(xs) == 4
    n, c = int(anchor.shape[0]), int(anchor.shape[1])
    assert int(anchor.shape[-2]) == int(anchor.shape[-1]), "anchor must be square"
    target = int(anchor.shape[-1])         # PyTorch branches on the last dim
    hp = wp = target + 2
    m = target * target

    # Resize + zero-pad + NCHW->NHWC in one fused pass per input, bf16 output.
    # Mode is chosen from the LAST spatial dim only and applied to both axes,
    # exactly as the PyTorch forward does.
    xs_padded = []
    for x in xs:
        hi, wi = int(x.shape[2]), int(x.shape[3])
        if wi > target:
            mode = "pool"
        elif wi < target:
            mode = "bilinear"
        else:
            mode = "identity"
        if mode == "identity":
            assert hi == target, "identity branch requires matching H"
            xp = jnp.pad(jnp.transpose(x, (0, 2, 3, 1)),
                         ((0, 0), (1, 1), (1, 1), (0, 0)))
        else:
            ah = jnp.asarray(_padded_resize_1d(hi, target, mode))    # (hp, hi)
            aw = jnp.asarray(_padded_resize_1d(wi, target, mode))    # (wp, wi)
            xp = jnp.einsum("oh,nchw,pw->nopc", ah, x, aw)           # default prec
        xs_padded.append(xp.astype(jnp.bfloat16))                    # (n,hp,wp,c)

    shared = not isinstance(weights, (list, tuple))
    if shared:
        w_all = _pack_weight(weights)                                # (9c, c)
        b_all = jnp.asarray(biases, dtype=jnp.float32).reshape(1, c)
        kernel = _sdi_kernel_shared
        w_spec = pl.BlockSpec((9 * c, c), lambda i: (0, 0))
        b_spec = pl.BlockSpec((1, c), lambda i: (0, 0))
        n_groups = 1
    else:
        assert len(weights) == 4 and len(biases) == 4
        w_all = jnp.stack([_pack_weight(w) for w in weights], 0)     # (4,9c,c)
        b_all = jnp.stack([jnp.asarray(b, dtype=jnp.float32) for b in biases], 0)
        kernel = _sdi_kernel_multi
        w_spec = pl.BlockSpec((4, 9 * c, c), lambda i: (0, 0, 0))
        b_spec = pl.BlockSpec((4, c), lambda i: (0, 0))
        n_groups = 4

    x_spec = pl.BlockSpec((1, hp, wp, c), lambda i: (i, 0, 0, 0))
    o_spec = pl.BlockSpec((1, c, m), lambda i: (i, 0, 0))

    # Per-step working set: double-buffered I/O + in-register im2col slabs.
    io_bytes = (4 * hp * wp * c * 2 + n_groups * (9 * c * c * 2 + 4 * c)
                + c * m * 4)
    tmp_bytes = 4 * m * 9 * c * 2 + 2 * 4 * m * c * 4
    vmem_limit = int(min(64 * 2 ** 20,
                         max(4 * (2 * io_bytes + tmp_bytes), 16 * 2 ** 20)))

    flops = 2 * n * 4 * m * 9 * c * c + 5 * n * m * c
    bytes_accessed = n * (4 * hp * wp * c * 2 + c * m * 4) + int(w_all.size) * 2

    out_flat = pl.pallas_call(
        kernel,
        out_shape=jax.ShapeDtypeStruct((n, c, m), anchor.dtype),
        grid_spec=pltpu.PrefetchScalarGridSpec(
            num_scalar_prefetch=0,
            grid=(n,),
            in_specs=[x_spec, x_spec, x_spec, x_spec, w_spec, b_spec],
            out_specs=o_spec,
        ),
        compiler_params=pltpu.CompilerParams(
            dimension_semantics=("parallel",),
            vmem_limit_bytes=vmem_limit),
        cost_estimate=pl.CostEstimate(flops=flops, transcendentals=0,
                                      bytes_accessed=bytes_accessed),
    )(*xs_padded, w_all, b_all)

    # (n, c, Ht*Wt) -> (n, c, Ht, Wt): contiguous reshape (no transpose pass).
    return out_flat.reshape(n, c, target, target)


# ---------------------------------------------------------------------------
# Pure-JAX reference mirroring the PyTorch module (independent code path).
# ---------------------------------------------------------------------------
def _sdi_ref(xs, anchor, weights, biases):
    target = int(anchor.shape[-1])
    ans = jnp.ones_like(anchor)
    for i, x in enumerate(xs):
        hi, wi = int(x.shape[2]), int(x.shape[3])
        if wi > target:
            mode = "pool"
        elif wi < target:
            mode = "bilinear"
        else:
            mode = "identity"
        if mode != "identity":
            ah = jnp.asarray(_resize_1d(hi, target, mode))
            aw = jnp.asarray(_resize_1d(wi, target, mode))
            x = jnp.einsum("oh,nchw,pw->ncop", ah, x, aw,
                           precision=jax.lax.Precision.HIGHEST)
        y = jax.lax.conv_general_dilated(
            x, weights[i], window_strides=(1, 1), padding=((1, 1), (1, 1)),
            dimension_numbers=("NCHW", "OIHW", "NCHW"),
            precision=jax.lax.Precision.HIGHEST)
        y = y + biases[i][None, :, None, None]
        ans = ans * y
    return ans


if __name__ == "__main__":
    key = jax.random.PRNGKey(0)
    kx1, kx2, kx3, kx4, ka, kw, kb = jax.random.split(key, 7)

    N, C, T = 2, 4, 16
    xs = [
        jax.random.normal(kx1, (N, C, 2 * T, 2 * T), jnp.float32),   # pooled down
        jax.random.normal(kx2, (N, C, T, T), jnp.float32),           # identity
        jax.random.normal(kx3, (N, C, T // 2, T // 2), jnp.float32), # bilinear up
        jax.random.normal(kx4, (N, C, T, T), jnp.float32),           # identity
    ]
    anchor = jax.random.normal(ka, (N, C, T, T), jnp.float32)

    # The PyTorch ModuleList is [conv] * 4 -> ONE shared conv; mirror that.
    w = jax.random.normal(kw, (C, C, 3, 3), jnp.float32) / float(3.0 * C ** 0.5)
    b = 0.1 * jax.random.normal(kb, (C,), jnp.float32)

    ref = _sdi_ref(xs, anchor, [w] * 4, [b] * 4)

    def check(out):
        out = jax.block_until_ready(out)
        assert out.shape == ref.shape, (out.shape, ref.shape)
        assert out.dtype == ref.dtype, (out.dtype, ref.dtype)
        # bf16 inputs/weights with f32 accumulation: tolerance covers the
        # rounding of a product of four bf16 3x3 convolutions.
        rel_err = float(jnp.max(jnp.abs(out - ref) / (jnp.abs(ref) + 1.0)))
        assert rel_err <= 3e-2, rel_err

    check(jax.jit(sdi_forward)(xs, anchor, w, b))              # shared-conv path
    check(jax.jit(sdi_forward)(xs, anchor, [w] * 4, [b] * 4))  # per-input path
    print("KERNEL_OK")
</pallas_src>

<mosaic_0001>
module attributes {stable_mosaic.version = 11 : i64} {
  func.func @_sdi_kernel_shared(%arg0: i32, %arg1: memref<1x18x18x4xbf16, #tpu.memory_space<vmem>>, %arg2: memref<1x18x18x4xbf16, #tpu.memory_space<vmem>>, %arg3: memref<1x18x18x4xbf16, #tpu.memory_space<vmem>>, %arg4: memref<1x18x18x4xbf16, #tpu.memory_space<vmem>>, %arg5: memref<36x4xbf16, #tpu.memory_space<vmem>>, %arg6: memref<1x4xf32, #tpu.memory_space<vmem>>, %arg7: memref<1x4x256xf32, #tpu.memory_space<vmem>>) attributes {dimension_semantics = [#tpu.dimension_semantics<parallel>], iteration_bounds = array<i64: 2>, scalar_prefetch = 0 : i64, scratch_operands = 0 : i64, tpu.core_type = #tpu.core_type<tc>, window_params = [{transform_indices = @transform_0, window_bounds = array<i64: 1, 18, 18, 4>}, {transform_indices = @transform_1, window_bounds = array<i64: 1, 18, 18, 4>}, {transform_indices = @transform_2, window_bounds = array<i64: 1, 18, 18, 4>}, {transform_indices = @transform_3, window_bounds = array<i64: 1, 18, 18, 4>}, {pipeline_mode = #tpu.pipeline_mode<synchronous>, transform_indices = @transform_4, window_bounds = array<i64: 36, 4>}, {pipeline_mode = #tpu.pipeline_mode<synchronous>, transform_indices = @transform_5, window_bounds = array<i64: 1, 4>}, {transform_indices = @transform_6, window_bounds = array<i64: 1, 4, 256>}]} {
    %c0 = arith.constant 0 : index
    %c0_0 = arith.constant 0 : index
    %c0_1 = arith.constant 0 : index
    %c0_2 = arith.constant 0 : index
    %0 = vector.load %arg1[%c0, %c0_0, %c0_1, %c0_2] : memref<1x18x18x4xbf16, #tpu.memory_space<vmem>>, vector<1x18x18x4xbf16>
    %1 = vector.shape_cast %0 : vector<1x18x18x4xbf16> to vector<18x18x4xbf16>
    %2 = vector.extract_strided_slice %1 {offsets = [0, 0, 0], sizes = [16, 16, 4], strides = [1, 1, 1]} : vector<18x18x4xbf16> to vector<16x16x4xbf16>
    %3 = vector.extract_strided_slice %1 {offsets = [0, 1, 0], sizes = [16, 16, 4], strides = [1, 1, 1]} : vector<18x18x4xbf16> to vector<16x16x4xbf16>
    %4 = vector.extract_strided_slice %1 {offsets = [0, 2, 0], sizes = [16, 16, 4], strides = [1, 1, 1]} : vector<18x18x4xbf16> to vector<16x16x4xbf16>
    %5 = vector.extract_strided_slice %1 {offsets = [1, 0, 0], sizes = [16, 16, 4], strides = [1, 1, 1]} : vector<18x18x4xbf16> to vector<16x16x4xbf16>
    %6 = vector.extract_strided_slice %1 {offsets = [1, 1, 0], sizes = [16, 16, 4], strides = [1, 1, 1]} : vector<18x18x4xbf16> to vector<16x16x4xbf16>
    %7 = vector.extract_strided_slice %1 {offsets = [1, 2, 0], sizes = [16, 16, 4], strides = [1, 1, 1]} : vector<18x18x4xbf16> to vector<16x16x4xbf16>
    %8 = vector.extract_strided_slice %1 {offsets = [2, 0, 0], sizes = [16, 16, 4], strides = [1, 1, 1]} : vector<18x18x4xbf16> to vector<16x16x4xbf16>
    %9 = vector.extract_strided_slice %1 {offsets = [2, 1, 0], sizes = [16, 16, 4], strides = [1, 1, 1]} : vector<18x18x4xbf16> to vector<16x16x4xbf16>
    %10 = vector.extract_strided_slice %1 {offsets = [2, 2, 0], sizes = [16, 16, 4], strides = [1, 1, 1]} : vector<18x18x4xbf16> to vector<16x16x4xbf16>
    %11 = tpu.concatenate %2, %3, %4, %5, %6, %7, %8, %9, %10 in 2 : vector<16x16x4xbf16>, vector<16x16x4xbf16>, vector<16x16x4xbf16>, vector<16x16x4xbf16>, vector<16x16x4xbf16>, vector<16x16x4xbf16>, vector<16x16x4xbf16>, vector<16x16x4xbf16>, vector<16x16x4xbf16> -> vector<16x16x36xbf16>
    %12 = vector.shape_cast %11 : vector<16x16x36xbf16> to vector<256x36xbf16>
    %c0_3 = arith.constant 0 : index
    %c0_4 = arith.constant 0 : index
    %c0_5 = arith.constant 0 : index
    %c0_6 = arith.constant 0 : index
    %13 = vector.load %arg2[%c0_3, %c0_4, %c0_5, %c0_6] : memref<1x18x18x4xbf16, #tpu.memory_space<vmem>>, vector<1x18x18x4xbf16>
    %14 = vector.shape_cast %13 : vector<1x18x18x4xbf16> to vector<18x18x4xbf16>
    %15 = vector.extract_strided_slice %14 {offsets = [0, 0, 0], sizes = [16, 16, 4], strides = [1, 1, 1]} : vector<18x18x4xbf16> to vector<16x16x4xbf16>
    %16 = vector.extract_strided_slice %14 {offsets = [0, 1, 0], sizes = [16, 16, 4], strides = [1, 1, 1]} : vector<18x18x4xbf16> to vector<16x16x4xbf16>
    %17 = vector.extract_strided_slice %14 {offsets = [0, 2, 0], sizes = [16, 16, 4], strides = [1, 1, 1]} : vector<18x18x4xbf16> to vector<16x16x4xbf16>
    %18 = vector.extract_strided_slice %14 {offsets = [1, 0, 0], sizes = [16, 16, 4], strides = [1, 1, 1]} : vector<18x18x4xbf16> to vector<16x16x4xbf16>
    %19 = vector.extract_strided_slice %14 {offsets = [1, 1, 0], sizes = [16, 16, 4], strides = [1, 1, 1]} : vector<18x18x4xbf16> to vector<16x16x4xbf16>
    %20 = vector.extract_strided_slice %14 {offsets = [1, 2, 0], sizes = [16, 16, 4], strides = [1, 1, 1]} : vector<18x18x4xbf16> to vector<16x16x4xbf16>
    %21 = vector.extract_strided_slice %14 {offsets = [2, 0, 0], sizes = [16, 16, 4], strides = [1, 1, 1]} : vector<18x18x4xbf16> to vector<16x16x4xbf16>
    %22 = vector.extract_strided_slice %14 {offsets = [2, 1, 0], sizes = [16, 16, 4], strides = [1, 1, 1]} : vector<18x18x4xbf16> to vector<16x16x4xbf16>
    %23 = vector.extract_strided_slice %14 {offsets = [2, 2, 0], sizes = [16, 16, 4], strides = [1, 1, 1]} : vector<18x18x4xbf16> to vector<16x16x4xbf16>
    %24 = tpu.concatenate %15, %16, %17, %18, %19, %20, %21, %22, %23 in 2 : vector<16x16x4xbf16>, vector<16x16x4xbf16>, vector<16x16x4xbf16>, vector<16x16x4xbf16>, vector<16x16x4xbf16>, vector<16x16x4xbf16>, vector<16x16x4xbf16>, vector<16x16x4xbf16>, vector<16x16x4xbf16> -> vector<16x16x36xbf16>
    %25 = vector.shape_cast %24 : vector<16x16x36xbf16> to vector<256x36xbf16>
    %c0_7 = arith.constant 0 : index
    %c0_8 = arith.constant 0 : index
    %c0_9 = arith.constant 0 : index
    %c0_10 = arith.constant 0 : index
    %26 = vector.load %arg3[%c0_7, %c0_8, %c0_9, %c0_10] : memref<1x18x18x4xbf16, #tpu.memory_space<vmem>>, vector<1x18x18x4xbf16>
    %27 = vector.shape_cast %26 : vector<1x18x18x4xbf16> to vector<18x18x4xbf16>
    %28 = vector.extract_strided_slice %27 {offsets = [0, 0, 0], sizes = [16, 16, 4], strides = [1, 1, 1]} : vector<18x18x4xbf16> to vector<16x16x4xbf16>
    %29 = vector.extract_strided_slice %27 {offsets = [0, 1, 0], sizes = [16, 16, 4], strides = [1, 1, 1]} : vector<18x18x4xbf16> to vector<16x16x4xbf16>
    %30 = vector.extract_strided_slice %27 {offsets = [0, 2, 0], sizes = [16, 16, 4], strides = [1, 1, 1]} : vector<18x18x4xbf16> to vector<16x16x4xbf16>
    %31 = vector.extract_strided_slice %27 {offsets = [1, 0, 0], sizes = [16, 16, 4], strides = [1, 1, 1]} : vector<18x18x4xbf16> to vector<16x16x4xbf16>
    %32 = vector.extract_strided_slice %27 {offsets = [1, 1, 0], sizes = [16, 16, 4], strides = [1, 1, 1]} : vector<18x18x4xbf16> to vector<16x16x4xbf16>
    %33 = vector.extract_strided_slice %27 {offsets = [1, 2, 0], sizes = [16, 16, 4], strides = [1, 1, 1]} : vector<18x18x4xbf16> to vector<16x16x4xbf16>
    %34 = vector.extract_strided_slice %27 {offsets = [2, 0, 0], sizes = [16, 16, 4], strides = [1, 1, 1]} : vector<18x18x4xbf16> to vector<16x16x4xbf16>
    %35 = vector.extract_strided_slice %27 {offsets = [2, 1, 0], sizes = [16, 16, 4], strides = [1, 1, 1]} : vector<18x18x4xbf16> to vector<16x16x4xbf16>
    %36 = vector.extract_strided_slice %27 {offsets = [2, 2, 0], sizes = [16, 16, 4], strides = [1, 1, 1]} : vector<18x18x4xbf16> to vector<16x16x4xbf16>
    %37 = tpu.concatenate %28, %29, %30, %31, %32, %33, %34, %35, %36 in 2 : vector<16x16x4xbf16>, vector<16x16x4xbf16>, vector<16x16x4xbf16>, vector<16x16x4xbf16>, vector<16x16x4xbf16>, vector<16x16x4xbf16>, vector<16x16x4xbf16>, vector<16x16x4xbf16>, vector<16x16x4xbf16> -> vector<16x16x36xbf16>
    %38 = vector.shape_cast %37 : vector<16x16x36xbf16> to vector<256x36xbf16>
    %c0_11 = arith.constant 0 : index
    %c0_12 = arith.constant 0 : index
    %c0_13 = arith.constant 0 : index
    %c0_14 = arith.constant 0 : index
    %39 = vector.load %arg4[%c0_11, %c0_12, %c0_13, %c0_14] : memref<1x18x18x4xbf16, #tpu.memory_space<vmem>>, vector<1x18x18x4xbf16>
    %40 = vector.shape_cast %39 : vector<1x18x18x4xbf16> to vector<18x18x4xbf16>
    %41 = vector.extract_strided_slice %40 {offsets = [0, 0, 0], sizes = [16, 16, 4], strides = [1, 1, 1]} : vector<18x18x4xbf16> to vector<16x16x4xbf16>
    %42 = vector.extract_strided_slice %40 {offsets = [0, 1, 0], sizes = [16, 16, 4], strides = [1, 1, 1]} : vector<18x18x4xbf16> to vector<16x16x4xbf16>
    %43 = vector.extract_strided_slice %40 {offsets = [0, 2, 0], sizes = [16, 16, 4], strides = [1, 1, 1]} : vector<18x18x4xbf16> to vector<16x16x4xbf16>
    %44 = vector.extract_strided_slice %40 {offsets = [1, 0, 0], sizes = [16, 16, 4], strides = [1, 1, 1]} : vector<18x18x4xbf16> to vector<16x16x4xbf16>
    %45 = vector.extract_strided_slice %40 {offsets = [1, 1, 0], sizes = [16, 16, 4], strides = [1, 1, 1]} : vector<18x18x4xbf16> to vector<16x16x4xbf16>
    %46 = vector.extract_strided_slice %40 {offsets = [1, 2, 0], sizes = [16, 16, 4], strides = [1, 1, 1]} : vector<18x18x4xbf16> to vector<16x16x4xbf16>
    %47 = vector.extract_strided_slice %40 {offsets = [2, 0, 0], sizes = [16, 16, 4], strides = [1, 1, 1]} : vector<18x18x4xbf16> to vector<16x16x4xbf16>
    %48 = vector.extract_strided_slice %40 {offsets = [2, 1, 0], sizes = [16, 16, 4], strides = [1, 1, 1]} : vector<18x18x4xbf16> to vector<16x16x4xbf16>
    %49 = vector.extract_strided_slice %40 {offsets = [2, 2, 0], sizes = [16, 16, 4], strides = [1, 1, 1]} : vector<18x18x4xbf16> to vector<16x16x4xbf16>
    %50 = tpu.concatenate %41, %42, %43, %44, %45, %46, %47, %48, %49 in 2 : vector<16x16x4xbf16>, vector<16x16x4xbf16>, vector<16x16x4xbf16>, vector<16x16x4xbf16>, vector<16x16x4xbf16>, vector<16x16x4xbf16>, vector<16x16x4xbf16>, vector<16x16x4xbf16>, vector<16x16x4xbf16> -> vector<16x16x36xbf16>
    %51 = vector.shape_cast %50 : vector<16x16x36xbf16> to vector<256x36xbf16>
    %52 = tpu.concatenate %12, %25, %38, %51 in 0 : vector<256x36xbf16>, vector<256x36xbf16>, vector<256x36xbf16>, vector<256x36xbf16> -> vector<1024x36xbf16>
    %c0_15 = arith.constant 0 : index
    %c0_16 = arith.constant 0 : index
    %53 = vector.load %arg5[%c0_15, %c0_16] : memref<36x4xbf16, #tpu.memory_space<vmem>>, vector<36x4xbf16>
    %cst = arith.constant dense<0.000000e+00> : vector<1024x4xf32>
    %54 = tpu.matmul %52, %53, %cst {dimension_numbers = #tpu.dot_dimension_numbers<[1], [0], [0], [1], [0, 0, 1, 1], [], []>} : vector<1024x36xbf16>, vector<36x4xbf16>, vector<1024x4xf32> -> vector<1024x4xf32>
    %c0_17 = arith.constant 0 : index
    %c0_18 = arith.constant 0 : index
    %55 = vector.load %arg6[%c0_17, %c0_18] : memref<1x4xf32, #tpu.memory_space<vmem>>, vector<1x4xf32>
    %56 = vector.broadcast %55 : vector<1x4xf32> to vector<1024x4xf32>
    %57 = arith.addf %54, %56 : vector<1024x4xf32>
    %58 = vector.extract_strided_slice %57 {offsets = [0, 0], sizes = [256, 4], strides = [1, 1]} : vector<1024x4xf32> to vector<256x4xf32>
    %59 = vector.extract_strided_slice %57 {offsets = [256, 0], sizes = [256, 4], strides = [1, 1]} : vector<1024x4xf32> to vector<256x4xf32>
    %60 = arith.mulf %58, %59 : vector<256x4xf32>
    %61 = vector.extract_strided_slice %57 {offsets = [512, 0], sizes = [256, 4], strides = [1, 1]} : vector<1024x4xf32> to vector<256x4xf32>
    %62 = arith.mulf %60, %61 : vector<256x4xf32>
    %63 = vector.extract_strided_slice %57 {offsets = [768, 0], sizes = [256, 4], strides = [1, 1]} : vector<1024x4xf32> to vector<256x4xf32>
    %64 = arith.mulf %62, %63 : vector<256x4xf32>
    %65 = tpu.transpose %64, [1, 0] : vector<256x4xf32> -> vector<4x256xf32>
    %c0_19 = arith.constant 0 : index
    %c0_20 = arith.constant 0 : index
    %c0_21 = arith.constant 0 : index
    %66 = vector.load %arg7[%c0_19, %c0_20, %c0_21] : memref<1x4x256xf32, #tpu.memory_space<vmem>>, vector<1x4x256xf32>
    %67 = vector.shape_cast %66 : vector<1x4x256xf32> to vector<4x256xf32>
    %68 = vector.shape_cast %65 : vector<4x256xf32> to vector<1x4x256xf32>
    tpu.vector_store %arg7[%c0_19, %c0_20, %c0_21], %68 {strides = array<i32>} : memref<1x4x256xf32, #tpu.memory_space<vmem>>, vector<1x4x256xf32>,
    return
  }
  func.func @transform_0(%arg0: i32) -> (i32, i32, i32, i32) {
    %c0_i32 = arith.constant 0 : i32
    %c0_i32_0 = arith.constant 0 : i32
    %c0_i32_1 = arith.constant 0 : i32
    %c0_i32_2 = arith.constant 0 : i32
    return %arg0, %c0_i32, %c0_i32_0, %c0_i32_1 : i32, i32, i32, i32
  }
  func.func @transform_1(%arg0: i32) -> (i32, i32, i32, i32) {
    %c0_i32 = arith.constant 0 : i32
    %c0_i32_0 = arith.constant 0 : i32
    %c0_i32_1 = arith.constant 0 : i32
    %c0_i32_2 = arith.constant 0 : i32
    return %arg0, %c0_i32, %c0_i32_0, %c0_i32_1 : i32, i32, i32, i32
  }
  func.func @transform_2(%arg0: i32) -> (i32, i32, i32, i32) {
    %c0_i32 = arith.constant 0 : i32
    %c0_i32_0 = arith.constant 0 : i32
    %c0_i32_1 = arith.constant 0 : i32
    %c0_i32_2 = arith.constant 0 : i32
    return %arg0, %c0_i32, %c0_i32_0, %c0_i32_1 : i32, i32, i32, i32
  }
  func.func @transform_3(%arg0: i32) -> (i32, i32, i32, i32) {
    %c0_i32 = arith.constant 0 : i32
    %c0_i32_0 = arith.constant 0 : i32
    %c0_i32_1 = arith.constant 0 : i32
    %c0_i32_2 = arith.constant 0 : i32
    return %arg0, %c0_i32, %c0_i32_0, %c0_i32_1 : i32, i32, i32, i32
  }
  func.func @transform_4(%arg0: i32) -> (i32, i32) {
    %c0_i32 = arith.constant 0 : i32
    %c0_i32_0 = arith.constant 0 : i32
    %c0_i32_1 = arith.constant 0 : i32
    return %c0_i32, %c0_i32_0 : i32, i32
  }
  func.func @transform_5(%arg0: i32) -> (i32, i32) {
    %c0_i32 = arith.constant 0 : i32
    %c0_i32_0 = arith.constant 0 : i32
    %c0_i32_1 = arith.constant 0 : i32
    return %c0_i32, %c0_i32_0 : i32, i32
  }
  func.func @transform_6(%arg0: i32) -> (i32, i32, i32) {
    %c0_i32 = arith.constant 0 : i32
    %c0_i32_0 = arith.constant 0 : i32
    %c0_i32_1 = arith.constant 0 : i32
    return %arg0, %c0_i32, %c0_i32_0 : i32, i32, i32
  }
}

</mosaic_0001>

<llo_original>
// kernel: sdi_forward.1
$region0: #{sdi_forward.1}
  #allocation0 [shape = 'u32[]', space=smem, size = 0x4, offset = 0x4, fixed_abs, tag = 'smem constant byte address 0x4 - core index']
  #allocation1 [shape = 'u32[72,128]{1,0:T(1,128)}', space=vmem, size = 0x9000, scoped, tag = 'internal scratch']
  %s0 = inlined_call_operand.vmem [shape: bf16[2,18,18,4], index: 0, kind: input, shape index: {}]
  %s1 = inlined_call_operand.vmem [shape: bf16[2,18,18,4], index: 1, kind: input, shape index: {}]
  %s2 = inlined_call_operand.vmem [shape: bf16[2,18,18,4], index: 2, kind: input, shape index: {}]
  %s3 = inlined_call_operand.vmem [shape: bf16[2,18,18,4], index: 3, kind: input, shape index: {}]
  %s4 = inlined_call_operand.vmem [shape: bf16[36,4], index: 4, kind: input, shape index: {}]
  %s5 = inlined_call_operand.vmem [shape: f32[1,4], index: 5, kind: input, shape index: {}]
  %s6 = inlined_call_operand.vmem [shape: f32[2,4,256], index: 6, kind: output, shape index: {}]
  %s7 = sld [smem:[#allocation0]]
  $region57: #{sdi_forward.1} parent=0
    _
  %s9 = ssub.s32 1, %s7
  %s10 = scalar_select 0, %s9, %s7
  loop: start=0, step=1, limit=4
  $region2: #{sdi_forward.1} parent=0 // loop_pre_header
    _
  $region3: #{sdi_forward.1} parent=0 // loop_header
    %s12 = sphi 0, %s16
    %p13 = scmp.ge.s32.totalorder %s12, 4
    %s22 = sphi 0, %s24
    %s25 = sphi 0, %s22
    %s26 = sphi 0, %s25
    %s42 = sphi 0, %s26
    %s48 = sphi 0, %s50
    %s51 = sphi 0, %s48
    %s52 = sphi 0, %s51
    %s68 = sphi 0, %s52
    %s74 = sphi 0, %s76
    %s77 = sphi 0, %s74
    %s78 = sphi 0, %s77
    %s94 = sphi 0, %s78
    %s100 = sphi 0, %s102
    %s103 = sphi 0, %s100
    %s104 = sphi 0, %s103
    %s120 = sphi 0, %s104
    %s124 = sphi 0, %s124
    %s126 = sphi 0, %s124
    %s127 = sphi 0, %s126
    %s141 = sphi 0, %s127
    %s145 = sphi 0, %s145
    %s147 = sphi 0, %s145
    %s148 = sphi 0, %s147
    %s162 = sphi 0, %s148
    %s168 = sphi 0, %s170
    %s171 = sphi 0, %s168
    %s172 = sphi 0, %s171
    %s188 = sphi 0, %s172
  $region4: #{sdi_forward.1} parent=0 // loop_header_branch
    %15 = sbr.rel (%p13) target = $region8
  $region5: #{sdi_forward.1} parent=0 // loop_body
    %s17 = ssub.s32 %s12, 1
    %s18 = ssub.s32 %s12, 2
    %s19 = sadd.s32 %s12, 1
    %s20 = ssub.s32 %s12, %s19
    %p21 = scmp.eq.s32.totalorder %s20, 0
    %s23 = sadd.s32 %s22, 1
    %s24 = scalar_select %p21, %s22, %s23
    %p27 = pneg %p21
    %p28 = scmp.eq.s32.totalorder %s12, 1
    %p29 = por %p27, %p28
    %p30 = scmp.ne.s32.totalorder %s22, %s25
    %p31 = scmp.eq.s32.totalorder %s12, 0
    %p32 = por %p30, %p31
    %p33 = scmp.ne.s32.totalorder %s22, %s25
    %p34 = scmp.eq.s32.totalorder %s17, 1
    %p35 = por %p33, %p34
    %p36 = scmp.ne.s32.totalorder %s25, %s26
    %p37 = scmp.eq.s32.totalorder %s17, 0
    %p38 = por %p36, %p37
    %p39 = scmp.ne.s32.totalorder %s25, %s26
    %p40 = scmp.eq.s32.totalorder %s18, 1
    %p41 = por %p39, %p40
    %p43 = scmp.ne.s32.totalorder %s26, %s42
    %p44 = scmp.eq.s32.totalorder %s18, 0
    %p45 = por %p43, %p44
    %s46 = ssub.s32 %s12, %s19
    %p47 = scmp.eq.s32.totalorder %s46, 0
    %s49 = sadd.s32 %s48, 1
    %s50 = scalar_select %p47, %s48, %s49
    %p53 = pneg %p47
    %p54 = scmp.eq.s32.totalorder %s12, 1
    %p55 = por %p53, %p54
    %p56 = scmp.ne.s32.totalorder %s48, %s51
    %p57 = scmp.eq.s32.totalorder %s12, 0
    %p58 = por %p56, %p57
    %p59 = scmp.ne.s32.totalorder %s48, %s51
    %p60 = scmp.eq.s32.totalorder %s17, 1
    %p61 = por %p59, %p60
    %p62 = scmp.ne.s32.totalorder %s51, %s52
    %p63 = scmp.eq.s32.totalorder %s17, 0
    %p64 = por %p62, %p63
    %p65 = scmp.ne.s32.totalorder %s51, %s52
    %p66 = scmp.eq.s32.totalorder %s18, 1
    %p67 = por %p65, %p66
    %p69 = scmp.ne.s32.totalorder %s52, %s68
    %p70 = scmp.eq.s32.totalorder %s18, 0
    %p71 = por %p69, %p70
    %s72 = ssub.s32 %s12, %s19
    %p73 = scmp.eq.s32.totalorder %s72, 0
    %s75 = sadd.s32 %s74, 1
    %s76 = scalar_select %p73, %s74, %s75
    %p79 = pneg %p73
    %p80 = scmp.eq.s32.totalorder %s12, 1
    %p81 = por %p79, %p80
    %p82 = scmp.ne.s32.totalorder %s74, %s77
    %p83 = scmp.eq.s32.totalorder %s12, 0
    %p84 = por %p82, %p83
    %p85 = scmp.ne.s32.totalorder %s74, %s77
    %p86 = scmp.eq.s32.totalorder %s17, 1
    %p87 = por %p85, %p86
    %p88 = scmp.ne.s32.totalorder %s77, %s78
    %p89 = scmp.eq.s32.totalorder %s17, 0
    %p90 = por %p88, %p89
    %p91 = scmp.ne.s32.totalorder %s77, %s78
    %p92 = scmp.eq.s32.totalorder %s18, 1
    %p93 = por %p91, %p92
    %p95 = scmp.ne.s32.totalorder %s78, %s94
    %p96 = scmp.eq.s32.totalorder %s18, 0
    %p97 = por %p95, %p96
    %s98 = ssub.s32 %s12, %s19
    %p99 = scmp.eq.s32.totalorder %s98, 0
    %s101 = sadd.s32 %s100, 1
    %s102 = scalar_select %p99, %s100, %s101
    %p105 = pneg %p99
    %p106 = scmp.eq.s32.totalorder %s12, 1
    %p107 = por %p105, %p106
    %p108 = scmp.ne.s32.totalorder %s100, %s103
    %p109 = scmp.eq.s32.totalorder %s12, 0
    %p110 = por %p108, %p109
    %p111 = scmp.ne.s32.totalorder %s100, %s103
    %p112 = scmp.eq.s32.totalorder %s17, 1
    %p113 = por %p111, %p112
    %p114 = scmp.ne.s32.totalorder %s103, %s104
    %p115 = scmp.eq.s32.totalorder %s17, 0
    %p116 = por %p114, %p115
    %p117 = scmp.ne.s32.totalorder %s103, %s104
    %p118 = scmp.eq.s32.totalorder %s18, 1
    %p119 = por %p117, %p118
    %p121 = scmp.ne.s32.totalorder %s104, %s120
    %p122 = scmp.eq.s32.totalorder %s18, 0
    %p123 = por %p121, %p122
    %s125 = sadd.s32 %s124, 1
    %p128 = scmp.eq.s32.totalorder %s12, 1
    %p129 = scmp.ne.s32.totalorder %s124, %s126
    %p130 = scmp.eq.s32.totalorder %s12, 0
    %p131 = por %p129, %p130
    %p132 = scmp.ne.s32.totalorder %s124, %s126
    %p133 = scmp.eq.s32.totalorder %s17, 1
    %p134 = por %p132, %p133
    %p135 = scmp.ne.s32.totalorder %s126, %s127
    %p136 = scmp.eq.s32.totalorder %s17, 0
    %p137 = por %p135, %p136
    %p138 = scmp.ne.s32.totalorder %s126, %s127
    %p139 = scmp.eq.s32.totalorder %s18, 1
    %p140 = por %p138, %p139
    %p142 = scmp.ne.s32.totalorder %s127, %s141
    %p143 = scmp.eq.s32.totalorder %s18, 0
    %p144 = por %p142, %p143
    %s146 = sadd.s32 %s145, 1
    %p149 = scmp.eq.s32.totalorder %s12, 1
    %p150 = scmp.ne.s32.totalorder %s145, %s147
    %p151 = scmp.eq.s32.totalorder %s12, 0
    %p152 = por %p150, %p151
    %p153 = scmp.ne.s32.totalorder %s145, %s147
    %p154 = scmp.eq.s32.totalorder %s17, 1
    %p155 = por %p153, %p154
    %p156 = scmp.ne.s32.totalorder %s147, %s148
    %p157 = scmp.eq.s32.totalorder %s17, 0
    %p158 = por %p156, %p157
    %p159 = scmp.ne.s32.totalorder %s147, %s148
    %p160 = scmp.eq.s32.totalorder %s18, 1
    %p161 = por %p159, %p160
    %p163 = scmp.ne.s32.totalorder %s148, %s162
    %p164 = scmp.eq.s32.totalorder %s18, 0
    %p165 = por %p163, %p164
    %s166 = ssub.s32 %s12, %s19
    %p167 = scmp.eq.s32.totalorder %s166, 0
    %s169 = sadd.s32 %s168, 1
    %s170 = scalar_select %p167, %s168, %s169
    %p173 = pneg %p167
    %p174 = scmp.eq.s32.totalorder %s12, 1
    %p175 = por %p173, %p174
    %p176 = scmp.ne.s32.totalorder %s168, %s171
    %p177 = scmp.eq.s32.totalorder %s12, 0
    %p178 = por %p176, %p177
    %p179 = scmp.ne.s32.totalorder %s168, %s171
    %p180 = scmp.eq.s32.totalorder %s17, 1
    %p181 = por %p179, %p180
    %p182 = scmp.ne.s32.totalorder %s171, %s172
    %p183 = scmp.eq.s32.totalorder %s17, 0
    %p184 = por %p182, %p183
    %p185 = scmp.ne.s32.totalorder %s171, %s172
    %p186 = scmp.eq.s32.totalorder %s18, 1
    %p187 = por %p185, %p186
    %p189 = scmp.ne.s32.totalorder %s172, %s188
    %p190 = scmp.eq.s32.totalorder %s18, 0
    %p191 = por %p189, %p190
    %p192 = scmp.le.s32.totalorder 1, %s12
    %p193 = scmp.lt.s32.totalorder %s12, 3
    %p194 = pnand %p192, %p193
    %p195 = pneg %p194
    // Predicated region
    $region9: #{sdi_forward.1} parent=5 // pred_check
      _
    $region10: #{sdi_forward.1} parent=5 // pred_check_branch
      %197 = sbr.rel (%p194) target = $region12
    $region11: #{sdi_forward.1} parent=5 // pred_region
      %s198 = ssub.s32 %s12, 1
      // Predicated region
      $region13: #{sdi_forward.1} parent=11 // pred_check
        %p199 = pneg %p137
      $region14: #{sdi_forward.1} parent=11 // pred_check_branch
        %201 = sbr.rel (%p199) target = $region16
      $region15: #{sdi_forward.1} parent=11 // pred_region
        _
      $region16: #{sdi_forward.1} parent=11 // pred_fallthru
        _
      // Predicated region
      $region17: #{sdi_forward.1} parent=11 // pred_check
        %p202 = pneg %p158
      $region18: #{sdi_forward.1} parent=11 // pred_check_branch
        %204 = sbr.rel (%p202) target = $region20
      $region19: #{sdi_forward.1} parent=11 // pred_region
        _
      $region20: #{sdi_forward.1} parent=11 // pred_fallthru
        _
    $region12: #{sdi_forward.1} parent=5 // pred_fallthru
      _
    %p205 = scmp.lt.s32.totalorder %s12, 2
    // Predicated region
    $region21: #{sdi_forward.1} parent=5 // pred_check
      %p206 = pneg %p205
    $region22: #{sdi_forward.1} parent=5 // pred_check_branch
      %208 = sbr.rel (%p206) target = $region24
    $region23: #{sdi_forward.1} parent=5 // pred_region
      // Predicated region
      $region25: #{sdi_forward.1} parent=23 // pred_check
        %p209 = pneg %p32
      $region26: #{sdi_forward.1} parent=23 // pred_check_branch
        %211 = sbr.rel (%p209) target = $region28
      $region27: #{sdi_forward.1} parent=23 // pred_region
        %p212 = scmp.lt.s32.totalorder %s12, 1
        %s213 = scalar_select %p212, %s12, 1
        %s214 = smul.addr %s213, 54
        %s215 = smul.addr %s214, 4
        %s216 = scalar_lea.vmem %s0, %s215
      $region28: #{sdi_forward.1} parent=23 // pred_fallthru
        _
      // Predicated region
      $region29: #{sdi_forward.1} parent=23 // pred_check
        %p217 = pneg %p58
      $region30: #{sdi_forward.1} parent=23 // pred_check_branch
        %219 = sbr.rel (%p217) target = $region32
      $region31: #{sdi_forward.1} parent=23 // pred_region
        %p220 = scmp.lt.s32.totalorder %s12, 1
        %s221 = scalar_select %p220, %s12, 1
        %s222 = smul.addr %s221, 54
        %s223 = smul.addr %s222, 4
        %s224 = scalar_lea.vmem %s1, %s223
      $region32: #{sdi_forward.1} parent=23 // pred_fallthru
        _
      // Predicated region
      $region33: #{sdi_forward.1} parent=23 // pred_check
        %p225 = pneg %p84
      $region34: #{sdi_forward.1} parent=23 // pred_check_branch
        %227 = sbr.rel (%p225) target = $region36
      $region35: #{sdi_forward.1} parent=23 // pred_region
        %p228 = scmp.lt.s32.totalorder %s12, 1
        %s229 = scalar_select %p228, %s12, 1
        %s230 = smul.addr %s229, 54
        %s231 = smul.addr %s230, 4
        %s232 = scalar_lea.vmem %s2, %s231
      $region36: #{sdi_forward.1} parent=23 // pred_fallthru
        _
      // Predicated region
      $region37: #{sdi_forward.1} parent=23 // pred_check
        %p233 = pneg %p110
      $region38: #{sdi_forward.1} parent=23 // pred_check_branch
        %235 = sbr.rel (%p233) target = $region40
      $region39: #{sdi_forward.1} parent=23 // pred_region
        %p236 = scmp.lt.s32.totalorder %s12, 1
        %s237 = scalar_select %p236, %s12, 1
        %s238 = smul.addr %s237, 54
        %s239 = smul.addr %s238, 4
        %s240 = scalar_lea.vmem %s3, %s239
      $region40: #{sdi_forward.1} parent=23 // pred_fallthru
        _
    $region24: #{sdi_forward.1} parent=5 // pred_fallthru
      _
    %p241 = scmp.le.s32.totalorder 1, %s12
    %p242 = scmp.lt.s32.totalorder %s12, 3
    %p243 = pnand %p241, %p242
    %p244 = pneg %p243
    // Predicated region
    $region41: #{sdi_forward.1} parent=5 // pred_check
      _
    $region42: #{sdi_forward.1} parent=5 // pred_check_branch
      %246 = sbr.rel (%p243) target = $region44
    $region43: #{sdi_forward.1} parent=5 // pred_region
      %s247 = ssub.s32 %s12, 1
      %p248 = scmp.lt.s32.totalorder %s17, 1
      %s249 = scalar_select %p248, %s17, 1
      %s250 = smul.addr %s249, 54
      %s251 = smul.addr %s250, 4
      %s252 = scalar_lea.vmem %s0, %s251
      %p253 = pneg %p38
      %p254 = pneg %p35
      %p255 = scmp.lt.s32.totalorder %s17, 1
      %s256 = scalar_select %p255, %s17, 1
      %s257 = smul.addr %s256, 54
      %s258 = smul.addr %s257, 4
      %s259 = scalar_lea.vmem %s1, %s258
      %p260 = pneg %p64
      %p261 = pneg %p61
      %p262 = scmp.lt.s32.totalorder %s17, 1
      %s263 = scalar_select %p262, %s17, 1
      %s264 = smul.addr %s263, 54
      %s265 = smul.addr %s264, 4
      %s266 = scalar_lea.vmem %s2, %s265
      %p267 = pneg %p90
      %p268 = pneg %p87
      %p269 = scmp.lt.s32.totalorder %s17, 1
      %s270 = scalar_select %p269, %s17, 1
      %s271 = smul.addr %s270, 54
      %s272 = smul.addr %s271, 4
      %s273 = scalar_lea.vmem %s3, %s272
      %p274 = pneg %p116
      %p275 = pneg %p113
      %p276 = pneg %p137
      %p277 = pneg %p134
      %p278 = pneg %p158
      %p279 = pneg %p155
      %p280 = pneg %p184
      %p281 = pneg %p181
      %p282 = scmp.lt.s32.totalorder %s17, 1
      %s283 = scalar_select %p282, %s17, 1
      %s284 = smul.addr %s283, 2
      %s285 = smul.addr %s284, 4
      %s286 = scalar_lea.vmem %s6, %s285
      %p287 = scmp.lt.s32.totalorder %s17, 1
      %s288 = scalar_select %p287, %s17, 1
      %s289 = smul.addr %s288, 54
      %s290 = smul.addr %s289, 4
      %s291 = scalar_lea.vmem %s0, %s290
      %p292 = scmp.lt.s32.totalorder %s17, 1
      %s293 = scalar_select %p292, %s17, 1
      %s294 = smul.addr %s293, 54
      %s295 = smul.addr %s294, 4
      %s296 = scalar_lea.vmem %s1, %s295
      %p297 = scmp.lt.s32.totalorder %s17, 1
      %s298 = scalar_select %p297, %s17, 1
      %s299 = smul.addr %s298, 54
      %s300 = smul.addr %s299, 4
      %s301 = scalar_lea.vmem %s2, %s300
      %p302 = scmp.lt.s32.totalorder %s17, 1
      %s303 = scalar_select %p302, %s17, 1
      %s304 = smul.addr %s303, 54
      %s305 = smul.addr %s304, 4
      %s306 = scalar_lea.vmem %s3, %s305
      %p307 = scmp.lt.s32.totalorder %s17, 1
      %s308 = scalar_select %p307, %s17, 1
      %s309 = smul.addr %s308, 2
      %s310 = smul.addr %s309, 4
      %s311 = scalar_lea.vmem %s6, %s310
      %v313 = vld [vmem:[%s291] sm:$0xf]
      %v314 = vld [vmem:[%s291 + $0x4] sm:$0xf]
      %v315 = vld [vmem:[%s291 + $0x8] sm:$0x1]
      %v316 = vld [vmem:[%s291 + $0xc] sm:$0xf]
      %v317 = vld [vmem:[%s291 + $0x10] sm:$0xf]
      %v318 = vld [vmem:[%s291 + $0x14] sm:$0x1]
      %v319 = vld [vmem:[%s291 + $0x18] sm:$0xf]
      %v320 = vld [vmem:[%s291 + $0x1c] sm:$0xf]
      %v321 = vld [vmem:[%s291 + $0x20] sm:$0x1]
      %v322 = vld [vmem:[%s291 + $0x24] sm:$0xf]
      %v323 = vld [vmem:[%s291 + $0x28] sm:$0xf]
      %v324 = vld [vmem:[%s291 + $0x2c] sm:$0x1]
      %v325 = vld [vmem:[%s291 + $0x30] sm:$0xf]
      %v326 = vld [vmem:[%s291 + $0x34] sm:$0xf]
      %v327 = vld [vmem:[%s291 + $0x38] sm:$0x1]
      %v328 = vld [vmem:[%s291 + $0x3c] sm:$0xf]
      %v329 = vld [vmem:[%s291 + $0x40] sm:$0xf]
      %v330 = vld [vmem:[%s291 + $0x44] sm:$0x1]
      %v331 = vld [vmem:[%s291 + $0x48] sm:$0xf]
      %v332 = vld [vmem:[%s291 + $0x4c] sm:$0xf]
      %v333 = vld [vmem:[%s291 + $0x50] sm:$0x1]
      %v334 = vld [vmem:[%s291 + $0x54] sm:$0xf]
      %v335 = vld [vmem:[%s291 + $0x58] sm:$0xf]
      %v336 = vld [vmem:[%s291 + $0x5c] sm:$0x1]
      %v337 = vld [vmem:[%s291 + $0x60] sm:$0xf]
      %v338 = vld [vmem:[%s291 + $0x64] sm:$0xf]
      %v339 = vld [vmem:[%s291 + $0x68] sm:$0x1]
      %v340 = vld [vmem:[%s291 + $0x6c] sm:$0xf]
      %v341 = vld [vmem:[%s291 + $0x70] sm:$0xf]
      %v342 = vld [vmem:[%s291 + $0x74] sm:$0x1]
      %v343 = vld [vmem:[%s291 + $0x78] sm:$0xf]
      %v344 = vld [vmem:[%s291 + $0x7c] sm:$0xf]
      %v345 = vld [vmem:[%s291 + $0x80] sm:$0x1]
      %v346 = vld [vmem:[%s291 + $0x84] sm:$0xf]
      %v347 = vld [vmem:[%s291 + $0x88] sm:$0xf]
      %v348 = vld [vmem:[%s291 + $0x8c] sm:$0x1]
      %v349 = vld [vmem:[%s291 + $0x90] sm:$0xf]
      %v350 = vld [vmem:[%s291 + $0x94] sm:$0xf]
      %v351 = vld [vmem:[%s291 + $0x98] sm:$0x1]
      %v352 = vld [vmem:[%s291 + $0x9c] sm:$0xf]
      %v353 = vld [vmem:[%s291 + $0xa0] sm:$0xf]
      %v354 = vld [vmem:[%s291 + $0xa4] sm:$0x1]
      %v355 = vld [vmem:[%s291 + $0xa8] sm:$0xf]
      %v356 = vld [vmem:[%s291 + $0xac] sm:$0xf]
      %v357 = vld [vmem:[%s291 + $0xb0] sm:$0x1]
      %v358 = vld [vmem:[%s291 + $0xb4] sm:$0xf]
      %v359 = vld [vmem:[%s291 + $0xb8] sm:$0xf]
      %v360 = vld [vmem:[%s291 + $0xbc] sm:$0x1]
      %v361 = vld [vmem:[%s291 + $0xc0] sm:$0xf]
      %v362 = vld [vmem:[%s291 + $0xc4] sm:$0xf]
      %v363 = vld [vmem:[%s291 + $0xc8] sm:$0x1]
      %v364 = vld [vmem:[%s291 + $0xcc] sm:$0xf]
      %v365 = vld [vmem:[%s291 + $0xd0] sm:$0xf]
      %v366 = vld [vmem:[%s291 + $0xd4] sm:$0x1]
      %v399 = vunpack.c.l.b16 %v313
      %v400 = vunpack.c.l.b16 %v314
      %v401 = vunpack.c.l.b16 %v316
      %v402 = vunpack.c.l.b16 %v317
      %v403 = vunpack.c.l.b16 %v319
      %v404 = vunpack.c.l.b16 %v320
      %v405 = vunpack.c.l.b16 %v322
      %v406 = vunpack.c.l.b16 %v323
      %v407 = vunpack.c.l.b16 %v325
      %v408 = vunpack.c.l.b16 %v326
      %v409 = vunpack.c.l.b16 %v328
      %v410 = vunpack.c.l.b16 %v329
      %v411 = vunpack.c.l.b16 %v331
      %v412 = vunpack.c.l.b16 %v332
      %v413 = vunpack.c.l.b16 %v334
      %v414 = vunpack.c.l.b16 %v335
      %v415 = vunpack.c.l.b16 %v337
      %v416 = vunpack.c.l.b16 %v338
      %v417 = vunpack.c.l.b16 %v340
      %v418 = vunpack.c.l.b16 %v341
      %v419 = vunpack.c.l.b16 %v343
      %v420 = vunpack.c.l.b16 %v344
      %v421 = vunpack.c.l.b16 %v346
      %v422 = vunpack.c.l.b16 %v347
      %v423 = vunpack.c.l.b16 %v349
      %v424 = vunpack.c.l.b16 %v350
      %v425 = vunpack.c.l.b16 %v352
      %v426 = vunpack.c.l.b16 %v353
      %v427 = vunpack.c.l.b16 %v355
      %v428 = vunpack.c.l.b16 %v356
      %v429 = vunpack.c.l.b16 %v358
      %v430 = vunpack.c.l.b16 %v359
      %v431 = vpack.c.b16 %v400, %v399
      %v432 = vpack.c.b16 %v402, %v401
      %v433 = vpack.c.b16 %v404, %v403
      %v434 = vpack.c.b16 %v406, %v405
      %v435 = vpack.c.b16 %v408, %v407
      %v436 = vpack.c.b16 %v410, %v409
      %v437 = vpack.c.b16 %v412, %v411
      %v438 = vpack.c.b16 %v414, %v413
      %v439 = vpack.c.b16 %v416, %v415
      %v440 = vpack.c.b16 %v418, %v417
      %v441 = vpack.c.b16 %v420, %v419
      %v442 = vpack.c.b16 %v422, %v421
      %v443 = vpack.c.b16 %v424, %v423
      %v444 = vpack.c.b16 %v426, %v425
      %v445 = vpack.c.b16 %v428, %v427
      %v446 = vpack.c.b16 %v430, %v429
      %v463 = vunpack.c.l.b16 %v315
      %v464 = vunpack.c.l.b16 %v318
      %v465 = vunpack.c.l.b16 %v321
      %v466 = vunpack.c.l.b16 %v324
      %v467 = vunpack.c.l.b16 %v327
      %v468 = vunpack.c.l.b16 %v330
      %v469 = vunpack.c.l.b16 %v333
      %v470 = vunpack.c.l.b16 %v336
      %v471 = vunpack.c.l.b16 %v339
      %v472 = vunpack.c.l.b16 %v342
      %v473 = vunpack.c.l.b16 %v345
      %v474 = vunpack.c.l.b16 %v348
      %v475 = vunpack.c.l.b16 %v351
      %v476 = vunpack.c.l.b16 %v354
      %v477 = vunpack.c.l.b16 %v357
      %v478 = vunpack.c.l.b16 %v360
      %v479 = vpack.c.b16 %v463, %v463
      %v480 = vpack.c.b16 %v464, %v464
      %v481 = vpack.c.b16 %v465, %v465
      %v482 = vpack.c.b16 %v466, %v466
      %v483 = vpack.c.b16 %v467, %v467
      %v484 = vpack.c.b16 %v468, %v468
      %v485 = vpack.c.b16 %v469, %v469
      %v486 = vpack.c.b16 %v470, %v470
      %v487 = vpack.c.b16 %v471, %v471
      %v488 = vpack.c.b16 %v472, %v472
      %v489 = vpack.c.b16 %v473, %v473
      %v490 = vpack.c.b16 %v474, %v474
      %v491 = vpack.c.b16 %v475, %v475
      %v492 = vpack.c.b16 %v476, %v476
      %v493 = vpack.c.b16 %v477, %v477
      %v494 = vpack.c.b16 %v478, %v478
      %vm495 = vsmask.f32 7424
      %v497 = vshrl.u32 %v431, 16
      %v499 = vshll.u32 %v431, 16
      %v501 = vrot.slane %v499, 1
      %v502 = vor.u32 %v497, %v501
      %v504 = vshll.u32 %v479, 16
      %v506 = vrot.slane %v504, 1
      %v507 = vsel %vm495, %v502, %v506
      %v509 = vshrl.u32 %v432, 16
      %v511 = vshll.u32 %v432, 16
      %v513 = vrot.slane %v511, 1
      %v514 = vor.u32 %v509, %v513
      %v516 = vshll.u32 %v480, 16
      %v518 = vrot.slane %v516, 1
      %v519 = vsel %vm495, %v514, %v518
      %v521 = vshrl.u32 %v433, 16
      %v523 = vshll.u32 %v433, 16
      %v525 = vrot.slane %v523, 1
      %v526 = vor.u32 %v521, %v525
      %v528 = vshll.u32 %v481, 16
      %v530 = vrot.slane %v528, 1
      %v531 = vsel %vm495, %v526, %v530
      %v533 = vshrl.u32 %v434, 16
      %v535 = vshll.u32 %v434, 16
      %v537 = vrot.slane %v535, 1
      %v538 = vor.u32 %v533, %v537
      %v540 = vshll.u32 %v482, 16
      %v542 = vrot.slane %v540, 1
      %v543 = vsel %vm495, %v538, %v542
      %v545 = vshrl.u32 %v435, 16
      %v547 = vshll.u32 %v435, 16
      %v549 = vrot.slane %v547, 1
      %v550 = vor.u32 %v545, %v549
      %v552 = vshll.u32 %v483, 16
      %v554 = vrot.slane %v552, 1
      %v555 = vsel %vm495, %v550, %v554
      %v557 = vshrl.u32 %v436, 16
      %v559 = vshll.u32 %v436, 16
      %v561 = vrot.slane %v559, 1
      %v562 = vor.u32 %v557, %v561
      %v564 = vshll.u32 %v484, 16
      %v566 = vrot.slane %v564, 1
      %v567 = vsel %vm495, %v562, %v566
      %v569 = vshrl.u32 %v437, 16
      %v571 = vshll.u32 %v437, 16
      %v573 = vrot.slane %v571, 1
      %v574 = vor.u32 %v569, %v573
      %v576 = vshll.u32 %v485, 16
      %v578 = vrot.slane %v576, 1
      %v579 = vsel %vm495, %v574, %v578
      %v581 = vshrl.u32 %v438, 16
      %v583 = vshll.u32 %v438, 16
      %v585 = vrot.slane %v583, 1
      %v586 = vor.u32 %v581, %v585
      %v588 = vshll.u32 %v486, 16
      %v590 = vrot.slane %v588, 1
      %v591 = vsel %vm495, %v586, %v590
      %v593 = vshrl.u32 %v439, 16
      %v595 = vshll.u32 %v439, 16
      %v597 = vrot.slane %v595, 1
      %v598 = vor.u32 %v593, %v597
      %v600 = vshll.u32 %v487, 16
      %v602 = vrot.slane %v600, 1
      %v603 = vsel %vm495, %v598, %v602
      %v605 = vshrl.u32 %v440, 16
      %v607 = vshll.u32 %v440, 16
      %v609 = vrot.slane %v607, 1
      %v610 = vor.u32 %v605, %v609
      %v612 = vshll.u32 %v488, 16
      %v614 = vrot.slane %v612, 1
      %v615 = vsel %vm495, %v610, %v614
      %v617 = vshrl.u32 %v441, 16
      %v619 = vshll.u32 %v441, 16
      %v621 = vrot.slane %v619, 1
      %v622 = vor.u32 %v617, %v621
      %v624 = vshll.u32 %v489, 16
      %v626 = vrot.slane %v624, 1
      %v627 = vsel %vm495, %v622, %v626
      %v629 = vshrl.u32 %v442, 16
      %v631 = vshll.u32 %v442, 16
      %v633 = vrot.slane %v631, 1
      %v634 = vor.u32 %v629, %v633
      %v636 = vshll.u32 %v490, 16
      %v638 = vrot.slane %v636, 1
      %v639 = vsel %vm495, %v634, %v638
      %v641 = vshrl.u32 %v443, 16
      %v643 = vshll.u32 %v443, 16
      %v645 = vrot.slane %v643, 1
      %v646 = vor.u32 %v641, %v645
      %v648 = vshll.u32 %v491, 16
      %v650 = vrot.slane %v648, 1
      %v651 = vsel %vm495, %v646, %v650
      %v653 = vshrl.u32 %v444, 16
      %v655 = vshll.u32 %v444, 16
      %v657 = vrot.slane %v655, 1
      %v658 = vor.u32 %v653, %v657
      %v660 = vshll.u32 %v492, 16
      %v662 = vrot.slane %v660, 1
      %v663 = vsel %vm495, %v658, %v662
      %v665 = vshrl.u32 %v445, 16
      %v667 = vshll.u32 %v445, 16
      %v669 = vrot.slane %v667, 1
      %v670 = vor.u32 %v665, %v669
      %v672 = vshll.u32 %v493, 16
      %v674 = vrot.slane %v672, 1
      %v675 = vsel %vm495, %v670, %v674
      %v677 = vshrl.u32 %v446, 16
      %v679 = vshll.u32 %v446, 16
      %v681 = vrot.slane %v679, 1
      %v682 = vor.u32 %v677, %v681
      %v684 = vshll.u32 %v494, 16
      %v686 = vrot.slane %v684, 1
      %v687 = vsel %vm495, %v682, %v686
      %688 = vrot.lane.b32.xlu0 %v507, 4
      %v689 = vpop.permute.xlu0 %688
      %690 = vrot.lane.b32.xlu0 %v519, 4
      %v691 = vpop.permute.xlu0 %690
      %692 = vrot.lane.b32.xlu0 %v531, 4
      %v693 = vpop.permute.xlu0 %692
      %694 = vrot.lane.b32.xlu0 %v543, 4
      %v695 = vpop.permute.xlu0 %694
      %696 = vrot.lane.b32.xlu0 %v555, 4
      %v697 = vpop.permute.xlu0 %696
      %698 = vrot.lane.b32.xlu0 %v567, 4
      %v699 = vpop.permute.xlu0 %698
      %700 = vrot.lane.b32.xlu0 %v579, 4
      %v701 = vpop.permute.xlu0 %700
      %702 = vrot.lane.b32.xlu0 %v591, 4
      %v703 = vpop.permute.xlu0 %702
      %704 = vrot.lane.b32.xlu0 %v603, 4
      %v705 = vpop.permute.xlu0 %704
      %706 = vrot.lane.b32.xlu0 %v615, 4
      %v707 = vpop.permute.xlu0 %706
      %708 = vrot.lane.b32.xlu0 %v627, 4
      %v709 = vpop.permute.xlu0 %708
      %710 = vrot.lane.b32.xlu0 %v639, 4
      %v711 = vpop.permute.xlu0 %710
      %712 = vrot.lane.b32.xlu0 %v651, 4
      %v713 = vpop.permute.xlu0 %712
      %714 = vrot.lane.b32.xlu0 %v663, 4
      %v715 = vpop.permute.xlu0 %714
      %716 = vrot.lane.b32.xlu0 %v675, 4
      %v717 = vpop.permute.xlu0 %716
      %718 = vrot.lane.b32.xlu0 %v687, 4
      %v719 = vpop.permute.xlu0 %718
      %vm720 = vcmask 1046528
      %v721 = vrot.slane %v431, 1
      %v722 = vrot.slane %v479, 1
      %v723 = vsel %vm720, %v721, %v722
      %v724 = vrot.slane %v432, 1
      %v725 = vrot.slane %v480, 1
      %v726 = vsel %vm720, %v724, %v725
      %v727 = vrot.slane %v433, 1
      %v728 = vrot.slane %v481, 1
      %v729 = vsel %vm720, %v727, %v728
      %v730 = vrot.slane %v434, 1
      %v731 = vrot.slane %v482, 1
      %v732 = vsel %vm720, %v730, %v731
      %v733 = vrot.slane %v435, 1
      %v734 = vrot.slane %v483, 1
      %v735 = vsel %vm720, %v733, %v734
      %v736 = vrot.slane %v436, 1
      %v737 = vrot.slane %v484, 1
      %v738 = vsel %vm720, %v736, %v737
      %v739 = vrot.slane %v437, 1
      %v740 = vrot.slane %v485, 1
      %v741 = vsel %vm720, %v739, %v740
      %v742 = vrot.slane %v438, 1
      %v743 = vrot.slane %v486, 1
      %v744 = vsel %vm720, %v742, %v743
      %v745 = vrot.slane %v439, 1
      %v746 = vrot.slane %v487, 1
      %v747 = vsel %vm720, %v745, %v746
      %v748 = vrot.slane %v440, 1
      %v749 = vrot.slane %v488, 1
      %v750 = vsel %vm720, %v748, %v749
      %v751 = vrot.slane %v441, 1
      %v752 = vrot.slane %v489, 1
      %v753 = vsel %vm720, %v751, %v752
      %v754 = vrot.slane %v442, 1
      %v755 = vrot.slane %v490, 1
      %v756 = vsel %vm720, %v754, %v755
      %v757 = vrot.slane %v443, 1
      %v758 = vrot.slane %v491, 1
      %v759 = vsel %vm720, %v757, %v758
      %v760 = vrot.slane %v444, 1
      %v761 = vrot.slane %v492, 1
      %v762 = vsel %vm720, %v760, %v761
      %v763 = vrot.slane %v445, 1
      %v764 = vrot.slane %v493, 1
      %v765 = vsel %vm720, %v763, %v764
      %v766 = vrot.slane %v446, 1
      %v767 = vrot.slane %v494, 1
      %v768 = vsel %vm720, %v766, %v767
      %769 = vrot.lane.b32.xlu0 %v723, 8
      %v770 = vpop.permute.xlu0 %769
      %771 = vrot.lane.b32.xlu0 %v726, 8
      %v772 = vpop.permute.xlu0 %771
      %773 = vrot.lane.b32.xlu0 %v729, 8
      %v774 = vpop.permute.xlu0 %773
      %775 = vrot.lane.b32.xlu0 %v732, 8
      %v776 = vpop.permute.xlu0 %775
      %777 = vrot.lane.b32.xlu0 %v735, 8
      %v778 = vpop.permute.xlu0 %777
      %779 = vrot.lane.b32.xlu0 %v738, 8
      %v780 = vpop.permute.xlu0 %779
      %781 = vrot.lane.b32.xlu0 %v741, 8
      %v782 = vpop.permute.xlu0 %781
      %783 = vrot.lane.b32.xlu0 %v744, 8
      %v784 = vpop.permute.xlu0 %783
      %785 = vrot.lane.b32.xlu0 %v747, 8
      %v786 = vpop.permute.xlu0 %785
      %787 = vrot.lane.b32.xlu0 %v750, 8
      %v788 = vpop.permute.xlu0 %787
      %789 = vrot.lane.b32.xlu0 %v753, 8
      %v790 = vpop.permute.xlu0 %789
      %791 = vrot.lane.b32.xlu0 %v756, 8
      %v792 = vpop.permute.xlu0 %791
      %793 = vrot.lane.b32.xlu0 %v759, 8
      %v794 = vpop.permute.xlu0 %793
      %795 = vrot.lane.b32.xlu0 %v762, 8
      %v796 = vpop.permute.xlu0 %795
      %797 = vrot.lane.b32.xlu0 %v765, 8
      %v798 = vpop.permute.xlu0 %797
      %799 = vrot.lane.b32.xlu0 %v768, 8
      %v800 = vpop.permute.xlu0 %799
      %v803 = vunpack.c.l.b16 %v361
      %v804 = vunpack.c.l.b16 %v362
      %v805 = vpack.c.b16 %v804, %v803
      %806 = vrot.lane.b32.xlu0 %v432, 12
      %v807 = vpop.permute.xlu0 %806
      %808 = vrot.lane.b32.xlu0 %v433, 12
      %v809 = vpop.permute.xlu0 %808
      %810 = vrot.lane.b32.xlu0 %v434, 12
      %v811 = vpop.permute.xlu0 %810
      %812 = vrot.lane.b32.xlu0 %v435, 12
      %v813 = vpop.permute.xlu0 %812
      %814 = vrot.lane.b32.xlu0 %v436, 12
      %v815 = vpop.permute.xlu0 %814
      %816 = vrot.lane.b32.xlu0 %v437, 12
      %v817 = vpop.permute.xlu0 %816
      %818 = vrot.lane.b32.xlu0 %v438, 12
      %v819 = vpop.permute.xlu0 %818
      %820 = vrot.lane.b32.xlu0 %v439, 12
      %v821 = vpop.permute.xlu0 %820
      %822 = vrot.lane.b32.xlu0 %v440, 12
      %v823 = vpop.permute.xlu0 %822
      %824 = vrot.lane.b32.xlu0 %v441, 12
      %v825 = vpop.permute.xlu0 %824
      %826 = vrot.lane.b32.xlu0 %v442, 12
      %v827 = vpop.permute.xlu0 %826
      %828 = vrot.lane.b32.xlu0 %v443, 12
      %v829 = vpop.permute.xlu0 %828
      %830 = vrot.lane.b32.xlu0 %v444, 12
      %v831 = vpop.permute.xlu0 %830
      %832 = vrot.lane.b32.xlu0 %v445, 12
      %v833 = vpop.permute.xlu0 %832
      %834 = vrot.lane.b32.xlu0 %v446, 12
      %v835 = vpop.permute.xlu0 %834
      %836 = vrot.lane.b32.xlu0 %v805, 12
      %v837 = vpop.permute.xlu0 %836
      %v839 = vunpack.c.l.b16 %v363
      %v840 = vpack.c.b16 %v839, %v839
      %v842 = vshrl.u32 %v805, 16
      %v844 = vshll.u32 %v805, 16
      %v846 = vrot.slane %v844, 1
      %v847 = vor.u32 %v842, %v846
      %v849 = vshll.u32 %v840, 16
      %v851 = vrot.slane %v849, 1
      %v852 = vsel %vm495, %v847, %v851
      %853 = vrot.lane.b32.xlu0 %v519, 16
      %v854 = vpop.permute.xlu0 %853
      %855 = vrot.lane.b32.xlu0 %v531, 16
      %v856 = vpop.permute.xlu0 %855
      %857 = vrot.lane.b32.xlu0 %v543, 16
      %v858 = vpop.permute.xlu0 %857
      %859 = vrot.lane.b32.xlu0 %v555, 16
      %v860 = vpop.permute.xlu0 %859
      %861 = vrot.lane.b32.xlu0 %v567, 16
      %v862 = vpop.permute.xlu0 %861
      %863 = vrot.lane.b32.xlu0 %v579, 16
      %v864 = vpop.permute.xlu0 %863
      %865 = vrot.lane.b32.xlu0 %v591, 16
      %v866 = vpop.permute.xlu0 %865
      %867 = vrot.lane.b32.xlu0 %v603, 16
      %v868 = vpop.permute.xlu0 %867
      %869 = vrot.lane.b32.xlu0 %v615, 16
      %v870 = vpop.permute.xlu0 %869
      %871 = vrot.lane.b32.xlu0 %v627, 16
      %v872 = vpop.permute.xlu0 %871
      %873 = vrot.lane.b32.xlu0 %v639, 16
      %v874 = vpop.permute.xlu0 %873
      %875 = vrot.lane.b32.xlu0 %v651, 16
      %v876 = vpop.permute.xlu0 %875
      %877 = vrot.lane.b32.xlu0 %v663, 16
      %v878 = vpop.permute.xlu0 %877
      %879 = vrot.lane.b32.xlu0 %v675, 16
      %v880 = vpop.permute.xlu0 %879
      %881 = vrot.lane.b32.xlu0 %v687, 16
      %v882 = vpop.permute.xlu0 %881
      %883 = vrot.lane.b32.xlu0 %v852, 16
      %v884 = vpop.permute.xlu0 %883
      %v885 = vrot.slane %v805, 1
      %v886 = vrot.slane %v840, 1
      %v887 = vsel %vm720, %v885, %v886
      %888 = vrot.lane.b32.xlu0 %v726, 20
      %v889 = vpop.permute.xlu0 %888
      %890 = vrot.lane.b32.xlu0 %v729, 20
      %v891 = vpop.permute.xlu0 %890
      %892 = vrot.lane.b32.xlu0 %v732, 20
      %v893 = vpop.permute.xlu0 %892
      %894 = vrot.lane.b32.xlu0 %v735, 20
      %v895 = vpop.permute.xlu0 %894
      %896 = vrot.lane.b32.xlu0 %v738, 20
      %v897 = vpop.permute.xlu0 %896
      %898 = vrot.lane.b32.xlu0 %v741, 20
      %v899 = vpop.permute.xlu0 %898
      %900 = vrot.lane.b32.xlu0 %v744, 20
      %v901 = vpop.permute.xlu0 %900
      %902 = vrot.lane.b32.xlu0 %v747, 20
      %v903 = vpop.permute.xlu0 %902
      %904 = vrot.lane.b32.xlu0 %v750, 20
      %v905 = vpop.permute.xlu0 %904
      %906 = vrot.lane.b32.xlu0 %v753, 20
      %v907 = vpop.permute.xlu0 %906
      %908 = vrot.lane.b32.xlu0 %v756, 20
      %v909 = vpop.permute.xlu0 %908
      %910 = vrot.lane.b32.xlu0 %v759, 20
      %v911 = vpop.permute.xlu0 %910
      %912 = vrot.lane.b32.xlu0 %v762, 20
      %v913 = vpop.permute.xlu0 %912
      %914 = vrot.lane.b32.xlu0 %v765, 20
      %v915 = vpop.permute.xlu0 %914
      %916 = vrot.lane.b32.xlu0 %v768, 20
      %v917 = vpop.permute.xlu0 %916
      %918 = vrot.lane.b32.xlu0 %v887, 20
      %v919 = vpop.permute.xlu0 %918
      %v922 = vunpack.c.l.b16 %v364
      %v923 = vunpack.c.l.b16 %v365
      %v924 = vpack.c.b16 %v923, %v922
      %925 = vrot.lane.b32.xlu0 %v433, 24
      %v926 = vpop.permute.xlu0 %925
      %927 = vrot.lane.b32.xlu0 %v434, 24
      %v928 = vpop.permute.xlu0 %927
      %929 = vrot.lane.b32.xlu0 %v435, 24
      %v930 = vpop.permute.xlu0 %929
      %931 = vrot.lane.b32.xlu0 %v436, 24
      %v932 = vpop.permute.xlu0 %931
      %933 = vrot.lane.b32.xlu0 %v437, 24
      %v934 = vpop.permute.xlu0 %933
      %935 = vrot.lane.b32.xlu0 %v438, 24
      %v936 = vpop.permute.xlu0 %935
      %937 = vrot.lane.b32.xlu0 %v439, 24
      %v938 = vpop.permute.xlu0 %937
      %939 = vrot.lane.b32.xlu0 %v440, 24
      %v940 = vpop.permute.xlu0 %939
      %941 = vrot.lane.b32.xlu0 %v441, 24
      %v942 = vpop.permute.xlu0 %941
      %943 = vrot.lane.b32.xlu0 %v442, 24
      %v944 = vpop.permute.xlu0 %943
      %945 = vrot.lane.b32.xlu0 %v443, 24
      %v946 = vpop.permute.xlu0 %945
      %947 = vrot.lane.b32.xlu0 %v444, 24
      %v948 = vpop.permute.xlu0 %947
      %949 = vrot.lane.b32.xlu0 %v445, 24
      %v950 = vpop.permute.xlu0 %949
      %951 = vrot.lane.b32.xlu0 %v446, 24
      %v952 = vpop.permute.xlu0 %951
      %953 = vrot.lane.b32.xlu0 %v805, 24
      %v954 = vpop.permute.xlu0 %953
      %955 = vrot.lane.b32.xlu0 %v924, 24
      %v956 = vpop.permute.xlu0 %955
      %v958 = vunpack.c.l.b16 %v366
      %v959 = vpack.c.b16 %v958, %v958
      %v961 = vshrl.u32 %v924, 16
      %v963 = vshll.u32 %v924, 16
      %v965 = vrot.slane %v963, 1
      %v966 = vor.u32 %v961, %v965
      %v968 = vshll.u32 %v959, 16
      %v970 = vrot.slane %v968, 1
      %v971 = vsel %vm495, %v966, %v970
      %972 = vrot.lane.b32.xlu0 %v531, 28
      %v973 = vpop.permute.xlu0 %972
      %974 = vrot.lane.b32.xlu0 %v543, 28
      %v975 = vpop.permute.xlu0 %974
      %976 = vrot.lane.b32.xlu0 %v555, 28
      %v977 = vpop.permute.xlu0 %976
      %978 = vrot.lane.b32.xlu0 %v567, 28
      %v979 = vpop.permute.xlu0 %978
      %980 = vrot.lane.b32.xlu0 %v579, 28
      %v981 = vpop.permute.xlu0 %980
      %982 = vrot.lane.b32.xlu0 %v591, 28
      %v983 = vpop.permute.xlu0 %982
      %984 = vrot.lane.b32.xlu0 %v603, 28
      %v985 = vpop.permute.xlu0 %984
      %986 = vrot.lane.b32.xlu0 %v615, 28
      %v987 = vpop.permute.xlu0 %986
      %988 = vrot.lane.b32.xlu0 %v627, 28
      %v989 = vpop.permute.xlu0 %988
      %990 = vrot.lane.b32.xlu0 %v639, 28
      %v991 = vpop.permute.xlu0 %990
      %992 = vrot.lane.b32.xlu0 %v651, 28
      %v993 = vpop.permute.xlu0 %992
      %994 = vrot.lane.b32.xlu0 %v663, 28
      %v995 = vpop.permute.xlu0 %994
      %996 = vrot.lane.b32.xlu0 %v675, 28
      %v997 = vpop.permute.xlu0 %996
      %998 = vrot.lane.b32.xlu0 %v687, 28
      %v999 = vpop.permute.xlu0 %998
      %1000 = vrot.lane.b32.xlu0 %v852, 28
      %v1001 = vpop.permute.xlu0 %1000
      %1002 = vrot.lane.b32.xlu0 %v971, 28
      %v1003 = vpop.permute.xlu0 %1002
      %v1004 = vrot.slane %v924, 1
      %v1005 = vrot.slane %v959, 1
      %v1006 = vsel %vm720, %v1004, %v1005
      %1007 = vrot.lane.b32.xlu0 %v729, 32
      %v1008 = vpop.permute.xlu0 %1007
      %1009 = vrot.lane.b32.xlu0 %v732, 32
      %v1010 = vpop.permute.xlu0 %1009
      %1011 = vrot.lane.b32.xlu0 %v735, 32
      %v1012 = vpop.permute.xlu0 %1011
      %1013 = vrot.lane.b32.xlu0 %v738, 32
      %v1014 = vpop.permute.xlu0 %1013
      %1015 = vrot.lane.b32.xlu0 %v741, 32
      %v1016 = vpop.permute.xlu0 %1015
      %1017 = vrot.lane.b32.xlu0 %v744, 32
      %v1018 = vpop.permute.xlu0 %1017
      %1019 = vrot.lane.b32.xlu0 %v747, 32
      %v1020 = vpop.permute.xlu0 %1019
      %1021 = vrot.lane.b32.xlu0 %v750, 32
      %v1022 = vpop.permute.xlu0 %1021
      %1023 = vrot.lane.b32.xlu0 %v753, 32
      %v1024 = vpop.permute.xlu0 %1023
      %1025 = vrot.lane.b32.xlu0 %v756, 32
      %v1026 = vpop.permute.xlu0 %1025
      %1027 = vrot.lane.b32.xlu0 %v759, 32
      %v1028 = vpop.permute.xlu0 %1027
      %1029 = vrot.lane.b32.xlu0 %v762, 32
      %v1030 = vpop.permute.xlu0 %1029
      %1031 = vrot.lane.b32.xlu0 %v765, 32
      %v1032 = vpop.permute.xlu0 %1031
      %1033 = vrot.lane.b32.xlu0 %v768, 32
      %v1034 = vpop.permute.xlu0 %1033
      %1035 = vrot.lane.b32.xlu0 %v887, 32
      %v1036 = vpop.permute.xlu0 %1035
      %1037 = vrot.lane.b32.xlu0 %v1006, 32
      %v1038 = vpop.permute.xlu0 %1037
      %vm1039 = vcmask 31744
      %v1041 = vsel %vm1039, %v431, %v689
      %v1043 = vsel %vm1039, %v432, %v691
      %v1045 = vsel %vm1039, %v433, %v693
      %v1047 = vsel %vm1039, %v434, %v695
      %v1049 = vsel %vm1039, %v435, %v697
      %v1051 = vsel %vm1039, %v436, %v699
      %v1053 = vsel %vm1039, %v437, %v701
      %v1055 = vsel %vm1039, %v438, %v703
      %v1057 = vsel %vm1039, %v439, %v705
      %v1059 = vsel %vm1039, %v440, %v707
      %v1061 = vsel %vm1039, %v441, %v709
      %v1063 = vsel %vm1039, %v442, %v711
      %v1065 = vsel %vm1039, %v443, %v713
      %v1067 = vsel %vm1039, %v444, %v715
      %v1069 = vsel %vm1039, %v445, %v717
      %v1071 = vsel %vm1039, %v446, %v719
      %vm1072 = vcmask 64512
      %v1074 = vsel %vm1072, %v1041, %v770
      %v1076 = vsel %vm1072, %v1043, %v772
      %v1078 = vsel %vm1072, %v1045, %v774
      %v1080 = vsel %vm1072, %v1047, %v776
      %v1082 = vsel %vm1072, %v1049, %v778
      %v1084 = vsel %vm1072, %v1051, %v780
      %v1086 = vsel %vm1072, %v1053, %v782
      %v1088 = vsel %vm1072, %v1055, %v784
      %v1090 = vsel %vm1072, %v1057, %v786
      %v1092 = vsel %vm1072, %v1059, %v788
      %v1094 = vsel %vm1072, %v1061, %v790
      %v1096 = vsel %vm1072, %v1063, %v792
      %v1098 = vsel %vm1072, %v1065, %v794
      %v1100 = vsel %vm1072, %v1067, %v796
      %v1102 = vsel %vm1072, %v1069, %v798
      %v1104 = vsel %vm1072, %v1071, %v800
      %vm1105 = vcmask 97280
      %v1107 = vsel %vm1105, %v1074, %v807
      %v1109 = vsel %vm1105, %v1076, %v809
      %v1111 = vsel %vm1105, %v1078, %v811
      %v1113 = vsel %vm1105, %v1080, %v813
      %v1115 = vsel %vm1105, %v1082, %v815
      %v1117 = vsel %vm1105, %v1084, %v817
      %v1119 = vsel %vm1105, %v1086, %v819
      %v1121 = vsel %vm1105, %v1088, %v821
      %v1123 = vsel %vm1105, %v1090, %v823
      %v1125 = vsel %vm1105, %v1092, %v825
      %v1127 = vsel %vm1105, %v1094, %v827
      %v1129 = vsel %vm1105, %v1096, %v829
      %v1131 = vsel %vm1105, %v1098, %v831
      %v1133 = vsel %vm1105, %v1100, %v833
      %v1135 = vsel %vm1105, %v1102, %v835
      %v1137 = vsel %vm1105, %v1104, %v837
      %vm1138 = vcmask 130048
      %v1140 = vsel %vm1138, %v1107, %v854
      %v1142 = vsel %vm1138, %v1109, %v856
      %v1144 = vsel %vm1138, %v1111, %v858
      %v1146 = vsel %vm1138, %v1113, %v860
      %v1148 = vsel %vm1138, %v1115, %v862
      %v1150 = vsel %vm1138, %v1117, %v864
      %v1152 = vsel %vm1138, %v1119, %v866
      %v1154 = vsel %vm1138, %v1121, %v868
      %v1156 = vsel %vm1138, %v1123, %v870
      %v1158 = vsel %vm1138, %v1125, %v872
      %v1160 = vsel %vm1138, %v1127, %v874
      %v1162 = vsel %vm1138, %v1129, %v876
      %v1164 = vsel %vm1138, %v1131, %v878
      %v1166 = vsel %vm1138, %v1133, %v880
      %v1168 = vsel %vm1138, %v1135, %v882
      %v1170 = vsel %vm1138, %v1137, %v884
      %vm1171 = vcmask 162816
      %v1173 = vsel %vm1171, %v1140, %v889
      %v1175 = vsel %vm1171, %v1142, %v891
      %v1177 = vsel %vm1171, %v1144, %v893
      %v1179 = vsel %vm1171, %v1146, %v895
      %v1181 = vsel %vm1171, %v1148, %v897
      %v1183 = vsel %vm1171, %v1150, %v899
      %v1185 = vsel %vm1171, %v1152, %v901
      %v1187 = vsel %vm1171, %v1154, %v903
      %v1189 = vsel %vm1171, %v1156, %v905
      %v1191 = vsel %vm1171, %v1158, %v907
      %v1193 = vsel %vm1171, %v1160, %v909
      %v1195 = vsel %vm1171, %v1162, %v911
      %v1197 = vsel %vm1171, %v1164, %v913
      %v1199 = vsel %vm1171, %v1166, %v915
      %v1201 = vsel %vm1171, %v1168, %v917
      %v1203 = vsel %vm1171, %v1170, %v919
      %vm1204 = vcmask 195584
      %v1206 = vsel %vm1204, %v1173, %v926
      %v1208 = vsel %vm1204, %v1175, %v928
      %v1210 = vsel %vm1204, %v1177, %v930
      %v1212 = vsel %vm1204, %v1179, %v932
      %v1214 = vsel %vm1204, %v1181, %v934
      %v1216 = vsel %vm1204, %v1183, %v936
      %v1218 = vsel %vm1204, %v1185, %v938
      %v1220 = vsel %vm1204, %v1187, %v940
      %v1222 = vsel %vm1204, %v1189, %v942
      %v1224 = vsel %vm1204, %v1191, %v944
      %v1226 = vsel %vm1204, %v1193, %v946
      %v1228 = vsel %vm1204, %v1195, %v948
      %v1230 = vsel %vm1204, %v1197, %v950
      %v1232 = vsel %vm1204, %v1199, %v952
      %v1234 = vsel %vm1204, %v1201, %v954
      %v1236 = vsel %vm1204, %v1203, %v956
      %vm1237 = vcmask 228352
      %v1239 = vsel %vm1237, %v1206, %v973
      %v1241 = vsel %vm1237, %v1208, %v975
      %v1243 = vsel %vm1237, %v1210, %v977
      %v1245 = vsel %vm1237, %v1212, %v979
      %v1247 = vsel %vm1237, %v1214, %v981
      %v1249 = vsel %vm1237, %v1216, %v983
      %v1251 = vsel %vm1237, %v1218, %v985
      %v1253 = vsel %vm1237, %v1220, %v987
      %v1255 = vsel %vm1237, %v1222, %v989
      %v1257 = vsel %vm1237, %v1224, %v991
      %v1259 = vsel %vm1237, %v1226, %v993
      %v1261 = vsel %vm1237, %v1228, %v995
      %v1263 = vsel %vm1237, %v1230, %v997
      %v1265 = vsel %vm1237, %v1232, %v999
      %v1267 = vsel %vm1237, %v1234, %v1001
      %v1269 = vsel %vm1237, %v1236, %v1003
      %vm1270 = vcmask 261120
      %v1272 = vsel %vm1270, %v1239, %v1008
      %v1274 = vsel %vm1270, %v1241, %v1010
      %v1276 = vsel %vm1270, %v1243, %v1012
      %v1278 = vsel %vm1270, %v1245, %v1014
      %v1280 = vsel %vm1270, %v1247, %v1016
      %v1282 = vsel %vm1270, %v1249, %v1018
      %v1284 = vsel %vm1270, %v1251, %v1020
      %v1286 = vsel %vm1270, %v1253, %v1022
      %v1288 = vsel %vm1270, %v1255, %v1024
      %v1290 = vsel %vm1270, %v1257, %v1026
      %v1292 = vsel %vm1270, %v1259, %v1028
      %v1294 = vsel %vm1270, %v1261, %v1030
      %v1296 = vsel %vm1270, %v1263, %v1032
      %v1298 = vsel %vm1270, %v1265, %v1034
      %v1300 = vsel %vm1270, %v1267, %v1036
      %v1302 = vsel %vm1270, %v1269, %v1038
      %v1303 = vld [vmem:[%s296] sm:$0xf]
      %v1304 = vld [vmem:[%s296 + $0x4] sm:$0xf]
      %v1305 = vld [vmem:[%s296 + $0x8] sm:$0x1]
      %v1306 = vld [vmem:[%s296 + $0xc] sm:$0xf]
      %v1307 = vld [vmem:[%s296 + $0x10] sm:$0xf]
      %v1308 = vld [vmem:[%s296 + $0x14] sm:$0x1]
      %v1309 = vld [vmem:[%s296 + $0x18] sm:$0xf]
      %v1310 = vld [vmem:[%s296 + $0x1c] sm:$0xf]
      %v1311 = vld [vmem:[%s296 + $0x20] sm:$0x1]
      %v1312 = vld [vmem:[%s296 + $0x24] sm:$0xf]
      %v1313 = vld [vmem:[%s296 + $0x28] sm:$0xf]
      %v1314 = vld [vmem:[%s296 + $0x2c] sm:$0x1]
      %v1315 = vld [vmem:[%s296 + $0x30] sm:$0xf]
      %v1316 = vld [vmem:[%s296 + $0x34] sm:$0xf]
      %v1317 = vld [vmem:[%s296 + $0x38] sm:$0x1]
      %v1318 = vld [vmem:[%s296 + $0x3c] sm:$0xf]
      %v1319 = vld [vmem:[%s296 + $0x40] sm:$0xf]
      %v1320 = vld [vmem:[%s296 + $0x44] sm:$0x1]
      %v1321 = vld [vmem:[%s296 + $0x48] sm:$0xf]
      %v1322 = vld [vmem:[%s296 + $0x4c] sm:$0xf]
      %v1323 = vld [vmem:[%s296 + $0x50] sm:$0x1]
      %v1324 = vld [vmem:[%s296 + $0x54] sm:$0xf]
      %v1325 = vld [vmem:[%s296 + $0x58] sm:$0xf]
      %v1326 = vld [vmem:[%s296 + $0x5c] sm:$0x1]
      %v1327 = vld [vmem:[%s296 + $0x60] sm:$0xf]
      %v1328 = vld [vmem:[%s296 + $0x64] sm:$0xf]
      %v1329 = vld [vmem:[%s296 + $0x68] sm:$0x1]
      %v1330 = vld [vmem:[%s296 + $0x6c] sm:$0xf]
      %v1331 = vld [vmem:[%s296 + $0x70] sm:$0xf]
      %v1332 = vld [vmem:[%s296 + $0x74] sm:$0x1]
      %v1333 = vld [vmem:[%s296 + $0x78] sm:$0xf]
      %v1334 = vld [vmem:[%s296 + $0x7c] sm:$0xf]
      %v1335 = vld [vmem:[%s296 + $0x80] sm:$0x1]
      %v1336 = vld [vmem:[%s296 + $0x84] sm:$0xf]
      %v1337 = vld [vmem:[%s296 + $0x88] sm:$0xf]
      %v1338 = vld [vmem:[%s296 + $0x8c] sm:$0x1]
      %v1339 = vld [vmem:[%s296 + $0x90] sm:$0xf]
      %v1340 = vld [vmem:[%s296 + $0x94] sm:$0xf]
      %v1341 = vld [vmem:[%s296 + $0x98] sm:$0x1]
      %v1342 = vld [vmem:[%s296 + $0x9c] sm:$0xf]
      %v1343 = vld [vmem:[%s296 + $0xa0] sm:$0xf]
      %v1344 = vld [vmem:[%s296 + $0xa4] sm:$0x1]
      %v1345 = vld [vmem:[%s296 + $0xa8] sm:$0xf]
      %v1346 = vld [vmem:[%s296 + $0xac] sm:$0xf]
      %v1347 = vld [vmem:[%s296 + $0xb0] sm:$0x1]
      %v1348 = vld [vmem:[%s296 + $0xb4] sm:$0xf]
      %v1349 = vld [vmem:[%s296 + $0xb8] sm:$0xf]
      %v1350 = vld [vmem:[%s296 + $0xbc] sm:$0x1]
      %v1351 = vld [vmem:[%s296 + $0xc0] sm:$0xf]
      %v1352 = vld [vmem:[%s296 + $0xc4] sm:$0xf]
      %v1353 = vld [vmem:[%s296 + $0xc8] sm:$0x1]
      %v1354 = vld [vmem:[%s296 + $0xcc] sm:$0xf]
      %v1355 = vld [vmem:[%s296 + $0xd0] sm:$0xf]
      %v1356 = vld [vmem:[%s296 + $0xd4] sm:$0x1]
      %v1389 = vunpack.c.l.b16 %v1303
      %v1390 = vunpack.c.l.b16 %v1304
      %v1391 = vunpack.c.l.b16 %v1306
      %v1392 = vunpack.c.l.b16 %v1307
      %v1393 = vunpack.c.l.b16 %v1309
      %v1394 = vunpack.c.l.b16 %v1310
      %v1395 = vunpack.c.l.b16 %v1312
      %v1396 = vunpack.c.l.b16 %v1313
      %v1397 = vunpack.c.l.b16 %v1315
      %v1398 = vunpack.c.l.b16 %v1316
      %v1399 = vunpack.c.l.b16 %v1318
      %v1400 = vunpack.c.l.b16 %v1319
      %v1401 = vunpack.c.l.b16 %v1321
      %v1402 = vunpack.c.l.b16 %v1322
      %v1403 = vunpack.c.l.b16 %v1324
      %v1404 = vunpack.c.l.b16 %v1325
      %v1405 = vunpack.c.l.b16 %v1327
      %v1406 = vunpack.c.l.b16 %v1328
      %v1407 = vunpack.c.l.b16 %v1330
      %v1408 = vunpack.c.l.b16 %v1331
      %v1409 = vunpack.c.l.b16 %v1333
      %v1410 = vunpack.c.l.b16 %v1334
      %v1411 = vunpack.c.l.b16 %v1336
      %v1412 = vunpack.c.l.b16 %v1337
      %v1413 = vunpack.c.l.b16 %v1339
      %v1414 = vunpack.c.l.b16 %v1340
      %v1415 = vunpack.c.l.b16 %v1342
      %v1416 = vunpack.c.l.b16 %v1343
      %v1417 = vunpack.c.l.b16 %v1345
      %v1418 = vunpack.c.l.b16 %v1346
      %v1419 = vunpack.c.l.b16 %v1348
      %v1420 = vunpack.c.l.b16 %v1349
      %v1421 = vpack.c.b16 %v1390, %v1389
      %v1422 = vpack.c.b16 %v1392, %v1391
      %v1423 = vpack.c.b16 %v1394, %v1393
      %v1424 = vpack.c.b16 %v1396, %v1395
      %v1425 = vpack.c.b16 %v1398, %v1397
      %v1426 = vpack.c.b16 %v1400, %v1399
      %v1427 = vpack.c.b16 %v1402, %v1401
      %v1428 = vpack.c.b16 %v1404, %v1403
      %v1429 = vpack.c.b16 %v1406, %v1405
      %v1430 = vpack.c.b16 %v1408, %v1407
      %v1431 = vpack.c.b16 %v1410, %v1409
      %v1432 = vpack.c.b16 %v1412, %v1411
      %v1433 = vpack.c.b16 %v1414, %v1413
      %v1434 = vpack.c.b16 %v1416, %v1415
      %v1435 = vpack.c.b16 %v1418, %v1417
      %v1436 = vpack.c.b16 %v1420, %v1419
      %v1453 = vunpack.c.l.b16 %v1305
      %v1454 = vunpack.c.l.b16 %v1308
      %v1455 = vunpack.c.l.b16 %v1311
      %v1456 = vunpack.c.l.b16 %v1314
      %v1457 = vunpack.c.l.b16 %v1317
      %v1458 = vunpack.c.l.b16 %v1320
      %v1459 = vunpack.c.l.b16 %v1323
      %v1460 = vunpack.c.l.b16 %v1326
      %v1461 = vunpack.c.l.b16 %v1329
      %v1462 = vunpack.c.l.b16 %v1332
      %v1463 = vunpack.c.l.b16 %v1335
      %v1464 = vunpack.c.l.b16 %v1338
      %v1465 = vunpack.c.l.b16 %v1341
      %v1466 = vunpack.c.l.b16 %v1344
      %v1467 = vunpack.c.l.b16 %v1347
      %v1468 = vunpack.c.l.b16 %v1350
      %v1469 = vpack.c.b16 %v1453, %v1453
      %v1470 = vpack.c.b16 %v1454, %v1454
      %v1471 = vpack.c.b16 %v1455, %v1455
      %v1472 = vpack.c.b16 %v1456, %v1456
      %v1473 = vpack.c.b16 %v1457, %v1457
      %v1474 = vpack.c.b16 %v1458, %v1458
      %v1475 = vpack.c.b16 %v1459, %v1459
      %v1476 = vpack.c.b16 %v1460, %v1460
      %v1477 = vpack.c.b16 %v1461, %v1461
      %v1478 = vpack.c.b16 %v1462, %v1462
      %v1479 = vpack.c.b16 %v1463, %v1463
      %v1480 = vpack.c.b16 %v1464, %v1464
      %v1481 = vpack.c.b16 %v1465, %v1465
      %v1482 = vpack.c.b16 %v1466, %v1466
      %v1483 = vpack.c.b16 %v1467, %v1467
      %v1484 = vpack.c.b16 %v1468, %v1468
      %v1486 = vshrl.u32 %v1421, 16
      %v1488 = vshll.u32 %v1421, 16
      %v1490 = vrot.slane %v1488, 1
      %v1491 = vor.u32 %v1486, %v1490
      %v1493 = vshll.u32 %v1469, 16
      %v1495 = vrot.slane %v1493, 1
      %v1496 = vsel %vm495, %v1491, %v1495
      %v1498 = vshrl.u32 %v1422, 16
      %v1500 = vshll.u32 %v1422, 16
      %v1502 = vrot.slane %v1500, 1
      %v1503 = vor.u32 %v1498, %v1502
      %v1505 = vshll.u32 %v1470, 16
      %v1507 = vrot.slane %v1505, 1
      %v1508 = vsel %vm495, %v1503, %v1507
      %v1510 = vshrl.u32 %v1423, 16
      %v1512 = vshll.u32 %v1423, 16
      %v1514 = vrot.slane %v1512, 1
      %v1515 = vor.u32 %v1510, %v1514
      %v1517 = vshll.u32 %v1471, 16
      %v1519 = vrot.slane %v1517, 1
      %v1520 = vsel %vm495, %v1515, %v1519
      %v1522 = vshrl.u32 %v1424, 16
      %v1524 = vshll.u32 %v1424, 16
      %v1526 = vrot.slane %v1524, 1
      %v1527 = vor.u32 %v1522, %v1526
      %v1529 = vshll.u32 %v1472, 16
      %v1531 = vrot.slane %v1529, 1
      %v1532 = vsel %vm495, %v1527, %v1531
      %v1534 = vshrl.u32 %v1425, 16
      %v1536 = vshll.u32 %v1425, 16
      %v1538 = vrot.slane %v1536, 1
      %v1539 = vor.u32 %v1534, %v1538
      %v1541 = vshll.u32 %v1473, 16
      %v1543 = vrot.slane %v1541, 1
      %v1544 = vsel %vm495, %v1539, %v1543
      %v1546 = vshrl.u32 %v1426, 16
      %v1548 = vshll.u32 %v1426, 16
      %v1550 = vrot.slane %v1548, 1
      %v1551 = vor.u32 %v1546, %v1550
      %v1553 = vshll.u32 %v1474, 16
      %v1555 = vrot.slane %v1553, 1
      %v1556 = vsel %vm495, %v1551, %v1555
      %v1558 = vshrl.u32 %v1427, 16
      %v1560 = vshll.u32 %v1427, 16
      %v1562 = vrot.slane %v1560, 1
      %v1563 = vor.u32 %v1558, %v1562
      %v1565 = vshll.u32 %v1475, 16
      %v1567 = vrot.slane %v1565, 1
      %v1568 = vsel %vm495, %v1563, %v1567
      %v1570 = vshrl.u32 %v1428, 16
      %v1572 = vshll.u32 %v1428, 16
      %v1574 = vrot.slane %v1572, 1
      %v1575 = vor.u32 %v1570, %v1574
      %v1577 = vshll.u32 %v1476, 16
      %v1579 = vrot.slane %v1577, 1
      %v1580 = vsel %vm495, %v1575, %v1579
      %v1582 = vshrl.u32 %v1429, 16
      %v1584 = vshll.u32 %v1429, 16
      %v1586 = vrot.slane %v1584, 1
      %v1587 = vor.u32 %v1582, %v1586
      %v1589 = vshll.u32 %v1477, 16
      %v1591 = vrot.slane %v1589, 1
      %v1592 = vsel %vm495, %v1587, %v1591
      %v1594 = vshrl.u32 %v1430, 16
      %v1596 = vshll.u32 %v1430, 16
      %v1598 = vrot.slane %v1596, 1
      %v1599 = vor.u32 %v1594, %v1598
      %v1601 = vshll.u32 %v1478, 16
      %v1603 = vrot.slane %v1601, 1
      %v1604 = vsel %vm495, %v1599, %v1603
      %v1606 = vshrl.u32 %v1431, 16
      %v1608 = vshll.u32 %v1431, 16
      %v1610 = vrot.slane %v1608, 1
      %v1611 = vor.u32 %v1606, %v1610
      %v1613 = vshll.u32 %v1479, 16
      %v1615 = vrot.slane %v1613, 1
      %v1616 = vsel %vm495, %v1611, %v1615
      %v1618 = vshrl.u32 %v1432, 16
      %v1620 = vshll.u32 %v1432, 16
      %v1622 = vrot.slane %v1620, 1
      %v1623 = vor.u32 %v1618, %v1622
      %v1625 = vshll.u32 %v1480, 16
      %v1627 = vrot.slane %v1625, 1
      %v1628 = vsel %vm495, %v1623, %v1627
      %v1630 = vshrl.u32 %v1433, 16
      %v1632 = vshll.u32 %v1433, 16
      %v1634 = vrot.slane %v1632, 1
      %v1635 = vor.u32 %v1630, %v1634
      %v1637 = vshll.u32 %v1481, 16
      %v1639 = vrot.slane %v1637, 1
      %v1640 = vsel %vm495, %v1635, %v1639
      %v1642 = vshrl.u32 %v1434, 16
      %v1644 = vshll.u32 %v1434, 16
      %v1646 = vrot.slane %v1644, 1
      %v1647 = vor.u32 %v1642, %v1646
      %v1649 = vshll.u32 %v1482, 16
      %v1651 = vrot.slane %v1649, 1
      %v1652 = vsel %vm495, %v1647, %v1651
      %v1654 = vshrl.u32 %v1435, 16
      %v1656 = vshll.u32 %v1435, 16
      %v1658 = vrot.slane %v1656, 1
      %v1659 = vor.u32 %v1654, %v1658
      %v1661 = vshll.u32 %v1483, 16
      %v1663 = vrot.slane %v1661, 1
      %v1664 = vsel %vm495, %v1659, %v1663
      %v1666 = vshrl.u32 %v1436, 16
      %v1668 = vshll.u32 %v1436, 16
      %v1670 = vrot.slane %v1668, 1
      %v1671 = vor.u32 %v1666, %v1670
      %v1673 = vshll.u32 %v1484, 16
      %v1675 = vrot.slane %v1673, 1
      %v1676 = vsel %vm495, %v1671, %v1675
      %1677 = vrot.lane.b32.xlu0 %v1496, 4
      %v1678 = vpop.permute.xlu0 %1677
      %1679 = vrot.lane.b32.xlu0 %v1508, 4
      %v1680 = vpop.permute.xlu0 %1679
      %1681 = vrot.lane.b32.xlu0 %v1520, 4
      %v1682 = vpop.permute.xlu0 %1681
      %1683 = vrot.lane.b32.xlu0 %v1532, 4
      %v1684 = vpop.permute.xlu0 %1683
      %1685 = vrot.lane.b32.xlu0 %v1544, 4
      %v1686 = vpop.permute.xlu0 %1685
      %1687 = vrot.lane.b32.xlu0 %v1556, 4
      %v1688 = vpop.permute.xlu0 %1687
      %1689 = vrot.lane.b32.xlu0 %v1568, 4
      %v1690 = vpop.permute.xlu0 %1689
      %1691 = vrot.lane.b32.xlu0 %v1580, 4
      %v1692 = vpop.permute.xlu0 %1691
      %1693 = vrot.lane.b32.xlu0 %v1592, 4
      %v1694 = vpop.permute.xlu0 %1693
      %1695 = vrot.lane.b32.xlu0 %v1604, 4
      %v1696 = vpop.permute.xlu0 %1695
      %1697 = vrot.lane.b32.xlu0 %v1616, 4
      %v1698 = vpop.permute.xlu0 %1697
      %1699 = vrot.lane.b32.xlu0 %v1628, 4
      %v1700 = vpop.permute.xlu0 %1699
      %1701 = vrot.lane.b32.xlu0 %v1640, 4
      %v1702 = vpop.permute.xlu0 %1701
      %1703 = vrot.lane.b32.xlu0 %v1652, 4
      %v1704 = vpop.permute.xlu0 %1703
      %1705 = vrot.lane.b32.xlu0 %v1664, 4
      %v1706 = vpop.permute.xlu0 %1705
      %1707 = vrot.lane.b32.xlu0 %v1676, 4
      %v1708 = vpop.permute.xlu0 %1707
      %v1709 = vrot.slane %v1421, 1
      %v1710 = vrot.slane %v1469, 1
      %v1711 = vsel %vm720, %v1709, %v1710
      %v1712 = vrot.slane %v1422, 1
      %v1713 = vrot.slane %v1470, 1
      %v1714 = vsel %vm720, %v1712, %v1713
      %v1715 = vrot.slane %v1423, 1
      %v1716 = vrot.slane %v1471, 1
      %v1717 = vsel %vm720, %v1715, %v1716
      %v1718 = vrot.slane %v1424, 1
      %v1719 = vrot.slane %v1472, 1
      %v1720 = vsel %vm720, %v1718, %v1719
      %v1721 = vrot.slane %v1425, 1
      %v1722 = vrot.slane %v1473, 1
      %v1723 = vsel %vm720, %v1721, %v1722
      %v1724 = vrot.slane %v1426, 1
      %v1725 = vrot.slane %v1474, 1
      %v1726 = vsel %vm720, %v1724, %v1725
      %v1727 = vrot.slane %v1427, 1
      %v1728 = vrot.slane %v1475, 1
      %v1729 = vsel %vm720, %v1727, %v1728
      %v1730 = vrot.slane %v1428, 1
      %v1731 = vrot.slane %v1476, 1
      %v1732 = vsel %vm720, %v1730, %v1731
      %v1733 = vrot.slane %v1429, 1
      %v1734 = vrot.slane %v1477, 1
      %v1735 = vsel %vm720, %v1733, %v1734
      %v1736 = vrot.slane %v1430, 1
      %v1737 = vrot.slane %v1478, 1
      %v1738 = vsel %vm720, %v1736, %v1737
      %v1739 = vrot.slane %v1431, 1
      %v1740 = vrot.slane %v1479, 1
      %v1741 = vsel %vm720, %v1739, %v1740
      %v1742 = vrot.slane %v1432, 1
      %v1743 = vrot.slane %v1480, 1
      %v1744 = vsel %vm720, %v1742, %v1743
      %v1745 = vrot.slane %v1433, 1
      %v1746 = vrot.slane %v1481, 1
      %v1747 = vsel %vm720, %v1745, %v1746
      %v1748 = vrot.slane %v1434, 1
      %v1749 = vrot.slane %v1482, 1
      %v1750 = vsel %vm720, %v1748, %v1749
      %v1751 = vrot.slane %v1435, 1
      %v1752 = vrot.slane %v1483, 1
      %v1753 = vsel %vm720, %v1751, %v1752
      %v1754 = vrot.slane %v1436, 1
      %v1755 = vrot.slane %v1484, 1
      %v1756 = vsel %vm720, %v1754, %v1755
      %1757 = vrot.lane.b32.xlu0 %v1711, 8
      %v1758 = vpop.permute.xlu0 %1757
      %1759 = vrot.lane.b32.xlu0 %v1714, 8
      %v1760 = vpop.permute.xlu0 %1759
      %1761 = vrot.lane.b32.xlu0 %v1717, 8
      %v1762 = vpop.permute.xlu0 %1761
      %1763 = vrot.lane.b32.xlu0 %v1720, 8
      %v1764 = vpop.permute.xlu0 %1763
      %1765 = vrot.lane.b32.xlu0 %v1723, 8
      %v1766 = vpop.permute.xlu0 %1765
      %1767 = vrot.lane.b32.xlu0 %v1726, 8
      %v1768 = vpop.permute.xlu0 %1767
      %1769 = vrot.lane.b32.xlu0 %v1729, 8
      %v1770 = vpop.permute.xlu0 %1769
      %1771 = vrot.lane.b32.xlu0 %v1732, 8
      %v1772 = vpop.permute.xlu0 %1771
      %1773 = vrot.lane.b32.xlu0 %v1735, 8
      %v1774 = vpop.permute.xlu0 %1773
      %1775 = vrot.lane.b32.xlu0 %v1738, 8
      %v1776 = vpop.permute.xlu0 %1775
      %1777 = vrot.lane.b32.xlu0 %v1741, 8
      %v1778 = vpop.permute.xlu0 %1777
      %1779 = vrot.lane.b32.xlu0 %v1744, 8
      %v1780 = vpop.permute.xlu0 %1779
      %1781 = vrot.lane.b32.xlu0 %v1747, 8
      %v1782 = vpop.permute.xlu0 %1781
      %1783 = vrot.lane.b32.xlu0 %v1750, 8
      %v1784 = vpop.permute.xlu0 %1783
      %1785 = vrot.lane.b32.xlu0 %v1753, 8
      %v1786 = vpop.permute.xlu0 %1785
      %1787 = vrot.lane.b32.xlu0 %v1756, 8
      %v1788 = vpop.permute.xlu0 %1787
      %v1791 = vunpack.c.l.b16 %v1351
      %v1792 = vunpack.c.l.b16 %v1352
      %v1793 = vpack.c.b16 %v1792, %v1791
      %1794 = vrot.lane.b32.xlu0 %v1422, 12
      %v1795 = vpop.permute.xlu0 %1794
      %1796 = vrot.lane.b32.xlu0 %v1423, 12
      %v1797 = vpop.permute.xlu0 %1796
      %1798 = vrot.lane.b32.xlu0 %v1424, 12
      %v1799 = vpop.permute.xlu0 %1798
      %1800 = vrot.lane.b32.xlu0 %v1425, 12
      %v1801 = vpop.permute.xlu0 %1800
      %1802 = vrot.lane.b32.xlu0 %v1426, 12
      %v1803 = vpop.permute.xlu0 %1802
      %1804 = vrot.lane.b32.xlu0 %v1427, 12
      %v1805 = vpop.permute.xlu0 %1804
      %1806 = vrot.lane.b32.xlu0 %v1428, 12
      %v1807 = vpop.permute.xlu0 %1806
      %1808 = vrot.lane.b32.xlu0 %v1429, 12
      %v1809 = vpop.permute.xlu0 %1808
      %1810 = vrot.lane.b32.xlu0 %v1430, 12
      %v1811 = vpop.permute.xlu0 %1810
      %1812 = vrot.lane.b32.xlu0 %v1431, 12
      %v1813 = vpop.permute.xlu0 %1812
      %1814 = vrot.lane.b32.xlu0 %v1432, 12
      %v1815 = vpop.permute.xlu0 %1814
      %1816 = vrot.lane.b32.xlu0 %v1433, 12
      %v1817 = vpop.permute.xlu0 %1816
      %1818 = vrot.lane.b32.xlu0 %v1434, 12
      %v1819 = vpop.permute.xlu0 %1818
      %1820 = vrot.lane.b32.xlu0 %v1435, 12
      %v1821 = vpop.permute.xlu0 %1820
      %1822 = vrot.lane.b32.xlu0 %v1436, 12
      %v1823 = vpop.permute.xlu0 %1822
      %1824 = vrot.lane.b32.xlu0 %v1793, 12
      %v1825 = vpop.permute.xlu0 %1824
      %v1827 = vunpack.c.l.b16 %v1353
      %v1828 = vpack.c.b16 %v1827, %v1827
      %v1830 = vshrl.u32 %v1793, 16
      %v1832 = vshll.u32 %v1793, 16
      %v1834 = vrot.slane %v1832, 1
      %v1835 = vor.u32 %v1830, %v1834
      %v1837 = vshll.u32 %v1828, 16
      %v1839 = vrot.slane %v1837, 1
      %v1840 = vsel %vm495, %v1835, %v1839
      %1841 = vrot.lane.b32.xlu0 %v1508, 16
      %v1842 = vpop.permute.xlu0 %1841
      %1843 = vrot.lane.b32.xlu0 %v1520, 16
      %v1844 = vpop.permute.xlu0 %1843
      %1845 = vrot.lane.b32.xlu0 %v1532, 16
      %v1846 = vpop.permute.xlu0 %1845
      %1847 = vrot.lane.b32.xlu0 %v1544, 16
      %v1848 = vpop.permute.xlu0 %1847
      %1849 = vrot.lane.b32.xlu0 %v1556, 16
      %v1850 = vpop.permute.xlu0 %1849
      %1851 = vrot.lane.b32.xlu0 %v1568, 16
      %v1852 = vpop.permute.xlu0 %1851
      %1853 = vrot.lane.b32.xlu0 %v1580, 16
      %v1854 = vpop.permute.xlu0 %1853
      %1855 = vrot.lane.b32.xlu0 %v1592, 16
      %v1856 = vpop.permute.xlu0 %1855
      %1857 = vrot.lane.b32.xlu0 %v1604, 16
      %v1858 = vpop.permute.xlu0 %1857
      %1859 = vrot.lane.b32.xlu0 %v1616, 16
      %v1860 = vpop.permute.xlu0 %1859
      %1861 = vrot.lane.b32.xlu0 %v1628, 16
      %v1862 = vpop.permute.xlu0 %1861
      %1863 = vrot.lane.b32.xlu0 %v1640, 16
      %v1864 = vpop.permute.xlu0 %1863
      %1865 = vrot.lane.b32.xlu0 %v1652, 16
      %v1866 = vpop.permute.xlu0 %1865
      %1867 = vrot.lane.b32.xlu0 %v1664, 16
      %v1868 = vpop.permute.xlu0 %1867
      %1869 = vrot.lane.b32.xlu0 %v1676, 16
      %v1870 = vpop.permute.xlu0 %1869
      %1871 = vrot.lane.b32.xlu0 %v1840, 16
      %v1872 = vpop.permute.xlu0 %1871
      %v1873 = vrot.slane %v1793, 1
      %v1874 = vrot.slane %v1828, 1
      %v1875 = vsel %vm720, %v1873, %v1874
      %1876 = vrot.lane.b32.xlu0 %v1714, 20
      %v1877 = vpop.permute.xlu0 %1876
      %1878 = vrot.lane.b32.xlu0 %v1717, 20
      %v1879 = vpop.permute.xlu0 %1878
      %1880 = vrot.lane.b32.xlu0 %v1720, 20
      %v1881 = vpop.permute.xlu0 %1880
      %1882 = vrot.lane.b32.xlu0 %v1723, 20
      %v1883 = vpop.permute.xlu0 %1882
      %1884 = vrot.lane.b32.xlu0 %v1726, 20
      %v1885 = vpop.permute.xlu0 %1884
      %1886 = vrot.lane.b32.xlu0 %v1729, 20
      %v1887 = vpop.permute.xlu0 %1886
      %1888 = vrot.lane.b32.xlu0 %v1732, 20
      %v1889 = vpop.permute.xlu0 %1888
      %1890 = vrot.lane.b32.xlu0 %v1735, 20
      %v1891 = vpop.permute.xlu0 %1890
      %1892 = vrot.lane.b32.xlu0 %v1738, 20
      %v1893 = vpop.permute.xlu0 %1892
      %1894 = vrot.lane.b32.xlu0 %v1741, 20
      %v1895 = vpop.permute.xlu0 %1894
      %1896 = vrot.lane.b32.xlu0 %v1744, 20
      %v1897 = vpop.permute.xlu0 %1896
      %1898 = vrot.lane.b32.xlu0 %v1747, 20
      %v1899 = vpop.permute.xlu0 %1898
      %1900 = vrot.lane.b32.xlu0 %v1750, 20
      %v1901 = vpop.permute.xlu0 %1900
      %1902 = vrot.lane.b32.xlu0 %v1753, 20
      %v1903 = vpop.permute.xlu0 %1902
      %1904 = vrot.lane.b32.xlu0 %v1756, 20
      %v1905 = vpop.permute.xlu0 %1904
      %1906 = vrot.lane.b32.xlu0 %v1875, 20
      %v1907 = vpop.permute.xlu0 %1906
      %v1910 = vunpack.c.l.b16 %v1354
      %v1911 = vunpack.c.l.b16 %v1355
      %v1912 = vpack.c.b16 %v1911, %v1910
      %1913 = vrot.lane.b32.xlu0 %v1423, 24
      %v1914 = vpop.permute.xlu0 %1913
      %1915 = vrot.lane.b32.xlu0 %v1424, 24
      %v1916 = vpop.permute.xlu0 %1915
      %1917 = vrot.lane.b32.xlu0 %v1425, 24
      %v1918 = vpop.permute.xlu0 %1917
      %1919 = vrot.lane.b32.xlu0 %v1426, 24
      %v1920 = vpop.permute.xlu0 %1919
      %1921 = vrot.lane.b32.xlu0 %v1427, 24
      %v1922 = vpop.permute.xlu0 %1921
      %1923 = vrot.lane.b32.xlu0 %v1428, 24
      %v1924 = vpop.permute.xlu0 %1923
      %1925 = vrot.lane.b32.xlu0 %v1429, 24
      %v1926 = vpop.permute.xlu0 %1925
      %1927 = vrot.lane.b32.xlu0 %v1430, 24
      %v1928 = vpop.permute.xlu0 %1927
      %1929 = vrot.lane.b32.xlu0 %v1431, 24
      %v1930 = vpop.permute.xlu0 %1929
      %1931 = vrot.lane.b32.xlu0 %v1432, 24
      %v1932 = vpop.permute.xlu0 %1931
      %1933 = vrot.lane.b32.xlu0 %v1433, 24
      %v1934 = vpop.permute.xlu0 %1933
      %1935 = vrot.lane.b32.xlu0 %v1434, 24
      %v1936 = vpop.permute.xlu0 %1935
      %1937 = vrot.lane.b32.xlu0 %v1435, 24
      %v1938 = vpop.permute.xlu0 %1937
      %1939 = vrot.lane.b32.xlu0 %v1436, 24
      %v1940 = vpop.permute.xlu0 %1939
      %1941 = vrot.lane.b32.xlu0 %v1793, 24
      %v1942 = vpop.permute.xlu0 %1941
      %1943 = vrot.lane.b32.xlu0 %v1912, 24
      %v1944 = vpop.permute.xlu0 %1943
      %v1946 = vunpack.c.l.b16 %v1356
      %v1947 = vpack.c.b16 %v1946, %v1946
      %v1949 = vshrl.u32 %v1912, 16
      %v1951 = vshll.u32 %v1912, 16
      %v1953 = vrot.slane %v1951, 1
      %v1954 = vor.u32 %v1949, %v1953
      %v1956 = vshll.u32 %v1947, 16
      %v1958 = vrot.slane %v1956, 1
      %v1959 = vsel %vm495, %v1954, %v1958
      %1960 = vrot.lane.b32.xlu0 %v1520, 28
      %v1961 = vpop.permute.xlu0 %1960
      %1962 = vrot.lane.b32.xlu0 %v1532, 28
      %v1963 = vpop.permute.xlu0 %1962
      %1964 = vrot.lane.b32.xlu0 %v1544, 28
      %v1965 = vpop.permute.xlu0 %1964
      %1966 = vrot.lane.b32.xlu0 %v1556, 28
      %v1967 = vpop.permute.xlu0 %1966
      %1968 = vrot.lane.b32.xlu0 %v1568, 28
      %v1969 = vpop.permute.xlu0 %1968
      %1970 = vrot.lane.b32.xlu0 %v1580, 28
      %v1971 = vpop.permute.xlu0 %1970
      %1972 = vrot.lane.b32.xlu0 %v1592, 28
      %v1973 = vpop.permute.xlu0 %1972
      %1974 = vrot.lane.b32.xlu0 %v1604, 28
      %v1975 = vpop.permute.xlu0 %1974
      %1976 = vrot.lane.b32.xlu0 %v1616, 28
      %v1977 = vpop.permute.xlu0 %1976
      %1978 = vrot.lane.b32.xlu0 %v1628, 28
      %v1979 = vpop.permute.xlu0 %1978
      %1980 = vrot.lane.b32.xlu0 %v1640, 28
      %v1981 = vpop.permute.xlu0 %1980
      %1982 = vrot.lane.b32.xlu0 %v1652, 28
      %v1983 = vpop.permute.xlu0 %1982
      %1984 = vrot.lane.b32.xlu0 %v1664, 28
      %v1985 = vpop.permute.xlu0 %1984
      %1986 = vrot.lane.b32.xlu0 %v1676, 28
      %v1987 = vpop.permute.xlu0 %1986
      %1988 = vrot.lane.b32.xlu0 %v1840, 28
      %v1989 = vpop.permute.xlu0 %1988
      %1990 = vrot.lane.b32.xlu0 %v1959, 28
      %v1991 = vpop.permute.xlu0 %1990
      %v1992 = vrot.slane %v1912, 1
      %v1993 = vrot.slane %v1947, 1
      %v1994 = vsel %vm720, %v1992, %v1993
      %1995 = vrot.lane.b32.xlu0 %v1717, 32
      %v1996 = vpop.permute.xlu0 %1995
      %1997 = vrot.lane.b32.xlu0 %v1720, 32
      %v1998 = vpop.permute.xlu0 %1997
      %1999 = vrot.lane.b32.xlu0 %v1723, 32
      %v2000 = vpop.permute.xlu0 %1999
      %2001 = vrot.lane.b32.xlu0 %v1726, 32
      %v2002 = vpop.permute.xlu0 %2001
      %2003 = vrot.lane.b32.xlu0 %v1729, 32
      %v2004 = vpop.permute.xlu0 %2003
      %2005 = vrot.lane.b32.xlu0 %v1732, 32
      %v2006 = vpop.permute.xlu0 %2005
      %2007 = vrot.lane.b32.xlu0 %v1735, 32
      %v2008 = vpop.permute.xlu0 %2007
      %2009 = vrot.lane.b32.xlu0 %v1738, 32
      %v2010 = vpop.permute.xlu0 %2009
      %2011 = vrot.lane.b32.xlu0 %v1741, 32
      %v2012 = vpop.permute.xlu0 %2011
      %2013 = vrot.lane.b32.xlu0 %v1744, 32
      %v2014 = vpop.permute.xlu0 %2013
      %2015 = vrot.lane.b32.xlu0 %v1747, 32
      %v2016 = vpop.permute.xlu0 %2015
      %2017 = vrot.lane.b32.xlu0 %v1750, 32
      %v2018 = vpop.permute.xlu0 %2017
      %2019 = vrot.lane.b32.xlu0 %v1753, 32
      %v2020 = vpop.permute.xlu0 %2019
      %2021 = vrot.lane.b32.xlu0 %v1756, 32
      %v2022 = vpop.permute.xlu0 %2021
      %2023 = vrot.lane.b32.xlu0 %v1875, 32
      %v2024 = vpop.permute.xlu0 %2023
      %2025 = vrot.lane.b32.xlu0 %v1994, 32
      %v2026 = vpop.permute.xlu0 %2025
      %v2028 = vsel %vm1039, %v1421, %v1678
      %v2030 = vsel %vm1039, %v1422, %v1680
      %v2032 = vsel %vm1039, %v1423, %v1682
      %v2034 = vsel %vm1039, %v1424, %v1684
      %v2036 = vsel %vm1039, %v1425, %v1686
      %v2038 = vsel %vm1039, %v1426, %v1688
      %v2040 = vsel %vm1039, %v1427, %v1690
      %v2042 = vsel %vm1039, %v1428, %v1692
      %v2044 = vsel %vm1039, %v1429, %v1694
      %v2046 = vsel %vm1039, %v1430, %v1696
      %v2048 = vsel %vm1039, %v1431, %v1698
      %v2050 = vsel %vm1039, %v1432, %v1700
      %v2052 = vsel %vm1039, %v1433, %v1702
      %v2054 = vsel %vm1039, %v1434, %v1704
      %v2056 = vsel %vm1039, %v1435, %v1706
      %v2058 = vsel %vm1039, %v1436, %v1708
      %v2060 = vsel %vm1072, %v2028, %v1758
      %v2062 = vsel %vm1072, %v2030, %v1760
      %v2064 = vsel %vm1072, %v2032, %v1762
      %v2066 = vsel %vm1072, %v2034, %v1764
      %v2068 = vsel %vm1072, %v2036, %v1766
      %v2070 = vsel %vm1072, %v2038, %v1768
      %v2072 = vsel %vm1072, %v2040, %v1770
      %v2074 = vsel %vm1072, %v2042, %v1772
      %v2076 = vsel %vm1072, %v2044, %v1774
      %v2078 = vsel %vm1072, %v2046, %v1776
      %v2080 = vsel %vm1072, %v2048, %v1778
      %v2082 = vsel %vm1072, %v2050, %v1780
      %v2084 = vsel %vm1072, %v2052, %v1782
      %v2086 = vsel %vm1072, %v2054, %v1784
      %v2088 = vsel %vm1072, %v2056, %v1786
      %v2090 = vsel %vm1072, %v2058, %v1788
      %v2092 = vsel %vm1105, %v2060, %v1795
      %v2094 = vsel %vm1105, %v2062, %v1797
      %v2096 = vsel %vm1105, %v2064, %v1799
      %v2098 = vsel %vm1105, %v2066, %v1801
      %v2100 = vsel %vm1105, %v2068, %v1803
      %v2102 = vsel %vm1105, %v2070, %v1805
      %v2104 = vsel %vm1105, %v2072, %v1807
      %v2106 = vsel %vm1105, %v2074, %v1809
      %v2108 = vsel %vm1105, %v2076, %v1811
      %v2110 = vsel %vm1105, %v2078, %v1813
      %v2112 = vsel %vm1105, %v2080, %v1815
      %v2114 = vsel %vm1105, %v2082, %v1817
      %v2116 = vsel %vm1105, %v2084, %v1819
      %v2118 = vsel %vm1105, %v2086, %v1821
      %v2120 = vsel %vm1105, %v2088, %v1823
      %v2122 = vsel %vm1105, %v2090, %v1825
      %v2124 = vsel %vm1138, %v2092, %v1842
      %v2126 = vsel %vm1138, %v2094, %v1844
      %v2128 = vsel %vm1138, %v2096, %v1846
      %v2130 = vsel %vm1138, %v2098, %v1848
      %v2132 = vsel %vm1138, %v2100, %v1850
      %v2134 = vsel %vm1138, %v2102, %v1852
      %v2136 = vsel %vm1138, %v2104, %v1854
      %v2138 = vsel %vm1138, %v2106, %v1856
      %v2140 = vsel %vm1138, %v2108, %v1858
      %v2142 = vsel %vm1138, %v2110, %v1860
      %v2144 = vsel %vm1138, %v2112, %v1862
      %v2146 = vsel %vm1138, %v2114, %v1864
      %v2148 = vsel %vm1138, %v2116, %v1866
      %v2150 = vsel %vm1138, %v2118, %v1868
      %v2152 = vsel %vm1138, %v2120, %v1870
      %v2154 = vsel %vm1138, %v2122, %v1872
      %v2156 = vsel %vm1171, %v2124, %v1877
      %v2158 = vsel %vm1171, %v2126, %v1879
      %v2160 = vsel %vm1171, %v2128, %v1881
      %v2162 = vsel %vm1171, %v2130, %v1883
      %v2164 = vsel %vm1171, %v2132, %v1885
      %v2166 = vsel %vm1171, %v2134, %v1887
      %v2168 = vsel %vm1171, %v2136, %v1889
      %v2170 = vsel %vm1171, %v2138, %v1891
      %v2172 = vsel %vm1171, %v2140, %v1893
      %v2174 = vsel %vm1171, %v2142, %v1895
      %v2176 = vsel %vm1171, %v2144, %v1897
      %v2178 = vsel %vm1171, %v2146, %v1899
      %v2180 = vsel %vm1171, %v2148, %v1901
      %v2182 = vsel %vm1171, %v2150, %v1903
      %v2184 = vsel %vm1171, %v2152, %v1905
      %v2186 = vsel %vm1171, %v2154, %v1907
      %v2188 = vsel %vm1204, %v2156, %v1914
      %v2190 = vsel %vm1204, %v2158, %v1916
      %v2192 = vsel %vm1204, %v2160, %v1918
      %v2194 = vsel %vm1204, %v2162, %v1920
      %v2196 = vsel %vm1204, %v2164, %v1922
      %v2198 = vsel %vm1204, %v2166, %v1924
      %v2200 = vsel %vm1204, %v2168, %v1926
      %v2202 = vsel %vm1204, %v2170, %v1928
      %v2204 = vsel %vm1204, %v2172, %v1930
      %v2206 = vsel %vm1204, %v2174, %v1932
      %v2208 = vsel %vm1204, %v2176, %v1934
      %v2210 = vsel %vm1204, %v2178, %v1936
      %v2212 = vsel %vm1204, %v2180, %v1938
      %v2214 = vsel %vm1204, %v2182, %v1940
      %v2216 = vsel %vm1204, %v2184, %v1942
      %v2218 = vsel %vm1204, %v2186, %v1944
      %v2220 = vsel %vm1237, %v2188, %v1961
      %v2222 = vsel %vm1237, %v2190, %v1963
      %v2224 = vsel %vm1237, %v2192, %v1965
      %v2226 = vsel %vm1237, %v2194, %v1967
      %v2228 = vsel %vm1237, %v2196, %v1969
      %v2230 = vsel %vm1237, %v2198, %v1971
      %v2232 = vsel %vm1237, %v2200, %v1973
      %v2234 = vsel %vm1237, %v2202, %v1975
      %v2236 = vsel %vm1237, %v2204, %v1977
      %v2238 = vsel %vm1237, %v2206, %v1979
      %v2240 = vsel %vm1237, %v2208, %v1981
      %v2242 = vsel %vm1237, %v2210, %v1983
      %v2244 = vsel %vm1237, %v2212, %v1985
      %v2246 = vsel %vm1237, %v2214, %v1987
      %v2248 = vsel %vm1237, %v2216, %v1989
      %v2250 = vsel %vm1237, %v2218, %v1991
      %v2252 = vsel %vm1270, %v2220, %v1996
      %v2254 = vsel %vm1270, %v2222, %v1998
      %v2256 = vsel %vm1270, %v2224, %v2000
      %v2258 = vsel %vm1270, %v2226, %v2002
      %v2260 = vsel %vm1270, %v2228, %v2004
      %v2262 = vsel %vm1270, %v2230, %v2006
      %v2264 = vsel %vm1270, %v2232, %v2008
      %v2266 = vsel %vm1270, %v2234, %v2010
      %v2268 = vsel %vm1270, %v2236, %v2012
      %v2270 = vsel %vm1270, %v2238, %v2014
      %v2272 = vsel %vm1270, %v2240, %v2016
      %v2274 = vsel %vm1270, %v2242, %v2018
      %v2276 = vsel %vm1270, %v2244, %v2020
      %v2278 = vsel %vm1270, %v2246, %v2022
      %v2280 = vsel %vm1270, %v2248, %v2024
      %v2282 = vsel %vm1270, %v2250, %v2026
      %v2283 = vld [vmem:[%s301] sm:$0xf]
      %v2284 = vld [vmem:[%s301 + $0x4] sm:$0xf]
      %v2285 = vld [vmem:[%s301 + $0x8] sm:$0x1]
      %v2286 = vld [vmem:[%s301 + $0xc] sm:$0xf]
      %v2287 = vld [vmem:[%s301 + $0x10] sm:$0xf]
      %v2288 = vld [vmem:[%s301 + $0x14] sm:$0x1]
      %v2289 = vld [vmem:[%s301 + $0x18] sm:$0xf]
      %v2290 = vld [vmem:[%s301 + $0x1c] sm:$0xf]
      %v2291 = vld [vmem:[%s301 + $0x20] sm:$0x1]
      %v2292 = vld [vmem:[%s301 + $0x24] sm:$0xf]
      %v2293 = vld [vmem:[%s301 + $0x28] sm:$0xf]
      %v2294 = vld [vmem:[%s301 + $0x2c] sm:$0x1]
      %v2295 = vld [vmem:[%s301 + $0x30] sm:$0xf]
      %v2296 = vld [vmem:[%s301 + $0x34] sm:$0xf]
      %v2297 = vld [vmem:[%s301 + $0x38] sm:$0x1]
      %v2298 = vld [vmem:[%s301 + $0x3c] sm:$0xf]
      %v2299 = vld [vmem:[%s301 + $0x40] sm:$0xf]
      %v2300 = vld [vmem:[%s301 + $0x44] sm:$0x1]
      %v2301 = vld [vmem:[%s301 + $0x48] sm:$0xf]
      %v2302 = vld [vmem:[%s301 + $0x4c] sm:$0xf]
      %v2303 = vld [vmem:[%s301 + $0x50] sm:$0x1]
      %v2304 = vld [vmem:[%s301 + $0x54] sm:$0xf]
      %v2305 = vld [vmem:[%s301 + $0x58] sm:$0xf]
      %v2306 = vld [vmem:[%s301 + $0x5c] sm:$0x1]
      %v2307 = vld [vmem:[%s301 + $0x60] sm:$0xf]
      %v2308 = vld [vmem:[%s301 + $0x64] sm:$0xf]
      %v2309 = vld [vmem:[%s301 + $0x68] sm:$0x1]
      %v2310 = vld [vmem:[%s301 + $0x6c] sm:$0xf]
      %v2311 = vld [vmem:[%s301 + $0x70] sm:$0xf]
      %v2312 = vld [vmem:[%s301 + $0x74] sm:$0x1]
      %v2313 = vld [vmem:[%s301 + $0x78] sm:$0xf]
      %v2314 = vld [vmem:[%s301 + $0x7c] sm:$0xf]
      %v2315 = vld [vmem:[%s301 + $0x80] sm:$0x1]
      %v2316 = vld [vmem:[%s301 + $0x84] sm:$0xf]
      %v2317 = vld [vmem:[%s301 + $0x88] sm:$0xf]
      %v2318 = vld [vmem:[%s301 + $0x8c] sm:$0x1]
      %v2319 = vld [vmem:[%s301 + $0x90] sm:$0xf]
      %v2320 = vld [vmem:[%s301 + $0x94] sm:$0xf]
      %v2321 = vld [vmem:[%s301 + $0x98] sm:$0x1]
      %v2322 = vld [vmem:[%s301 + $0x9c] sm:$0xf]
      %v2323 = vld [vmem:[%s301 + $0xa0] sm:$0xf]
      %v2324 = vld [vmem:[%s301 + $0xa4] sm:$0x1]
      %v2325 = vld [vmem:[%s301 + $0xa8] sm:$0xf]
      %v2326 = vld [vmem:[%s301 + $0xac] sm:$0xf]
      %v2327 = vld [vmem:[%s301 + $0xb0] sm:$0x1]
      %v2328 = vld [vmem:[%s301 + $0xb4] sm:$0xf]
      %v2329 = vld [vmem:[%s301 + $0xb8] sm:$0xf]
      %v2330 = vld [vmem:[%s301 + $0xbc] sm:$0x1]
      %v2331 = vld [vmem:[%s301 + $0xc0] sm:$0xf]
      %v2332 = vld [vmem:[%s301 + $0xc4] sm:$0xf]
      %v2333 = vld [vmem:[%s301 + $0xc8] sm:$0x1]
      %v2334 = vld [vmem:[%s301 + $0xcc] sm:$0xf]
      %v2335 = vld [vmem:[%s301 + $0xd0] sm:$0xf]
      %v2336 = vld [vmem:[%s301 + $0xd4] sm:$0x1]
      %v2369 = vunpack.c.l.b16 %v2283
      %v2370 = vunpack.c.l.b16 %v2284
      %v2371 = vunpack.c.l.b16 %v2286
      %v2372 = vunpack.c.l.b16 %v2287
      %v2373 = vunpack.c.l.b16 %v2289
      %v2374 = vunpack.c.l.b16 %v2290
      %v2375 = vunpack.c.l.b16 %v2292
      %v2376 = vunpack.c.l.b16 %v2293
      %v2377 = vunpack.c.l.b16 %v2295
      %v2378 = vunpack.c.l.b16 %v2296
      %v2379 = vunpack.c.l.b16 %v2298
      %v2380 = vunpack.c.l.b16 %v2299
      %v2381 = vunpack.c.l.b16 %v2301
      %v2382 = vunpack.c.l.b16 %v2302
      %v2383 = vunpack.c.l.b16 %v2304
      %v2384 = vunpack.c.l.b16 %v2305
      %v2385 = vunpack.c.l.b16 %v2307
      %v2386 = vunpack.c.l.b16 %v2308
      %v2387 = vunpack.c.l.b16 %v2310
      %v2388 = vunpack.c.l.b16 %v2311
      %v2389 = vunpack.c.l.b16 %v2313
      %v2390 = vunpack.c.l.b16 %v2314
      %v2391 = vunpack.c.l.b16 %v2316
      %v2392 = vunpack.c.l.b16 %v2317
      %v2393 = vunpack.c.l.b16 %v2319
      %v2394 = vunpack.c.l.b16 %v2320
      %v2395 = vunpack.c.l.b16 %v2322
      %v2396 = vunpack.c.l.b16 %v2323
      %v2397 = vunpack.c.l.b16 %v2325
      %v2398 = vunpack.c.l.b16 %v2326
      %v2399 = vunpack.c.l.b16 %v2328
      %v2400 = vunpack.c.l.b16 %v2329
      %v2401 = vpack.c.b16 %v2370, %v2369
      %v2402 = vpack.c.b16 %v2372, %v2371
      %v2403 = vpack.c.b16 %v2374, %v2373
      %v2404 = vpack.c.b16 %v2376, %v2375
      %v2405 = vpack.c.b16 %v2378, %v2377
      %v2406 = vpack.c.b16 %v2380, %v2379
      %v2407 = vpack.c.b16 %v2382, %v2381
      %v2408 = vpack.c.b16 %v2384, %v2383
      %v2409 = vpack.c.b16 %v2386, %v2385
      %v2410 = vpack.c.b16 %v2388, %v2387
      %v2411 = vpack.c.b16 %v2390, %v2389
      %v2412 = vpack.c.b16 %v2392, %v2391
      %v2413 = vpack.c.b16 %v2394, %v2393
      %v2414 = vpack.c.b16 %v2396, %v2395
      %v2415 = vpack.c.b16 %v2398, %v2397
      %v2416 = vpack.c.b16 %v2400, %v2399
      %v2433 = vunpack.c.l.b16 %v2285
      %v2434 = vunpack.c.l.b16 %v2288
      %v2435 = vunpack.c.l.b16 %v2291
      %v2436 = vunpack.c.l.b16 %v2294
      %v2437 = vunpack.c.l.b16 %v2297
      %v2438 = vunpack.c.l.b16 %v2300
      %v2439 = vunpack.c.l.b16 %v2303
      %v2440 = vunpack.c.l.b16 %v2306
      %v2441 = vunpack.c.l.b16 %v2309
      %v2442 = vunpack.c.l.b16 %v2312
      %v2443 = vunpack.c.l.b16 %v2315
      %v2444 = vunpack.c.l.b16 %v2318
      %v2445 = vunpack.c.l.b16 %v2321
      %v2446 = vunpack.c.l.b16 %v2324
      %v2447 = vunpack.c.l.b16 %v2327
      %v2448 = vunpack.c.l.b16 %v2330
      %v2449 = vpack.c.b16 %v2433, %v2433
      %v2450 = vpack.c.b16 %v2434, %v2434
      %v2451 = vpack.c.b16 %v2435, %v2435
      %v2452 = vpack.c.b16 %v2436, %v2436
      %v2453 = vpack.c.b16 %v2437, %v2437
      %v2454 = vpack.c.b16 %v2438, %v2438
      %v2455 = vpack.c.b16 %v2439, %v2439
      %v2456 = vpack.c.b16 %v2440, %v2440
      %v2457 = vpack.c.b16 %v2441, %v2441
      %v2458 = vpack.c.b16 %v2442, %v2442
      %v2459 = vpack.c.b16 %v2443, %v2443
      %v2460 = vpack.c.b16 %v2444, %v2444
      %v2461 = vpack.c.b16 %v2445, %v2445
      %v2462 = vpack.c.b16 %v2446, %v2446
      %v2463 = vpack.c.b16 %v2447, %v2447
      %v2464 = vpack.c.b16 %v2448, %v2448
      %v2466 = vshrl.u32 %v2401, 16
      %v2468 = vshll.u32 %v2401, 16
      %v2470 = vrot.slane %v2468, 1
      %v2471 = vor.u32 %v2466, %v2470
      %v2473 = vshll.u32 %v2449, 16
      %v2475 = vrot.slane %v2473, 1
      %v2476 = vsel %vm495, %v2471, %v2475
      %v2478 = vshrl.u32 %v2402, 16
      %v2480 = vshll.u32 %v2402, 16
      %v2482 = vrot.slane %v2480, 1
      %v2483 = vor.u32 %v2478, %v2482
      %v2485 = vshll.u32 %v2450, 16
      %v2487 = vrot.slane %v2485, 1
      %v2488 = vsel %vm495, %v2483, %v2487
      %v2490 = vshrl.u32 %v2403, 16
      %v2492 = vshll.u32 %v2403, 16
      %v2494 = vrot.slane %v2492, 1
      %v2495 = vor.u32 %v2490, %v2494
      %v2497 = vshll.u32 %v2451, 16
      %v2499 = vrot.slane %v2497, 1
      %v2500 = vsel %vm495, %v2495, %v2499
      %v2502 = vshrl.u32 %v2404, 16
      %v2504 = vshll.u32 %v2404, 16
      %v2506 = vrot.slane %v2504, 1
      %v2507 = vor.u32 %v2502, %v2506
      %v2509 = vshll.u32 %v2452, 16
      %v2511 = vrot.slane %v2509, 1
      %v2512 = vsel %vm495, %v2507, %v2511
      %v2514 = vshrl.u32 %v2405, 16
      %v2516 = vshll.u32 %v2405, 16
      %v2518 = vrot.slane %v2516, 1
      %v2519 = vor.u32 %v2514, %v2518
      %v2521 = vshll.u32 %v2453, 16
      %v2523 = vrot.slane %v2521, 1
      %v2524 = vsel %vm495, %v2519, %v2523
      %v2526 = vshrl.u32 %v2406, 16
      %v2528 = vshll.u32 %v2406, 16
      %v2530 = vrot.slane %v2528, 1
      %v2531 = vor.u32 %v2526, %v2530
      %v2533 = vshll.u32 %v2454, 16
      %v2535 = vrot.slane %v2533, 1
      %v2536 = vsel %vm495, %v2531, %v2535
      %v2538 = vshrl.u32 %v2407, 16
      %v2540 = vshll.u32 %v2407, 16
      %v2542 = vrot.slane %v2540, 1
      %v2543 = vor.u32 %v2538, %v2542
      %v2545 = vshll.u32 %v2455, 16
      %v2547 = vrot.slane %v2545, 1
      %v2548 = vsel %vm495, %v2543, %v2547
      %v2550 = vshrl.u32 %v2408, 16
      %v2552 = vshll.u32 %v2408, 16
      %v2554 = vrot.slane %v2552, 1
      %v2555 = vor.u32 %v2550, %v2554
      %v2557 = vshll.u32 %v2456, 16
      %v2559 = vrot.slane %v2557, 1
      %v2560 = vsel %vm495, %v2555, %v2559
      %v2562 = vshrl.u32 %v2409, 16
      %v2564 = vshll.u32 %v2409, 16
      %v2566 = vrot.slane %v2564, 1
      %v2567 = vor.u32 %v2562, %v2566
      %v2569 = vshll.u32 %v2457, 16
      %v2571 = vrot.slane %v2569, 1
      %v2572 = vsel %vm495, %v2567, %v2571
      %v2574 = vshrl.u32 %v2410, 16
      %v2576 = vshll.u32 %v2410, 16
      %v2578 = vrot.slane %v2576, 1
      %v2579 = vor.u32 %v2574, %v2578
      %v2581 = vshll.u32 %v2458, 16
      %v2583 = vrot.slane %v2581, 1
      %v2584 = vsel %vm495, %v2579, %v2583
      %v2586 = vshrl.u32 %v2411, 16
      %v2588 = vshll.u32 %v2411, 16
      %v2590 = vrot.slane %v2588, 1
      %v2591 = vor.u32 %v2586, %v2590
      %v2593 = vshll.u32 %v2459, 16
      %v2595 = vrot.slane %v2593, 1
      %v2596 = vsel %vm495, %v2591, %v2595
      %v2598 = vshrl.u32 %v2412, 16
      %v2600 = vshll.u32 %v2412, 16
      %v2602 = vrot.slane %v2600, 1
      %v2603 = vor.u32 %v2598, %v2602
      %v2605 = vshll.u32 %v2460, 16
      %v2607 = vrot.slane %v2605, 1
      %v2608 = vsel %vm495, %v2603, %v2607
      %v2610 = vshrl.u32 %v2413, 16
      %v2612 = vshll.u32 %v2413, 16
      %v2614 = vrot.slane %v2612, 1
      %v2615 = vor.u32 %v2610, %v2614
      %v2617 = vshll.u32 %v2461, 16
      %v2619 = vrot.slane %v2617, 1
      %v2620 = vsel %vm495, %v2615, %v2619
      %v2622 = vshrl.u32 %v2414, 16
      %v2624 = vshll.u32 %v2414, 16
      %v2626 = vrot.slane %v2624, 1
      %v2627 = vor.u32 %v2622, %v2626
      %v2629 = vshll.u32 %v2462, 16
      %v2631 = vrot.slane %v2629, 1
      %v2632 = vsel %vm495, %v2627, %v2631
      %v2634 = vshrl.u32 %v2415, 16
      %v2636 = vshll.u32 %v2415, 16
      %v2638 = vrot.slane %v2636, 1
      %v2639 = vor.u32 %v2634, %v2638
      %v2641 = vshll.u32 %v2463, 16
      %v2643 = vrot.slane %v2641, 1
      %v2644 = vsel %vm495, %v2639, %v2643
      %v2646 = vshrl.u32 %v2416, 16
      %v2648 = vshll.u32 %v2416, 16
      %v2650 = vrot.slane %v2648, 1
      %v2651 = vor.u32 %v2646, %v2650
      %v2653 = vshll.u32 %v2464, 16
      %v2655 = vrot.slane %v2653, 1
      %v2656 = vsel %vm495, %v2651, %v2655
      %2657 = vrot.lane.b32.xlu0 %v2476, 4
      %v2658 = vpop.permute.xlu0 %2657
      %2659 = vrot.lane.b32.xlu0 %v2488, 4
      %v2660 = vpop.permute.xlu0 %2659
      %2661 = vrot.lane.b32.xlu0 %v2500, 4
      %v2662 = vpop.permute.xlu0 %2661
      %2663 = vrot.lane.b32.xlu0 %v2512, 4
      %v2664 = vpop.permute.xlu0 %2663
      %2665 = vrot.lane.b32.xlu0 %v2524, 4
      %v2666 = vpop.permute.xlu0 %2665
      %2667 = vrot.lane.b32.xlu0 %v2536, 4
      %v2668 = vpop.permute.xlu0 %2667
      %2669 = vrot.lane.b32.xlu0 %v2548, 4
      %v2670 = vpop.permute.xlu0 %2669
      %2671 = vrot.lane.b32.xlu0 %v2560, 4
      %v2672 = vpop.permute.xlu0 %2671
      %2673 = vrot.lane.b32.xlu0 %v2572, 4
      %v2674 = vpop.permute.xlu0 %2673
      %2675 = vrot.lane.b32.xlu0 %v2584, 4
      %v2676 = vpop.permute.xlu0 %2675
      %2677 = vrot.lane.b32.xlu0 %v2596, 4
      %v2678 = vpop.permute.xlu0 %2677
      %2679 = vrot.lane.b32.xlu0 %v2608, 4
      %v2680 = vpop.permute.xlu0 %2679
      %2681 = vrot.lane.b32.xlu0 %v2620, 4
      %v2682 = vpop.permute.xlu0 %2681
      %2683 = vrot.lane.b32.xlu0 %v2632, 4
      %v2684 = vpop.permute.xlu0 %2683
      %2685 = vrot.lane.b32.xlu0 %v2644, 4
      %v2686 = vpop.permute.xlu0 %2685
      %2687 = vrot.lane.b32.xlu0 %v2656, 4
      %v2688 = vpop.permute.xlu0 %2687
      %v2689 = vrot.slane %v2401, 1
      %v2690 = vrot.slane %v2449, 1
      %v2691 = vsel %vm720, %v2689, %v2690
      %v2692 = vrot.slane %v2402, 1
      %v2693 = vrot.slane %v2450, 1
      %v2694 = vsel %vm720, %v2692, %v2693
      %v2695 = vrot.slane %v2403, 1
      %v2696 = vrot.slane %v2451, 1
      %v2697 = vsel %vm720, %v2695, %v2696
      %v2698 = vrot.slane %v2404, 1
      %v2699 = vrot.slane %v2452, 1
      %v2700 = vsel %vm720, %v2698, %v2699
      %v2701 = vrot.slane %v2405, 1
      %v2702 = vrot.slane %v2453, 1
      %v2703 = vsel %vm720, %v2701, %v2702
      %v2704 = vrot.slane %v2406, 1
      %v2705 = vrot.slane %v2454, 1
      %v2706 = vsel %vm720, %v2704, %v2705
      %v2707 = vrot.slane %v2407, 1
      %v2708 = vrot.slane %v2455, 1
      %v2709 = vsel %vm720, %v2707, %v2708
      %v2710 = vrot.slane %v2408, 1
      %v2711 = vrot.slane %v2456, 1
      %v2712 = vsel %vm720, %v2710, %v2711
      %v2713 = vrot.slane %v2409, 1
      %v2714 = vrot.slane %v2457, 1
      %v2715 = vsel %vm720, %v2713, %v2714
      %v2716 = vrot.slane %v2410, 1
      %v2717 = vrot.slane %v2458, 1
      %v2718 = vsel %vm720, %v2716, %v2717
      %v2719 = vrot.slane %v2411, 1
      %v2720 = vrot.slane %v2459, 1
      %v2721 = vsel %vm720, %v2719, %v2720
      %v2722 = vrot.slane %v2412, 1
      %v2723 = vrot.slane %v2460, 1
      %v2724 = vsel %vm720, %v2722, %v2723
      %v2725 = vrot.slane %v2413, 1
      %v2726 = vrot.slane %v2461, 1
      %v2727 = vsel %vm720, %v2725, %v2726
      %v2728 = vrot.slane %v2414, 1
      %v2729 = vrot.slane %v2462, 1
      %v2730 = vsel %vm720, %v2728, %v2729
      %v2731 = vrot.slane %v2415, 1
      %v2732 = vrot.slane %v2463, 1
      %v2733 = vsel %vm720, %v2731, %v2732
      %v2734 = vrot.slane %v2416, 1
      %v2735 = vrot.slane %v2464, 1
      %v2736 = vsel %vm720, %v2734, %v2735
      %2737 = vrot.lane.b32.xlu0 %v2691, 8
      %v2738 = vpop.permute.xlu0 %2737
      %2739 = vrot.lane.b32.xlu0 %v2694, 8
      %v2740 = vpop.permute.xlu0 %2739
      %2741 = vrot.lane.b32.xlu0 %v2697, 8
      %v2742 = vpop.permute.xlu0 %2741
      %2743 = vrot.lane.b32.xlu0 %v2700, 8
      %v2744 = vpop.permute.xlu0 %2743
      %2745 = vrot.lane.b32.xlu0 %v2703, 8
      %v2746 = vpop.permute.xlu0 %2745
      %2747 = vrot.lane.b32.xlu0 %v2706, 8
      %v2748 = vpop.permute.xlu0 %2747
      %2749 = vrot.lane.b32.xlu0 %v2709, 8
      %v2750 = vpop.permute.xlu0 %2749
      %2751 = vrot.lane.b32.xlu0 %v2712, 8
      %v2752 = vpop.permute.xlu0 %2751
      %2753 = vrot.lane.b32.xlu0 %v2715, 8
      %v2754 = vpop.permute.xlu0 %2753
      %2755 = vrot.lane.b32.xlu0 %v2718, 8
      %v2756 = vpop.permute.xlu0 %2755
      %2757 = vrot.lane.b32.xlu0 %v2721, 8
      %v2758 = vpop.permute.xlu0 %2757
      %2759 = vrot.lane.b32.xlu0 %v2724, 8
      %v2760 = vpop.permute.xlu0 %2759
      %2761 = vrot.lane.b32.xlu0 %v2727, 8
      %v2762 = vpop.permute.xlu0 %2761
      %2763 = vrot.lane.b32.xlu0 %v2730, 8
      %v2764 = vpop.permute.xlu0 %2763
      %2765 = vrot.lane.b32.xlu0 %v2733, 8
      %v2766 = vpop.permute.xlu0 %2765
      %2767 = vrot.lane.b32.xlu0 %v2736, 8
      %v2768 = vpop.permute.xlu0 %2767
      %v2771 = vunpack.c.l.b16 %v2331
      %v2772 = vunpack.c.l.b16 %v2332
      %v2773 = vpack.c.b16 %v2772, %v2771
      %2774 = vrot.lane.b32.xlu0 %v2402, 12
      %v2775 = vpop.permute.xlu0 %2774
      %2776 = vrot.lane.b32.xlu0 %v2403, 12
      %v2777 = vpop.permute.xlu0 %2776
      %2778 = vrot.lane.b32.xlu0 %v2404, 12
      %v2779 = vpop.permute.xlu0 %2778
      %2780 = vrot.lane.b32.xlu0 %v2405, 12
      %v2781 = vpop.permute.xlu0 %2780
      %2782 = vrot.lane.b32.xlu0 %v2406, 12
      %v2783 = vpop.permute.xlu0 %2782
      %2784 = vrot.lane.b32.xlu0 %v2407, 12
      %v2785 = vpop.permute.xlu0 %2784
      %2786 = vrot.lane.b32.xlu0 %v2408, 12
      %v2787 = vpop.permute.xlu0 %2786
      %2788 = vrot.lane.b32.xlu0 %v2409, 12
      %v2789 = vpop.permute.xlu0 %2788
      %2790 = vrot.lane.b32.xlu0 %v2410, 12
      %v2791 = vpop.permute.xlu0 %2790
      %2792 = vrot.lane.b32.xlu0 %v2411, 12
      %v2793 = vpop.permute.xlu0 %2792
      %2794 = vrot.lane.b32.xlu0 %v2412, 12
      %v2795 = vpop.permute.xlu0 %2794
      %2796 = vrot.lane.b32.xlu0 %v2413, 12
      %v2797 = vpop.permute.xlu0 %2796
      %2798 = vrot.lane.b32.xlu0 %v2414, 12
      %v2799 = vpop.permute.xlu0 %2798
      %2800 = vrot.lane.b32.xlu0 %v2415, 12
      %v2801 = vpop.permute.xlu0 %2800
      %2802 = vrot.lane.b32.xlu0 %v2416, 12
      %v2803 = vpop.permute.xlu0 %2802
      %2804 = vrot.lane.b32.xlu0 %v2773, 12
      %v2805 = vpop.permute.xlu0 %2804
      %v2807 = vunpack.c.l.b16 %v2333
      %v2808 = vpack.c.b16 %v2807, %v2807
      %v2810 = vshrl.u32 %v2773, 16
      %v2812 = vshll.u32 %v2773, 16
      %v2814 = vrot.slane %v2812, 1
      %v2815 = vor.u32 %v2810, %v2814
      %v2817 = vshll.u32 %v2808, 16
      %v2819 = vrot.slane %v2817, 1
      %v2820 = vsel %vm495, %v2815, %v2819
      %2821 = vrot.lane.b32.xlu0 %v2488, 16
      %v2822 = vpop.permute.xlu0 %2821
      %2823 = vrot.lane.b32.xlu0 %v2500, 16
      %v2824 = vpop.permute.xlu0 %2823
      %2825 = vrot.lane.b32.xlu0 %v2512, 16
      %v2826 = vpop.permute.xlu0 %2825
      %2827 = vrot.lane.b32.xlu0 %v2524, 16
      %v2828 = vpop.permute.xlu0 %2827
      %2829 = vrot.lane.b32.xlu0 %v2536, 16
      %v2830 = vpop.permute.xlu0 %2829
      %2831 = vrot.lane.b32.xlu0 %v2548, 16
      %v2832 = vpop.permute.xlu0 %2831
      %2833 = vrot.lane.b32.xlu0 %v2560, 16
      %v2834 = vpop.permute.xlu0 %2833
      %2835 = vrot.lane.b32.xlu0 %v2572, 16
      %v2836 = vpop.permute.xlu0 %2835
      %2837 = vrot.lane.b32.xlu0 %v2584, 16
      %v2838 = vpop.permute.xlu0 %2837
      %2839 = vrot.lane.b32.xlu0 %v2596, 16
      %v2840 = vpop.permute.xlu0 %2839
      %2841 = vrot.lane.b32.xlu0 %v2608, 16
      %v2842 = vpop.permute.xlu0 %2841
      %2843 = vrot.lane.b32.xlu0 %v2620, 16
      %v2844 = vpop.permute.xlu0 %2843
      %2845 = vrot.lane.b32.xlu0 %v2632, 16
      %v2846 = vpop.permute.xlu0 %2845
      %2847 = vrot.lane.b32.xlu0 %v2644, 16
      %v2848 = vpop.permute.xlu0 %2847
      %2849 = vrot.lane.b32.xlu0 %v2656, 16
      %v2850 = vpop.permute.xlu0 %2849
      %2851 = vrot.lane.b32.xlu0 %v2820, 16
      %v2852 = vpop.permute.xlu0 %2851
      %v2853 = vrot.slane %v2773, 1
      %v2854 = vrot.slane %v2808, 1
      %v2855 = vsel %vm720, %v2853, %v2854
      %2856 = vrot.lane.b32.xlu0 %v2694, 20
      %v2857 = vpop.permute.xlu0 %2856
      %2858 = vrot.lane.b32.xlu0 %v2697, 20
      %v2859 = vpop.permute.xlu0 %2858
      %2860 = vrot.lane.b32.xlu0 %v2700, 20
      %v2861 = vpop.permute.xlu0 %2860
      %2862 = vrot.lane.b32.xlu0 %v2703, 20
      %v2863 = vpop.permute.xlu0 %2862
      %2864 = vrot.lane.b32.xlu0 %v2706, 20
      %v2865 = vpop.permute.xlu0 %2864
      %2866 = vrot.lane.b32.xlu0 %v2709, 20
      %v2867 = vpop.permute.xlu0 %2866
      %2868 = vrot.lane.b32.xlu0 %v2712, 20
      %v2869 = vpop.permute.xlu0 %2868
      %2870 = vrot.lane.b32.xlu0 %v2715, 20
      %v2871 = vpop.permute.xlu0 %2870
      %2872 = vrot.lane.b32.xlu0 %v2718, 20
      %v2873 = vpop.permute.xlu0 %2872
      %2874 = vrot.lane.b32.xlu0 %v2721, 20
      %v2875 = vpop.permute.xlu0 %2874
      %2876 = vrot.lane.b32.xlu0 %v2724, 20
      %v2877 = vpop.permute.xlu0 %2876
      %2878 = vrot.lane.b32.xlu0 %v2727, 20
      %v2879 = vpop.permute.xlu0 %2878
      %2880 = vrot.lane.b32.xlu0 %v2730, 20
      %v2881 = vpop.permute.xlu0 %2880
      %2882 = vrot.lane.b32.xlu0 %v2733, 20
      %v2883 = vpop.permute.xlu0 %2882
      %2884 = vrot.lane.b32.xlu0 %v2736, 20
      %v2885 = vpop.permute.xlu0 %2884
      %2886 = vrot.lane.b32.xlu0 %v2855, 20
      %v2887 = vpop.permute.xlu0 %2886
      %v2890 = vunpack.c.l.b16 %v2334
      %v2891 = vunpack.c.l.b16 %v2335
      %v2892 = vpack.c.b16 %v2891, %v2890
      %2893 = vrot.lane.b32.xlu0 %v2403, 24
      %v2894 = vpop.permute.xlu0 %2893
      %2895 = vrot.lane.b32.xlu0 %v2404, 24
      %v2896 = vpop.permute.xlu0 %2895
      %2897 = vrot.lane.b32.xlu0 %v2405, 24
      %v2898 = vpop.permute.xlu0 %2897
      %2899 = vrot.lane.b32.xlu0 %v2406, 24
      %v2900 = vpop.permute.xlu0 %2899
      %2901 = vrot.lane.b32.xlu0 %v2407, 24
      %v2902 = vpop.permute.xlu0 %2901
      %2903 = vrot.lane.b32.xlu0 %v2408, 24
      %v2904 = vpop.permute.xlu0 %2903
      %2905 = vrot.lane.b32.xlu0 %v2409, 24
      %v2906 = vpop.permute.xlu0 %2905
      %2907 = vrot.lane.b32.xlu0 %v2410, 24
      %v2908 = vpop.permute.xlu0 %2907
      %2909 = vrot.lane.b32.xlu0 %v2411, 24
      %v2910 = vpop.permute.xlu0 %2909
      %2911 = vrot.lane.b32.xlu0 %v2412, 24
      %v2912 = vpop.permute.xlu0 %2911
      %2913 = vrot.lane.b32.xlu0 %v2413, 24
      %v2914 = vpop.permute.xlu0 %2913
      %2915 = vrot.lane.b32.xlu0 %v2414, 24
      %v2916 = vpop.permute.xlu0 %2915
      %2917 = vrot.lane.b32.xlu0 %v2415, 24
      %v2918 = vpop.permute.xlu0 %2917
      %2919 = vrot.lane.b32.xlu0 %v2416, 24
      %v2920 = vpop.permute.xlu0 %2919
      %2921 = vrot.lane.b32.xlu0 %v2773, 24
      %v2922 = vpop.permute.xlu0 %2921
      %2923 = vrot.lane.b32.xlu0 %v2892, 24
      %v2924 = vpop.permute.xlu0 %2923
      %v2926 = vunpack.c.l.b16 %v2336
      %v2927 = vpack.c.b16 %v2926, %v2926
      %v2929 = vshrl.u32 %v2892, 16
      %v2931 = vshll.u32 %v2892, 16
      %v2933 = vrot.slane %v2931, 1
      %v2934 = vor.u32 %v2929, %v2933
      %v2936 = vshll.u32 %v2927, 16
      %v2938 = vrot.slane %v2936, 1
      %v2939 = vsel %vm495, %v2934, %v2938
      %2940 = vrot.lane.b32.xlu0 %v2500, 28
      %v2941 = vpop.permute.xlu0 %2940
      %2942 = vrot.lane.b32.xlu0 %v2512, 28
      %v2943 = vpop.permute.xlu0 %2942
      %2944 = vrot.lane.b32.xlu0 %v2524, 28
      %v2945 = vpop.permute.xlu0 %2944
      %2946 = vrot.lane.b32.xlu0 %v2536, 28
      %v2947 = vpop.permute.xlu0 %2946
      %2948 = vrot.lane.b32.xlu0 %v2548, 28
      %v2949 = vpop.permute.xlu0 %2948
      %2950 = vrot.lane.b32.xlu0 %v2560, 28
      %v2951 = vpop.permute.xlu0 %2950
      %2952 = vrot.lane.b32.xlu0 %v2572, 28
      %v2953 = vpop.permute.xlu0 %2952
      %2954 = vrot.lane.b32.xlu0 %v2584, 28
      %v2955 = vpop.permute.xlu0 %2954
      %2956 = vrot.lane.b32.xlu0 %v2596, 28
      %v2957 = vpop.permute.xlu0 %2956
      %2958 = vrot.lane.b32.xlu0 %v2608, 28
      %v2959 = vpop.permute.xlu0 %2958
      %2960 = vrot.lane.b32.xlu0 %v2620, 28
      %v2961 = vpop.permute.xlu0 %2960
      %2962 = vrot.lane.b32.xlu0 %v2632, 28
      %v2963 = vpop.permute.xlu0 %2962
      %2964 = vrot.lane.b32.xlu0 %v2644, 28
      %v2965 = vpop.permute.xlu0 %2964
      %2966 = vrot.lane.b32.xlu0 %v2656, 28
      %v2967 = vpop.permute.xlu0 %2966
      %2968 = vrot.lane.b32.xlu0 %v2820, 28
      %v2969 = vpop.permute.xlu0 %2968
      %2970 = vrot.lane.b32.xlu0 %v2939, 28
      %v2971 = vpop.permute.xlu0 %2970
      %v2972 = vrot.slane %v2892, 1
      %v2973 = vrot.slane %v2927, 1
      %v2974 = vsel %vm720, %v2972, %v2973
      %2975 = vrot.lane.b32.xlu0 %v2697, 32
      %v2976 = vpop.permute.xlu0 %2975
      %2977 = vrot.lane.b32.xlu0 %v2700, 32
      %v2978 = vpop.permute.xlu0 %2977
      %2979 = vrot.lane.b32.xlu0 %v2703, 32
      %v2980 = vpop.permute.xlu0 %2979
      %2981 = vrot.lane.b32.xlu0 %v2706, 32
      %v2982 = vpop.permute.xlu0 %2981
      %2983 = vrot.lane.b32.xlu0 %v2709, 32
      %v2984 = vpop.permute.xlu0 %2983
      %2985 = vrot.lane.b32.xlu0 %v2712, 32
      %v2986 = vpop.permute.xlu0 %2985
      %2987 = vrot.lane.b32.xlu0 %v2715, 32
      %v2988 = vpop.permute.xlu0 %2987
      %2989 = vrot.lane.b32.xlu0 %v2718, 32
      %v2990 = vpop.permute.xlu0 %2989
      %2991 = vrot.lane.b32.xlu0 %v2721, 32
      %v2992 = vpop.permute.xlu0 %2991
      %2993 = vrot.lane.b32.xlu0 %v2724, 32
      %v2994 = vpop.permute.xlu0 %2993
      %2995 = vrot.lane.b32.xlu0 %v2727, 32
      %v2996 = vpop.permute.xlu0 %2995
      %2997 = vrot.lane.b32.xlu0 %v2730, 32
      %v2998 = vpop.permute.xlu0 %2997
      %2999 = vrot.lane.b32.xlu0 %v2733, 32
      %v3000 = vpop.permute.xlu0 %2999
      %3001 = vrot.lane.b32.xlu0 %v2736, 32
      %v3002 = vpop.permute.xlu0 %3001
      %3003 = vrot.lane.b32.xlu0 %v2855, 32
      %v3004 = vpop.permute.xlu0 %3003
      %3005 = vrot.lane.b32.xlu0 %v2974, 32
      %v3006 = vpop.permute.xlu0 %3005
      %v3008 = vsel %vm1039, %v2401, %v2658
      %v3010 = vsel %vm1039, %v2402, %v2660
      %v3012 = vsel %vm1039, %v2403, %v2662
      %v3014 = vsel %vm1039, %v2404, %v2664
      %v3016 = vsel %vm1039, %v2405, %v2666
      %v3018 = vsel %vm1039, %v2406, %v2668
      %v3020 = vsel %vm1039, %v2407, %v2670
      %v3022 = vsel %vm1039, %v2408, %v2672
      %v3024 = vsel %vm1039, %v2409, %v2674
      %v3026 = vsel %vm1039, %v2410, %v2676
      %v3028 = vsel %vm1039, %v2411, %v2678
      %v3030 = vsel %vm1039, %v2412, %v2680
      %v3032 = vsel %vm1039, %v2413, %v2682
      %v3034 = vsel %vm1039, %v2414, %v2684
      %v3036 = vsel %vm1039, %v2415, %v2686
      %v3038 = vsel %vm1039, %v2416, %v2688
      %v3040 = vsel %vm1072, %v3008, %v2738
      %v3042 = vsel %vm1072, %v3010, %v2740
      %v3044 = vsel %vm1072, %v3012, %v2742
      %v3046 = vsel %vm1072, %v3014, %v2744
      %v3048 = vsel %vm1072, %v3016, %v2746
      %v3050 = vsel %vm1072, %v3018, %v2748
      %v3052 = vsel %vm1072, %v3020, %v2750
      %v3054 = vsel %vm1072, %v3022, %v2752
      %v3056 = vsel %vm1072, %v3024, %v2754
      %v3058 = vsel %vm1072, %v3026, %v2756
      %v3060 = vsel %vm1072, %v3028, %v2758
      %v3062 = vsel %vm1072, %v3030, %v2760
      %v3064 = vsel %vm1072, %v3032, %v2762
      %v3066 = vsel %vm1072, %v3034, %v2764
      %v3068 = vsel %vm1072, %v3036, %v2766
      %v3070 = vsel %vm1072, %v3038, %v2768
      %v3072 = vsel %vm1105, %v3040, %v2775
      %v3074 = vsel %vm1105, %v3042, %v2777
      %v3076 = vsel %vm1105, %v3044, %v2779
      %v3078 = vsel %vm1105, %v3046, %v2781
      %v3080 = vsel %vm1105, %v3048, %v2783
      %v3082 = vsel %vm1105, %v3050, %v2785
      %v3084 = vsel %vm1105, %v3052, %v2787
      %v3086 = vsel %vm1105, %v3054, %v2789
      %v3088 = vsel %vm1105, %v3056, %v2791
      %v3090 = vsel %vm1105, %v3058, %v2793
      %v3092 = vsel %vm1105, %v3060, %v2795
      %v3094 = vsel %vm1105, %v3062, %v2797
      %v3096 = vsel %vm1105, %v3064, %v2799
      %v3098 = vsel %vm1105, %v3066, %v2801
      %v3100 = vsel %vm1105, %v3068, %v2803
      %v3102 = vsel %vm1105, %v3070, %v2805
      %v3104 = vsel %vm1138, %v3072, %v2822
      %v3106 = vsel %vm1138, %v3074, %v2824
      %v3108 = vsel %vm1138, %v3076, %v2826
      %v3110 = vsel %vm1138, %v3078, %v2828
      %v3112 = vsel %vm1138, %v3080, %v2830
      %v3114 = vsel %vm1138, %v3082, %v2832
      %v3116 = vsel %vm1138, %v3084, %v2834
      %v3118 = vsel %vm1138, %v3086, %v2836
      %v3120 = vsel %vm1138, %v3088, %v2838
      %v3122 = vsel %vm1138, %v3090, %v2840
      %v3124 = vsel %vm1138, %v3092, %v2842
      %v3126 = vsel %vm1138, %v3094, %v2844
      %v3128 = vsel %vm1138, %v3096, %v2846
      %v3130 = vsel %vm1138, %v3098, %v2848
      %v3132 = vsel %vm1138, %v3100, %v2850
      %v3134 = vsel %vm1138, %v3102, %v2852
      %v3136 = vsel %vm1171, %v3104, %v2857
      %v3138 = vsel %vm1171, %v3106, %v2859
      %v3140 = vsel %vm1171, %v3108, %v2861
      %v3142 = vsel %vm1171, %v3110, %v2863
      %v3144 = vsel %vm1171, %v3112, %v2865
      %v3146 = vsel %vm1171, %v3114, %v2867
      %v3148 = vsel %vm1171, %v3116, %v2869
      %v3150 = vsel %vm1171, %v3118, %v2871
      %v3152 = vsel %vm1171, %v3120, %v2873
      %v3154 = vsel %vm1171, %v3122, %v2875
      %v3156 = vsel %vm1171, %v3124, %v2877
      %v3158 = vsel %vm1171, %v3126, %v2879
      %v3160 = vsel %vm1171, %v3128, %v2881
      %v3162 = vsel %vm1171, %v3130, %v2883
      %v3164 = vsel %vm1171, %v3132, %v2885
      %v3166 = vsel %vm1171, %v3134, %v2887
      %v3168 = vsel %vm1204, %v3136, %v2894
      %v3170 = vsel %vm1204, %v3138, %v2896
      %v3172 = vsel %vm1204, %v3140, %v2898
      %v3174 = vsel %vm1204, %v3142, %v2900
      %v3176 = vsel %vm1204, %v3144, %v2902
      %v3178 = vsel %vm1204, %v3146, %v2904
      %v3180 = vsel %vm1204, %v3148, %v2906
      %v3182 = vsel %vm1204, %v3150, %v2908
      %v3184 = vsel %vm1204, %v3152, %v2910
      %v3186 = vsel %vm1204, %v3154, %v2912
      %v3188 = vsel %vm1204, %v3156, %v2914
      %v3190 = vsel %vm1204, %v3158, %v2916
      %v3192 = vsel %vm1204, %v3160, %v2918
      %v3194 = vsel %vm1204, %v3162, %v2920
      %v3196 = vsel %vm1204, %v3164, %v2922
      %v3198 = vsel %vm1204, %v3166, %v2924
      %v3200 = vsel %vm1237, %v3168, %v2941
      %v3202 = vsel %vm1237, %v3170, %v2943
      %v3204 = vsel %vm1237, %v3172, %v2945
      %v3206 = vsel %vm1237, %v3174, %v2947
      %v3208 = vsel %vm1237, %v3176, %v2949
      %v3210 = vsel %vm1237, %v3178, %v2951
      %v3212 = vsel %vm1237, %v3180, %v2953
      %v3214 = vsel %vm1237, %v3182, %v2955
      %v3216 = vsel %vm1237, %v3184, %v2957
      %v3218 = vsel %vm1237, %v3186, %v2959
      %v3220 = vsel %vm1237, %v3188, %v2961
      %v3222 = vsel %vm1237, %v3190, %v2963
      %v3224 = vsel %vm1237, %v3192, %v2965
      %v3226 = vsel %vm1237, %v3194, %v2967
      %v3228 = vsel %vm1237, %v3196, %v2969
      %v3230 = vsel %vm1237, %v3198, %v2971
      %v3232 = vsel %vm1270, %v3200, %v2976
      %v3234 = vsel %vm1270, %v3202, %v2978
      %v3236 = vsel %vm1270, %v3204, %v2980
      %v3238 = vsel %vm1270, %v3206, %v2982
      %v3240 = vsel %vm1270, %v3208, %v2984
      %v3242 = vsel %vm1270, %v3210, %v2986
      %v3244 = vsel %vm1270, %v3212, %v2988
      %v3246 = vsel %vm1270, %v3214, %v2990
      %v3248 = vsel %vm1270, %v3216, %v2992
      %v3250 = vsel %vm1270, %v3218, %v2994
      %v3252 = vsel %vm1270, %v3220, %v2996
      %v3254 = vsel %vm1270, %v3222, %v2998
      %v3256 = vsel %vm1270, %v3224, %v3000
      %v3258 = vsel %vm1270, %v3226, %v3002
      %v3260 = vsel %vm1270, %v3228, %v3004
      %v3262 = vsel %vm1270, %v3230, %v3006
      %v3263 = vld [vmem:[%s306] sm:$0xf]
      %v3264 = vld [vmem:[%s306 + $0x4] sm:$0xf]
      %v3265 = vld [vmem:[%s306 + $0x8] sm:$0x1]
      %v3266 = vld [vmem:[%s306 + $0xc] sm:$0xf]
      %v3267 = vld [vmem:[%s306 + $0x10] sm:$0xf]
      %v3268 = vld [vmem:[%s306 + $0x14] sm:$0x1]
      %v3269 = vld [vmem:[%s306 + $0x18] sm:$0xf]
      %v3270 = vld [vmem:[%s306 + $0x1c] sm:$0xf]
      %v3271 = vld [vmem:[%s306 + $0x20] sm:$0x1]
      %v3272 = vld [vmem:[%s306 + $0x24] sm:$0xf]
      %v3273 = vld [vmem:[%s306 + $0x28] sm:$0xf]
      %v3274 = vld [vmem:[%s306 + $0x2c] sm:$0x1]
      %v3275 = vld [vmem:[%s306 + $0x30] sm:$0xf]
      %v3276 = vld [vmem:[%s306 + $0x34] sm:$0xf]
      %v3277 = vld [vmem:[%s306 + $0x38] sm:$0x1]
      %v3278 = vld [vmem:[%s306 + $0x3c] sm:$0xf]
      %v3279 = vld [vmem:[%s306 + $0x40] sm:$0xf]
      %v3280 = vld [vmem:[%s306 + $0x44] sm:$0x1]
      %v3281 = vld [vmem:[%s306 + $0x48] sm:$0xf]
      %v3282 = vld [vmem:[%s306 + $0x4c] sm:$0xf]
      %v3283 = vld [vmem:[%s306 + $0x50] sm:$0x1]
      %v3284 = vld [vmem:[%s306 + $0x54] sm:$0xf]
      %v3285 = vld [vmem:[%s306 + $0x58] sm:$0xf]
      %v3286 = vld [vmem:[%s306 + $0x5c] sm:$0x1]
      %v3287 = vld [vmem:[%s306 + $0x60] sm:$0xf]
      %v3288 = vld [vmem:[%s306 + $0x64] sm:$0xf]
      %v3289 = vld [vmem:[%s306 + $0x68] sm:$0x1]
      %v3290 = vld [vmem:[%s306 + $0x6c] sm:$0xf]
      %v3291 = vld [vmem:[%s306 + $0x70] sm:$0xf]
      %v3292 = vld [vmem:[%s306 + $0x74] sm:$0x1]
      %v3293 = vld [vmem:[%s306 + $0x78] sm:$0xf]
      %v3294 = vld [vmem:[%s306 + $0x7c] sm:$0xf]
      %v3295 = vld [vmem:[%s306 + $0x80] sm:$0x1]
      %v3296 = vld [vmem:[%s306 + $0x84] sm:$0xf]
      %v3297 = vld [vmem:[%s306 + $0x88] sm:$0xf]
      %v3298 = vld [vmem:[%s306 + $0x8c] sm:$0x1]
      %v3299 = vld [vmem:[%s306 + $0x90] sm:$0xf]
      %v3300 = vld [vmem:[%s306 + $0x94] sm:$0xf]
      %v3301 = vld [vmem:[%s306 + $0x98] sm:$0x1]
      %v3302 = vld [vmem:[%s306 + $0x9c] sm:$0xf]
      %v3303 = vld [vmem:[%s306 + $0xa0] sm:$0xf]
      %v3304 = vld [vmem:[%s306 + $0xa4] sm:$0x1]
      %v3305 = vld [vmem:[%s306 + $0xa8] sm:$0xf]
      %v3306 = vld [vmem:[%s306 + $0xac] sm:$0xf]
      %v3307 = vld [vmem:[%s306 + $0xb0] sm:$0x1]
      %v3308 = vld [vmem:[%s306 + $0xb4] sm:$0xf]
      %v3309 = vld [vmem:[%s306 + $0xb8] sm:$0xf]
      %v3310 = vld [vmem:[%s306 + $0xbc] sm:$0x1]
      %v3311 = vld [vmem:[%s306 + $0xc0] sm:$0xf]
      %v3312 = vld [vmem:[%s306 + $0xc4] sm:$0xf]
      %v3313 = vld [vmem:[%s306 + $0xc8] sm:$0x1]
      %v3314 = vld [vmem:[%s306 + $0xcc] sm:$0xf]
      %v3315 = vld [vmem:[%s306 + $0xd0] sm:$0xf]
      %v3316 = vld [vmem:[%s306 + $0xd4] sm:$0x1]
      %v3349 = vunpack.c.l.b16 %v3263
      %v3350 = vunpack.c.l.b16 %v3264
      %v3351 = vunpack.c.l.b16 %v3266
      %v3352 = vunpack.c.l.b16 %v3267
      %v3353 = vunpack.c.l.b16 %v3269
      %v3354 = vunpack.c.l.b16 %v3270
      %v3355 = vunpack.c.l.b16 %v3272
      %v3356 = vunpack.c.l.b16 %v3273
      %v3357 = vunpack.c.l.b16 %v3275
      %v3358 = vunpack.c.l.b16 %v3276
      %v3359 = vunpack.c.l.b16 %v3278
      %v3360 = vunpack.c.l.b16 %v3279
      %v3361 = vunpack.c.l.b16 %v3281
      %v3362 = vunpack.c.l.b16 %v3282
      %v3363 = vunpack.c.l.b16 %v3284
      %v3364 = vunpack.c.l.b16 %v3285
      %v3365 = vunpack.c.l.b16 %v3287
      %v3366 = vunpack.c.l.b16 %v3288
      %v3367 = vunpack.c.l.b16 %v3290
      %v3368 = vunpack.c.l.b16 %v3291
      %v3369 = vunpack.c.l.b16 %v3293
      %v3370 = vunpack.c.l.b16 %v3294
      %v3371 = vunpack.c.l.b16 %v3296
      %v3372 = vunpack.c.l.b16 %v3297
      %v3373 = vunpack.c.l.b16 %v3299
      %v3374 = vunpack.c.l.b16 %v3300
      %v3375 = vunpack.c.l.b16 %v3302
      %v3376 = vunpack.c.l.b16 %v3303
      %v3377 = vunpack.c.l.b16 %v3305
      %v3378 = vunpack.c.l.b16 %v3306
      %v3379 = vunpack.c.l.b16 %v3308
      %v3380 = vunpack.c.l.b16 %v3309
      %v3381 = vpack.c.b16 %v3350, %v3349
      %v3382 = vpack.c.b16 %v3352, %v3351
      %v3383 = vpack.c.b16 %v3354, %v3353
      %v3384 = vpack.c.b16 %v3356, %v3355
      %v3385 = vpack.c.b16 %v3358, %v3357
      %v3386 = vpack.c.b16 %v3360, %v3359
      %v3387 = vpack.c.b16 %v3362, %v3361
      %v3388 = vpack.c.b16 %v3364, %v3363
      %v3389 = vpack.c.b16 %v3366, %v3365
      %v3390 = vpack.c.b16 %v3368, %v3367
      %v3391 = vpack.c.b16 %v3370, %v3369
      %v3392 = vpack.c.b16 %v3372, %v3371
      %v3393 = vpack.c.b16 %v3374, %v3373
      %v3394 = vpack.c.b16 %v3376, %v3375
      %v3395 = vpack.c.b16 %v3378, %v3377
      %v3396 = vpack.c.b16 %v3380, %v3379
      %v3413 = vunpack.c.l.b16 %v3265
      %v3414 = vunpack.c.l.b16 %v3268
      %v3415 = vunpack.c.l.b16 %v3271
      %v3416 = vunpack.c.l.b16 %v3274
      %v3417 = vunpack.c.l.b16 %v3277
      %v3418 = vunpack.c.l.b16 %v3280
      %v3419 = vunpack.c.l.b16 %v3283
      %v3420 = vunpack.c.l.b16 %v3286
      %v3421 = vunpack.c.l.b16 %v3289
      %v3422 = vunpack.c.l.b16 %v3292
      %v3423 = vunpack.c.l.b16 %v3295
      %v3424 = vunpack.c.l.b16 %v3298
      %v3425 = vunpack.c.l.b16 %v3301
      %v3426 = vunpack.c.l.b16 %v3304
      %v3427 = vunpack.c.l.b16 %v3307
      %v3428 = vunpack.c.l.b16 %v3310
      %v3429 = vpack.c.b16 %v3413, %v3413
      %v3430 = vpack.c.b16 %v3414, %v3414
      %v3431 = vpack.c.b16 %v3415, %v3415
      %v3432 = vpack.c.b16 %v3416, %v3416
      %v3433 = vpack.c.b16 %v3417, %v3417
      %v3434 = vpack.c.b16 %v3418, %v3418
      %v3435 = vpack.c.b16 %v3419, %v3419
      %v3436 = vpack.c.b16 %v3420, %v3420
      %v3437 = vpack.c.b16 %v3421, %v3421
      %v3438 = vpack.c.b16 %v3422, %v3422
      %v3439 = vpack.c.b16 %v3423, %v3423
      %v3440 = vpack.c.b16 %v3424, %v3424
      %v3441 = vpack.c.b16 %v3425, %v3425
      %v3442 = vpack.c.b16 %v3426, %v3426
      %v3443 = vpack.c.b16 %v3427, %v3427
      %v3444 = vpack.c.b16 %v3428, %v3428
      %v3446 = vshrl.u32 %v3381, 16
      %v3448 = vshll.u32 %v3381, 16
      %v3450 = vrot.slane %v3448, 1
      %v3451 = vor.u32 %v3446, %v3450
      %v3453 = vshll.u32 %v3429, 16
      %v3455 = vrot.slane %v3453, 1
      %v3456 = vsel %vm495, %v3451, %v3455
      %v3458 = vshrl.u32 %v3382, 16
      %v3460 = vshll.u32 %v3382, 16
      %v3462 = vrot.slane %v3460, 1
      %v3463 = vor.u32 %v3458, %v3462
      %v3465 = vshll.u32 %v3430, 16
      %v3467 = vrot.slane %v3465, 1
      %v3468 = vsel %vm495, %v3463, %v3467
      %v3470 = vshrl.u32 %v3383, 16
      %v3472 = vshll.u32 %v3383, 16
      %v3474 = vrot.slane %v3472, 1
      %v3475 = vor.u32 %v3470, %v3474
      %v3477 = vshll.u32 %v3431, 16
      %v3479 = vrot.slane %v3477, 1
      %v3480 = vsel %vm495, %v3475, %v3479
      %v3482 = vshrl.u32 %v3384, 16
      %v3484 = vshll.u32 %v3384, 16
      %v3486 = vrot.slane %v3484, 1
      %v3487 = vor.u32 %v3482, %v3486
      %v3489 = vshll.u32 %v3432, 16
      %v3491 = vrot.slane %v3489, 1
      %v3492 = vsel %vm495, %v3487, %v3491
      %v3494 = vshrl.u32 %v3385, 16
      %v3496 = vshll.u32 %v3385, 16
      %v3498 = vrot.slane %v3496, 1
      %v3499 = vor.u32 %v3494, %v3498
      %v3501 = vshll.u32 %v3433, 16
      %v3503 = vrot.slane %v3501, 1
      %v3504 = vsel %vm495, %v3499, %v3503
      %v3506 = vshrl.u32 %v3386, 16
      %v3508 = vshll.u32 %v3386, 16
      %v3510 = vrot.slane %v3508, 1
      %v3511 = vor.u32 %v3506, %v3510
      %v3513 = vshll.u32 %v3434, 16
      %v3515 = vrot.slane %v3513, 1
      %v3516 = vsel %vm495, %v3511, %v3515
      %v3518 = vshrl.u32 %v3387, 16
      %v3520 = vshll.u32 %v3387, 16
      %v3522 = vrot.slane %v3520, 1
      %v3523 = vor.u32 %v3518, %v3522
      %v3525 = vshll.u32 %v3435, 16
      %v3527 = vrot.slane %v3525, 1
      %v3528 = vsel %vm495, %v3523, %v3527
      %v3530 = vshrl.u32 %v3388, 16
      %v3532 = vshll.u32 %v3388, 16
      %v3534 = vrot.slane %v3532, 1
      %v3535 = vor.u32 %v3530, %v3534
      %v3537 = vshll.u32 %v3436, 16
      %v3539 = vrot.slane %v3537, 1
      %v3540 = vsel %vm495, %v3535, %v3539
      %v3542 = vshrl.u32 %v3389, 16
      %v3544 = vshll.u32 %v3389, 16
      %v3546 = vrot.slane %v3544, 1
      %v3547 = vor.u32 %v3542, %v3546
      %v3549 = vshll.u32 %v3437, 16
      %v3551 = vrot.slane %v3549, 1
      %v3552 = vsel %vm495, %v3547, %v3551
      %v3554 = vshrl.u32 %v3390, 16
      %v3556 = vshll.u32 %v3390, 16
      %v3558 = vrot.slane %v3556, 1
      %v3559 = vor.u32 %v3554, %v3558
      %v3561 = vshll.u32 %v3438, 16
      %v3563 = vrot.slane %v3561, 1
      %v3564 = vsel %vm495, %v3559, %v3563
      %v3566 = vshrl.u32 %v3391, 16
      %v3568 = vshll.u32 %v3391, 16
      %v3570 = vrot.slane %v3568, 1
      %v3571 = vor.u32 %v3566, %v3570
      %v3573 = vshll.u32 %v3439, 16
      %v3575 = vrot.slane %v3573, 1
      %v3576 = vsel %vm495, %v3571, %v3575
      %v3578 = vshrl.u32 %v3392, 16
      %v3580 = vshll.u32 %v3392, 16
      %v3582 = vrot.slane %v3580, 1
      %v3583 = vor.u32 %v3578, %v3582
      %v3585 = vshll.u32 %v3440, 16
      %v3587 = vrot.slane %v3585, 1
      %v3588 = vsel %vm495, %v3583, %v3587
      %v3590 = vshrl.u32 %v3393, 16
      %v3592 = vshll.u32 %v3393, 16
      %v3594 = vrot.slane %v3592, 1
      %v3595 = vor.u32 %v3590, %v3594
      %v3597 = vshll.u32 %v3441, 16
      %v3599 = vrot.slane %v3597, 1
      %v3600 = vsel %vm495, %v3595, %v3599
      %v3602 = vshrl.u32 %v3394, 16
      %v3604 = vshll.u32 %v3394, 16
      %v3606 = vrot.slane %v3604, 1
      %v3607 = vor.u32 %v3602, %v3606
      %v3609 = vshll.u32 %v3442, 16
      %v3611 = vrot.slane %v3609, 1
      %v3612 = vsel %vm495, %v3607, %v3611
      %v3614 = vshrl.u32 %v3395, 16
      %v3616 = vshll.u32 %v3395, 16
      %v3618 = vrot.slane %v3616, 1
      %v3619 = vor.u32 %v3614, %v3618
      %v3621 = vshll.u32 %v3443, 16
      %v3623 = vrot.slane %v3621, 1
      %v3624 = vsel %vm495, %v3619, %v3623
      %v3626 = vshrl.u32 %v3396, 16
      %v3628 = vshll.u32 %v3396, 16
      %v3630 = vrot.slane %v3628, 1
      %v3631 = vor.u32 %v3626, %v3630
      %v3633 = vshll.u32 %v3444, 16
      %v3635 = vrot.slane %v3633, 1
      %v3636 = vsel %vm495, %v3631, %v3635
      %3637 = vrot.lane.b32.xlu0 %v3456, 4
      %v3638 = vpop.permute.xlu0 %3637
      %3639 = vrot.lane.b32.xlu0 %v3468, 4
      %v3640 = vpop.permute.xlu0 %3639
      %3641 = vrot.lane.b32.xlu0 %v3480, 4
      %v3642 = vpop.permute.xlu0 %3641
      %3643 = vrot.lane.b32.xlu0 %v3492, 4
      %v3644 = vpop.permute.xlu0 %3643
      %3645 = vrot.lane.b32.xlu0 %v3504, 4
      %v3646 = vpop.permute.xlu0 %3645
      %3647 = vrot.lane.b32.xlu0 %v3516, 4
      %v3648 = vpop.permute.xlu0 %3647
      %3649 = vrot.lane.b32.xlu0 %v3528, 4
      %v3650 = vpop.permute.xlu0 %3649
      %3651 = vrot.lane.b32.xlu0 %v3540, 4
      %v3652 = vpop.permute.xlu0 %3651
      %3653 = vrot.lane.b32.xlu0 %v3552, 4
      %v3654 = vpop.permute.xlu0 %3653
      %3655 = vrot.lane.b32.xlu0 %v3564, 4
      %v3656 = vpop.permute.xlu0 %3655
      %3657 = vrot.lane.b32.xlu0 %v3576, 4
      %v3658 = vpop.permute.xlu0 %3657
      %3659 = vrot.lane.b32.xlu0 %v3588, 4
      %v3660 = vpop.permute.xlu0 %3659
      %3661 = vrot.lane.b32.xlu0 %v3600, 4
      %v3662 = vpop.permute.xlu0 %3661
      %3663 = vrot.lane.b32.xlu0 %v3612, 4
      %v3664 = vpop.permute.xlu0 %3663
      %3665 = vrot.lane.b32.xlu0 %v3624, 4
      %v3666 = vpop.permute.xlu0 %3665
      %3667 = vrot.lane.b32.xlu0 %v3636, 4
      %v3668 = vpop.permute.xlu0 %3667
      %v3669 = vrot.slane %v3381, 1
      %v3670 = vrot.slane %v3429, 1
      %v3671 = vsel %vm720, %v3669, %v3670
      %v3672 = vrot.slane %v3382, 1
      %v3673 = vrot.slane %v3430, 1
      %v3674 = vsel %vm720, %v3672, %v3673
      %v3675 = vrot.slane %v3383, 1
      %v3676 = vrot.slane %v3431, 1
      %v3677 = vsel %vm720, %v3675, %v3676
      %v3678 = vrot.slane %v3384, 1
      %v3679 = vrot.slane %v3432, 1
      %v3680 = vsel %vm720, %v3678, %v3679
      %v3681 = vrot.slane %v3385, 1
      %v3682 = vrot.slane %v3433, 1
      %v3683 = vsel %vm720, %v3681, %v3682
      %v3684 = vrot.slane %v3386, 1
      %v3685 = vrot.slane %v3434, 1
      %v3686 = vsel %vm720, %v3684, %v3685
      %v3687 = vrot.slane %v3387, 1
      %v3688 = vrot.slane %v3435, 1
      %v3689 = vsel %vm720, %v3687, %v3688
      %v3690 = vrot.slane %v3388, 1
      %v3691 = vrot.slane %v3436, 1
      %v3692 = vsel %vm720, %v3690, %v3691
      %v3693 = vrot.slane %v3389, 1
      %v3694 = vrot.slane %v3437, 1
      %v3695 = vsel %vm720, %v3693, %v3694
      %v3696 = vrot.slane %v3390, 1
      %v3697 = vrot.slane %v3438, 1
      %v3698 = vsel %vm720, %v3696, %v3697
      %v3699 = vrot.slane %v3391, 1
      %v3700 = vrot.slane %v3439, 1
      %v3701 = vsel %vm720, %v3699, %v3700
      %v3702 = vrot.slane %v3392, 1
      %v3703 = vrot.slane %v3440, 1
      %v3704 = vsel %vm720, %v3702, %v3703
      %v3705 = vrot.slane %v3393, 1
      %v3706 = vrot.slane %v3441, 1
      %v3707 = vsel %vm720, %v3705, %v3706
      %v3708 = vrot.slane %v3394, 1
      %v3709 = vrot.slane %v3442, 1
      %v3710 = vsel %vm720, %v3708, %v3709
      %v3711 = vrot.slane %v3395, 1
      %v3712 = vrot.slane %v3443, 1
      %v3713 = vsel %vm720, %v3711, %v3712
      %v3714 = vrot.slane %v3396, 1
      %v3715 = vrot.slane %v3444, 1
      %v3716 = vsel %vm720, %v3714, %v3715
      %3717 = vrot.lane.b32.xlu0 %v3671, 8
      %v3718 = vpop.permute.xlu0 %3717
      %3719 = vrot.lane.b32.xlu0 %v3674, 8
      %v3720 = vpop.permute.xlu0 %3719
      %3721 = vrot.lane.b32.xlu0 %v3677, 8
      %v3722 = vpop.permute.xlu0 %3721
      %3723 = vrot.lane.b32.xlu0 %v3680, 8
      %v3724 = vpop.permute.xlu0 %3723
      %3725 = vrot.lane.b32.xlu0 %v3683, 8
      %v3726 = vpop.permute.xlu0 %3725
      %3727 = vrot.lane.b32.xlu0 %v3686, 8
      %v3728 = vpop.permute.xlu0 %3727
      %3729 = vrot.lane.b32.xlu0 %v3689, 8
      %v3730 = vpop.permute.xlu0 %3729
      %3731 = vrot.lane.b32.xlu0 %v3692, 8
      %v3732 = vpop.permute.xlu0 %3731
      %3733 = vrot.lane.b32.xlu0 %v3695, 8
      %v3734 = vpop.permute.xlu0 %3733
      %3735 = vrot.lane.b32.xlu0 %v3698, 8
      %v3736 = vpop.permute.xlu0 %3735
      %3737 = vrot.lane.b32.xlu0 %v3701, 8
      %v3738 = vpop.permute.xlu0 %3737
      %3739 = vrot.lane.b32.xlu0 %v3704, 8
      %v3740 = vpop.permute.xlu0 %3739
      %3741 = vrot.lane.b32.xlu0 %v3707, 8
      %v3742 = vpop.permute.xlu0 %3741
      %3743 = vrot.lane.b32.xlu0 %v3710, 8
      %v3744 = vpop.permute.xlu0 %3743
      %3745 = vrot.lane.b32.xlu0 %v3713, 8
      %v3746 = vpop.permute.xlu0 %3745
      %3747 = vrot.lane.b32.xlu0 %v3716, 8
      %v3748 = vpop.permute.xlu0 %3747
      %v3751 = vunpack.c.l.b16 %v3311
      %v3752 = vunpack.c.l.b16 %v3312
      %v3753 = vpack.c.b16 %v3752, %v3751
      %3754 = vrot.lane.b32.xlu0 %v3382, 12
      %v3755 = vpop.permute.xlu0 %3754
      %3756 = vrot.lane.b32.xlu0 %v3383, 12
      %v3757 = vpop.permute.xlu0 %3756
      %3758 = vrot.lane.b32.xlu0 %v3384, 12
      %v3759 = vpop.permute.xlu0 %3758
      %3760 = vrot.lane.b32.xlu0 %v3385, 12
      %v3761 = vpop.permute.xlu0 %3760
      %3762 = vrot.lane.b32.xlu0 %v3386, 12
      %v3763 = vpop.permute.xlu0 %3762
      %3764 = vrot.lane.b32.xlu0 %v3387, 12
      %v3765 = vpop.permute.xlu0 %3764
      %3766 = vrot.lane.b32.xlu0 %v3388, 12
      %v3767 = vpop.permute.xlu0 %3766
      %3768 = vrot.lane.b32.xlu0 %v3389, 12
      %v3769 = vpop.permute.xlu0 %3768
      %3770 = vrot.lane.b32.xlu0 %v3390, 12
      %v3771 = vpop.permute.xlu0 %3770
      %3772 = vrot.lane.b32.xlu0 %v3391, 12
      %v3773 = vpop.permute.xlu0 %3772
      %3774 = vrot.lane.b32.xlu0 %v3392, 12
      %v3775 = vpop.permute.xlu0 %3774
      %3776 = vrot.lane.b32.xlu0 %v3393, 12
      %v3777 = vpop.permute.xlu0 %3776
      %3778 = vrot.lane.b32.xlu0 %v3394, 12
      %v3779 = vpop.permute.xlu0 %3778
      %3780 = vrot.lane.b32.xlu0 %v3395, 12
      %v3781 = vpop.permute.xlu0 %3780
      %3782 = vrot.lane.b32.xlu0 %v3396, 12
      %v3783 = vpop.permute.xlu0 %3782
      %3784 = vrot.lane.b32.xlu0 %v3753, 12
      %v3785 = vpop.permute.xlu0 %3784
      %v3787 = vunpack.c.l.b16 %v3313
      %v3788 = vpack.c.b16 %v3787, %v3787
      %v3790 = vshrl.u32 %v3753, 16
      %v3792 = vshll.u32 %v3753, 16
      %v3794 = vrot.slane %v3792, 1
      %v3795 = vor.u32 %v3790, %v3794
      %v3797 = vshll.u32 %v3788, 16
      %v3799 = vrot.slane %v3797, 1
      %v3800 = vsel %vm495, %v3795, %v3799
      %3801 = vrot.lane.b32.xlu0 %v3468, 16
      %v3802 = vpop.permute.xlu0 %3801
      %3803 = vrot.lane.b32.xlu0 %v3480, 16
      %v3804 = vpop.permute.xlu0 %3803
      %3805 = vrot.lane.b32.xlu0 %v3492, 16
      %v3806 = vpop.permute.xlu0 %3805
      %3807 = vrot.lane.b32.xlu0 %v3504, 16
      %v3808 = vpop.permute.xlu0 %3807
      %3809 = vrot.lane.b32.xlu0 %v3516, 16
      %v3810 = vpop.permute.xlu0 %3809
      %3811 = vrot.lane.b32.xlu0 %v3528, 16
      %v3812 = vpop.permute.xlu0 %3811
      %3813 = vrot.lane.b32.xlu0 %v3540, 16
      %v3814 = vpop.permute.xlu0 %3813
      %3815 = vrot.lane.b32.xlu0 %v3552, 16
      %v3816 = vpop.permute.xlu0 %3815
      %3817 = vrot.lane.b32.xlu0 %v3564, 16
      %v3818 = vpop.permute.xlu0 %3817
      %3819 = vrot.lane.b32.xlu0 %v3576, 16
      %v3820 = vpop.permute.xlu0 %3819
      %3821 = vrot.lane.b32.xlu0 %v3588, 16
      %v3822 = vpop.permute.xlu0 %3821
      %3823 = vrot.lane.b32.xlu0 %v3600, 16
      %v3824 = vpop.permute.xlu0 %3823
      %3825 = vrot.lane.b32.xlu0 %v3612, 16
      %v3826 = vpop.permute.xlu0 %3825
      %3827 = vrot.lane.b32.xlu0 %v3624, 16
      %v3828 = vpop.permute.xlu0 %3827
      %3829 = vrot.lane.b32.xlu0 %v3636, 16
      %v3830 = vpop.permute.xlu0 %3829
      %3831 = vrot.lane.b32.xlu0 %v3800, 16
      %v3832 = vpop.permute.xlu0 %3831
      %v3833 = vrot.slane %v3753, 1
      %v3834 = vrot.slane %v3788, 1
      %v3835 = vsel %vm720, %v3833, %v3834
      %3836 = vrot.lane.b32.xlu0 %v3674, 20
      %v3837 = vpop.permute.xlu0 %3836
      %3838 = vrot.lane.b32.xlu0 %v3677, 20
      %v3839 = vpop.permute.xlu0 %3838
      %3840 = vrot.lane.b32.xlu0 %v3680, 20
      %v3841 = vpop.permute.xlu0 %3840
      %3842 = vrot.lane.b32.xlu0 %v3683, 20
      %v3843 = vpop.permute.xlu0 %3842
      %3844 = vrot.lane.b32.xlu0 %v3686, 20
      %v3845 = vpop.permute.xlu0 %3844
      %3846 = vrot.lane.b32.xlu0 %v3689, 20
      %v3847 = vpop.permute.xlu0 %3846
      %3848 = vrot.lane.b32.xlu0 %v3692, 20
      %v3849 = vpop.permute.xlu0 %3848
      %3850 = vrot.lane.b32.xlu0 %v3695, 20
      %v3851 = vpop.permute.xlu0 %3850
      %3852 = vrot.lane.b32.xlu0 %v3698, 20
      %v3853 = vpop.permute.xlu0 %3852
      %3854 = vrot.lane.b32.xlu0 %v3701, 20
      %v3855 = vpop.permute.xlu0 %3854
      %3856 = vrot.lane.b32.xlu0 %v3704, 20
      %v3857 = vpop.permute.xlu0 %3856
      %3858 = vrot.lane.b32.xlu0 %v3707, 20
      %v3859 = vpop.permute.xlu0 %3858
      %3860 = vrot.lane.b32.xlu0 %v3710, 20
      %v3861 = vpop.permute.xlu0 %3860
      %3862 = vrot.lane.b32.xlu0 %v3713, 20
      %v3863 = vpop.permute.xlu0 %3862
      %3864 = vrot.lane.b32.xlu0 %v3716, 20
      %v3865 = vpop.permute.xlu0 %3864
      %3866 = vrot.lane.b32.xlu0 %v3835, 20
      %v3867 = vpop.permute.xlu0 %3866
      %v3870 = vunpack.c.l.b16 %v3314
      %v3871 = vunpack.c.l.b16 %v3315
      %v3872 = vpack.c.b16 %v3871, %v3870
      %3873 = vrot.lane.b32.xlu0 %v3383, 24
      %v3874 = vpop.permute.xlu0 %3873
      %3875 = vrot.lane.b32.xlu0 %v3384, 24
      %v3876 = vpop.permute.xlu0 %3875
      %3877 = vrot.lane.b32.xlu0 %v3385, 24
      %v3878 = vpop.permute.xlu0 %3877
      %3879 = vrot.lane.b32.xlu0 %v3386, 24
      %v3880 = vpop.permute.xlu0 %3879
      %3881 = vrot.lane.b32.xlu0 %v3387, 24
      %v3882 = vpop.permute.xlu0 %3881
      %3883 = vrot.lane.b32.xlu0 %v3388, 24
      %v3884 = vpop.permute.xlu0 %3883
      %3885 = vrot.lane.b32.xlu0 %v3389, 24
      %v3886 = vpop.permute.xlu0 %3885
      %3887 = vrot.lane.b32.xlu0 %v3390, 24
      %v3888 = vpop.permute.xlu0 %3887
      %3889 = vrot.lane.b32.xlu0 %v3391, 24
      %v3890 = vpop.permute.xlu0 %3889
      %3891 = vrot.lane.b32.xlu0 %v3392, 24
      %v3892 = vpop.permute.xlu0 %3891
      %3893 = vrot.lane.b32.xlu0 %v3393, 24
      %v3894 = vpop.permute.xlu0 %3893
      %3895 = vrot.lane.b32.xlu0 %v3394, 24
      %v3896 = vpop.permute.xlu0 %3895
      %3897 = vrot.lane.b32.xlu0 %v3395, 24
      %v3898 = vpop.permute.xlu0 %3897
      %3899 = vrot.lane.b32.xlu0 %v3396, 24
      %v3900 = vpop.permute.xlu0 %3899
      %3901 = vrot.lane.b32.xlu0 %v3753, 24
      %v3902 = vpop.permute.xlu0 %3901
      %3903 = vrot.lane.b32.xlu0 %v3872, 24
      %v3904 = vpop.permute.xlu0 %3903
      %v3906 = vunpack.c.l.b16 %v3316
      %v3907 = vpack.c.b16 %v3906, %v3906
      %v3909 = vshrl.u32 %v3872, 16
      %v3911 = vshll.u32 %v3872, 16
      %v3913 = vrot.slane %v3911, 1
      %v3914 = vor.u32 %v3909, %v3913
      %v3916 = vshll.u32 %v3907, 16
      %v3918 = vrot.slane %v3916, 1
      %v3919 = vsel %vm495, %v3914, %v3918
      %3920 = vrot.lane.b32.xlu0 %v3480, 28
      %v3921 = vpop.permute.xlu0 %3920
      %3922 = vrot.lane.b32.xlu0 %v3492, 28
      %v3923 = vpop.permute.xlu0 %3922
      %3924 = vrot.lane.b32.xlu0 %v3504, 28
      %v3925 = vpop.permute.xlu0 %3924
      %3926 = vrot.lane.b32.xlu0 %v3516, 28
      %v3927 = vpop.permute.xlu0 %3926
      %3928 = vrot.lane.b32.xlu0 %v3528, 28
      %v3929 = vpop.permute.xlu0 %3928
      %3930 = vrot.lane.b32.xlu0 %v3540, 28
      %v3931 = vpop.permute.xlu0 %3930
      %3932 = vrot.lane.b32.xlu0 %v3552, 28
      %v3933 = vpop.permute.xlu0 %3932
      %3934 = vrot.lane.b32.xlu0 %v3564, 28
      %v3935 = vpop.permute.xlu0 %3934
      %3936 = vrot.lane.b32.xlu0 %v3576, 28
      %v3937 = vpop.permute.xlu0 %3936
      %3938 = vrot.lane.b32.xlu0 %v3588, 28
      %v3939 = vpop.permute.xlu0 %3938
      %3940 = vrot.lane.b32.xlu0 %v3600, 28
      %v3941 = vpop.permute.xlu0 %3940
      %3942 = vrot.lane.b32.xlu0 %v3612, 28
      %v3943 = vpop.permute.xlu0 %3942
      %3944 = vrot.lane.b32.xlu0 %v3624, 28
      %v3945 = vpop.permute.xlu0 %3944
      %3946 = vrot.lane.b32.xlu0 %v3636, 28
      %v3947 = vpop.permute.xlu0 %3946
      %3948 = vrot.lane.b32.xlu0 %v3800, 28
      %v3949 = vpop.permute.xlu0 %3948
      %3950 = vrot.lane.b32.xlu0 %v3919, 28
      %v3951 = vpop.permute.xlu0 %3950
      %v3952 = vrot.slane %v3872, 1
      %v3953 = vrot.slane %v3907, 1
      %v3954 = vsel %vm720, %v3952, %v3953
      %3955 = vrot.lane.b32.xlu0 %v3677, 32
      %v3956 = vpop.permute.xlu0 %3955
      %3957 = vrot.lane.b32.xlu0 %v3680, 32
      %v3958 = vpop.permute.xlu0 %3957
      %3959 = vrot.lane.b32.xlu0 %v3683, 32
      %v3960 = vpop.permute.xlu0 %3959
      %3961 = vrot.lane.b32.xlu0 %v3686, 32
      %v3962 = vpop.permute.xlu0 %3961
      %3963 = vrot.lane.b32.xlu0 %v3689, 32
      %v3964 = vpop.permute.xlu0 %3963
      %3965 = vrot.lane.b32.xlu0 %v3692, 32
      %v3966 = vpop.permute.xlu0 %3965
      %3967 = vrot.lane.b32.xlu0 %v3695, 32
      %v3968 = vpop.permute.xlu0 %3967
      %3969 = vrot.lane.b32.xlu0 %v3698, 32
      %v3970 = vpop.permute.xlu0 %3969
      %3971 = vrot.lane.b32.xlu0 %v3701, 32
      %v3972 = vpop.permute.xlu0 %3971
      %3973 = vrot.lane.b32.xlu0 %v3704, 32
      %v3974 = vpop.permute.xlu0 %3973
      %3975 = vrot.lane.b32.xlu0 %v3707, 32
      %v3976 = vpop.permute.xlu0 %3975
      %3977 = vrot.lane.b32.xlu0 %v3710, 32
      %v3978 = vpop.permute.xlu0 %3977
      %3979 = vrot.lane.b32.xlu0 %v3713, 32
      %v3980 = vpop.permute.xlu0 %3979
      %3981 = vrot.lane.b32.xlu0 %v3716, 32
      %v3982 = vpop.permute.xlu0 %3981
      %3983 = vrot.lane.b32.xlu0 %v3835, 32
      %v3984 = vpop.permute.xlu0 %3983
      %3985 = vrot.lane.b32.xlu0 %v3954, 32
      %v3986 = vpop.permute.xlu0 %3985
      %v3988 = vsel %vm1039, %v3381, %v3638
      %v3990 = vsel %vm1039, %v3382, %v3640
      %v3992 = vsel %vm1039, %v3383, %v3642
      %v3994 = vsel %vm1039, %v3384, %v3644
      %v3996 = vsel %vm1039, %v3385, %v3646
      %v3998 = vsel %vm1039, %v3386, %v3648
      %v4000 = vsel %vm1039, %v3387, %v3650
      %v4002 = vsel %vm1039, %v3388, %v3652
      %v4004 = vsel %vm1039, %v3389, %v3654
      %v4006 = vsel %vm1039, %v3390, %v3656
      %v4008 = vsel %vm1039, %v3391, %v3658
      %v4010 = vsel %vm1039, %v3392, %v3660
      %v4012 = vsel %vm1039, %v3393, %v3662
      %v4014 = vsel %vm1039, %v3394, %v3664
      %v4016 = vsel %vm1039, %v3395, %v3666
      %v4018 = vsel %vm1039, %v3396, %v3668
      %v4020 = vsel %vm1072, %v3988, %v3718
      %v4022 = vsel %vm1072, %v3990, %v3720
      %v4024 = vsel %vm1072, %v3992, %v3722
      %v4026 = vsel %vm1072, %v3994, %v3724
      %v4028 = vsel %vm1072, %v3996, %v3726
      %v4030 = vsel %vm1072, %v3998, %v3728
      %v4032 = vsel %vm1072, %v4000, %v3730
      %v4034 = vsel %vm1072, %v4002, %v3732
      %v4036 = vsel %vm1072, %v4004, %v3734
      %v4038 = vsel %vm1072, %v4006, %v3736
      %v4040 = vsel %vm1072, %v4008, %v3738
      %v4042 = vsel %vm1072, %v4010, %v3740
      %v4044 = vsel %vm1072, %v4012, %v3742
      %v4046 = vsel %vm1072, %v4014, %v3744
      %v4048 = vsel %vm1072, %v4016, %v3746
      %v4050 = vsel %vm1072, %v4018, %v3748
      %v4052 = vsel %vm1105, %v4020, %v3755
      %v4054 = vsel %vm1105, %v4022, %v3757
      %v4056 = vsel %vm1105, %v4024, %v3759
      %v4058 = vsel %vm1105, %v4026, %v3761
      %v4060 = vsel %vm1105, %v4028, %v3763
      %v4062 = vsel %vm1105, %v4030, %v3765
      %v4064 = vsel %vm1105, %v4032, %v3767
      %v4066 = vsel %vm1105, %v4034, %v3769
      %v4068 = vsel %vm1105, %v4036, %v3771
      %v4070 = vsel %vm1105, %v4038, %v3773
      %v4072 = vsel %vm1105, %v4040, %v3775
      %v4074 = vsel %vm1105, %v4042, %v3777
      %v4076 = vsel %vm1105, %v4044, %v3779
      %v4078 = vsel %vm1105, %v4046, %v3781
      %v4080 = vsel %vm1105, %v4048, %v3783
      %v4082 = vsel %vm1105, %v4050, %v3785
      %v4084 = vsel %vm1138, %v4052, %v3802
      %v4086 = vsel %vm1138, %v4054, %v3804
      %v4088 = vsel %vm1138, %v4056, %v3806
      %v4090 = vsel %vm1138, %v4058, %v3808
      %v4092 = vsel %vm1138, %v4060, %v3810
      %v4094 = vsel %vm1138, %v4062, %v3812
      %v4096 = vsel %vm1138, %v4064, %v3814
      %v4098 = vsel %vm1138, %v4066, %v3816
      %v4100 = vsel %vm1138, %v4068, %v3818
      %v4102 = vsel %vm1138, %v4070, %v3820
      %v4104 = vsel %vm1138, %v4072, %v3822
      %v4106 = vsel %vm1138, %v4074, %v3824
      %v4108 = vsel %vm1138, %v4076, %v3826
      %v4110 = vsel %vm1138, %v4078, %v3828
      %v4112 = vsel %vm1138, %v4080, %v3830
      %v4114 = vsel %vm1138, %v4082, %v3832
      %v4116 = vsel %vm1171, %v4084, %v3837
      %v4118 = vsel %vm1171, %v4086, %v3839
      %v4120 = vsel %vm1171, %v4088, %v3841
      %v4122 = vsel %vm1171, %v4090, %v3843
      %v4124 = vsel %vm1171, %v4092, %v3845
      %v4126 = vsel %vm1171, %v4094, %v3847
      %v4128 = vsel %vm1171, %v4096, %v3849
      %v4130 = vsel %vm1171, %v4098, %v3851
      %v4132 = vsel %vm1171, %v4100, %v3853
      %v4134 = vsel %vm1171, %v4102, %v3855
      %v4136 = vsel %vm1171, %v4104, %v3857
      %v4138 = vsel %vm1171, %v4106, %v3859
      %v4140 = vsel %vm1171, %v4108, %v3861
      %v4142 = vsel %vm1171, %v4110, %v3863
      %v4144 = vsel %vm1171, %v4112, %v3865
      %v4146 = vsel %vm1171, %v4114, %v3867
      %v4148 = vsel %vm1204, %v4116, %v3874
      %v4150 = vsel %vm1204, %v4118, %v3876
      %v4152 = vsel %vm1204, %v4120, %v3878
      %v4154 = vsel %vm1204, %v4122, %v3880
      %v4156 = vsel %vm1204, %v4124, %v3882
      %v4158 = vsel %vm1204, %v4126, %v3884
      %v4160 = vsel %vm1204, %v4128, %v3886
      %v4162 = vsel %vm1204, %v4130, %v3888
      %v4164 = vsel %vm1204, %v4132, %v3890
      %v4166 = vsel %vm1204, %v4134, %v3892
      %v4168 = vsel %vm1204, %v4136, %v3894
      %v4170 = vsel %vm1204, %v4138, %v3896
      %v4172 = vsel %vm1204, %v4140, %v3898
      %v4174 = vsel %vm1204, %v4142, %v3900
      %v4176 = vsel %vm1204, %v4144, %v3902
      %v4178 = vsel %vm1204, %v4146, %v3904
      %v4180 = vsel %vm1237, %v4148, %v3921
      %v4182 = vsel %vm1237, %v4150, %v3923
      %v4184 = vsel %vm1237, %v4152, %v3925
      %v4186 = vsel %vm1237, %v4154, %v3927
      %v4188 = vsel %vm1237, %v4156, %v3929
      %v4190 = vsel %vm1237, %v4158, %v3931
      %v4192 = vsel %vm1237, %v4160, %v3933
      %v4194 = vsel %vm1237, %v4162, %v3935
      %v4196 = vsel %vm1237, %v4164, %v3937
      %v4198 = vsel %vm1237, %v4166, %v3939
      %v4200 = vsel %vm1237, %v4168, %v3941
      %v4202 = vsel %vm1237, %v4170, %v3943
      %v4204 = vsel %vm1237, %v4172, %v3945
      %v4206 = vsel %vm1237, %v4174, %v3947
      %v4208 = vsel %vm1237, %v4176, %v3949
      %v4210 = vsel %vm1237, %v4178, %v3951
      %v4212 = vsel %vm1270, %v4180, %v3956
      %v4214 = vsel %vm1270, %v4182, %v3958
      %v4216 = vsel %vm1270, %v4184, %v3960
      %v4218 = vsel %vm1270, %v4186, %v3962
      %v4220 = vsel %vm1270, %v4188, %v3964
      %v4222 = vsel %vm1270, %v4190, %v3966
      %v4224 = vsel %vm1270, %v4192, %v3968
      %v4226 = vsel %vm1270, %v4194, %v3970
      %v4228 = vsel %vm1270, %v4196, %v3972
      %v4230 = vsel %vm1270, %v4198, %v3974
      %v4232 = vsel %vm1270, %v4200, %v3976
      %v4234 = vsel %vm1270, %v4202, %v3978
      %v4236 = vsel %vm1270, %v4204, %v3980
      %v4238 = vsel %vm1270, %v4206, %v3982
      %v4240 = vsel %vm1270, %v4208, %v3984
      %v4242 = vsel %vm1270, %v4210, %v3986
      %v4243 = vld [vmem:[%s4] sm:$0xf]
      %v4244 = vld [vmem:[%s4 + $0x4] sm:$0xf]
      %v4245 = vld [vmem:[%s4 + $0x8] sm:$0xf]
      %v4246 = vld [vmem:[%s4 + $0xc] sm:$0xf]
      %v4247 = vld [vmem:[%s4 + $0x10] sm:$0x3]
      %v4248 = vld [vmem:[%s5] sm:$0x1]
      %v4250 = vperm.slane %v4248, 0
      %v4257 = vunpack.c.l.b16 %v4243
      %v4258 = vunpack.c.l.b16 %v4244
      %v4259 = vunpack.c.l.b16 %v4245
      %v4260 = vunpack.c.l.b16 %v4246
      %v4261 = vunpack.c.l.b16 %v4247
      %v4262 = vpack.c.b16 %v4258, %v4257
      %v4263 = vpack.c.b16 %v4260, %v4259
      %v4264 = vpack.c.b16 %v4261, %v4261
      %vm4267 = vcmask 293888
      %v4268 = vsel %vm4267, %v1272, 0
      %v4270 = vsel %vm4267, %v1274, 0
      %v4272 = vsel %vm4267, %v1276, 0
      %v4274 = vsel %vm4267, %v1278, 0
      %v4276 = vsel %vm4267, %v1280, 0
      %v4278 = vsel %vm4267, %v1282, 0
      %v4280 = vsel %vm4267, %v1284, 0
      %v4282 = vsel %vm4267, %v1286, 0
      %v4284 = vsel %vm4267, %v1288, 0
      %v4286 = vsel %vm4267, %v1290, 0
      %v4288 = vsel %vm4267, %v1292, 0
      %v4290 = vsel %vm4267, %v1294, 0
      %v4292 = vsel %vm4267, %v1296, 0
      %v4294 = vsel %vm4267, %v1298, 0
      %v4296 = vsel %vm4267, %v1300, 0
      %v4298 = vsel %vm4267, %v1302, 0
      %v4300 = vsel %vm4267, %v2252, 0
      %v4302 = vsel %vm4267, %v2254, 0
      %v4304 = vsel %vm4267, %v2256, 0
      %v4306 = vsel %vm4267, %v2258, 0
      %v4308 = vsel %vm4267, %v2260, 0
      %v4310 = vsel %vm4267, %v2262, 0
      %v4312 = vsel %vm4267, %v2264, 0
      %v4314 = vsel %vm4267, %v2266, 0
      %v4316 = vsel %vm4267, %v2268, 0
      %v4318 = vsel %vm4267, %v2270, 0
      %v4320 = vsel %vm4267, %v2272, 0
      %v4322 = vsel %vm4267, %v2274, 0
      %v4324 = vsel %vm4267, %v2276, 0
      %v4326 = vsel %vm4267, %v2278, 0
      %v4328 = vsel %vm4267, %v2280, 0
      %v4330 = vsel %vm4267, %v2282, 0
      %v4332 = vsel %vm4267, %v3232, 0
      %v4334 = vsel %vm4267, %v3234, 0
      %v4336 = vsel %vm4267, %v3236, 0
      %v4338 = vsel %vm4267, %v3238, 0
      %v4340 = vsel %vm4267, %v3240, 0
      %v4342 = vsel %vm4267, %v3242, 0
      %v4344 = vsel %vm4267, %v3244, 0
      %v4346 = vsel %vm4267, %v3246, 0
      %v4348 = vsel %vm4267, %v3248, 0
      %v4350 = vsel %vm4267, %v3250, 0
      %v4352 = vsel %vm4267, %v3252, 0
      %v4354 = vsel %vm4267, %v3254, 0
      %v4356 = vsel %vm4267, %v3256, 0
      %v4358 = vsel %vm4267, %v3258, 0
      %v4360 = vsel %vm4267, %v3260, 0
      %v4362 = vsel %vm4267, %v3262, 0
      %v4364 = vsel %vm4267, %v4212, 0
      %v4366 = vsel %vm4267, %v4214, 0
      %v4368 = vsel %vm4267, %v4216, 0
      %v4370 = vsel %vm4267, %v4218, 0
      %v4372 = vsel %vm4267, %v4220, 0
      %v4374 = vsel %vm4267, %v4222, 0
      %v4376 = vsel %vm4267, %v4224, 0
      %v4378 = vsel %vm4267, %v4226, 0
      %v4380 = vsel %vm4267, %v4228, 0
      %v4382 = vsel %vm4267, %v4230, 0
      %v4384 = vsel %vm4267, %v4232, 0
      %v4386 = vsel %vm4267, %v4234, 0
      %v4388 = vsel %vm4267, %v4236, 0
      %v4390 = vsel %vm4267, %v4238, 0
      %v4392 = vsel %vm4267, %v4240, 0
      %v4394 = vsel %vm4267, %v4242, 0
      %vm4396 = vcmask 1041408
      %v4398 = vsel %vm4396, %v4264, 0
      %4400 = vmatpush.bf16.msra.mxu0 0
      %4401 = vmatpush.bf16.msra.mxu0 0
      %4402 = vmatpush.bf16.msra.mxu0 0
      %4403 = vmatpush.bf16.msra.mxu0 0
      %4404 = vmatpush.bf16.msra.mxu0 0
      %4405 = vmatpush.bf16.msra.mxu0 %v4398
      %4406 = vmatpush.bf16.msra.mxu0 %v4263
      %4407 = vmatpush.bf16.msra.mxu0 %v4262
      %4408 = vmatmul.bf16.gmra.mxu0 %v4268
      %v4409 = vpop.f32.mrf.mxu0
      %v4410 = vadd.f32 %v4250, %v4409
      %v4411 = vpop.f32.mrf.mxu0
      %v4412 = vadd.f32 %v4250, %v4411
      %4413 = vmatmul.bf16.gmra.mxu0 %v4270
      %v4414 = vpop.f32.mrf.mxu0
      %v4415 = vadd.f32 %v4250, %v4414
      %v4416 = vpop.f32.mrf.mxu0
      %v4417 = vadd.f32 %v4250, %v4416
      %4418 = vmatmul.bf16.gmra.mxu0 %v4272
      %v4419 = vpop.f32.mrf.mxu0
      %v4420 = vadd.f32 %v4250, %v4419
      %v4421 = vpop.f32.mrf.mxu0
      %v4422 = vadd.f32 %v4250, %v4421
      %4423 = vmatmul.bf16.gmra.mxu0 %v4274
      %v4424 = vpop.f32.mrf.mxu0
      %v4425 = vadd.f32 %v4250, %v4424
      %v4426 = vpop.f32.mrf.mxu0
      %v4427 = vadd.f32 %v4250, %v4426
      %4428 = vmatmul.bf16.gmra.mxu0 %v4276
      %v4429 = vpop.f32.mrf.mxu0
      %v4430 = vadd.f32 %v4250, %v4429
      %v4431 = vpop.f32.mrf.mxu0
      %v4432 = vadd.f32 %v4250, %v4431
      %4433 = vmatmul.bf16.gmra.mxu0 %v4278
      %v4434 = vpop.f32.mrf.mxu0
      %v4435 = vadd.f32 %v4250, %v4434
      %v4436 = vpop.f32.mrf.mxu0
      %v4437 = vadd.f32 %v4250, %v4436
      %4438 = vmatmul.bf16.gmra.mxu0 %v4280
      %v4439 = vpop.f32.mrf.mxu0
      %v4440 = vadd.f32 %v4250, %v4439
      %v4441 = vpop.f32.mrf.mxu0
      %v4442 = vadd.f32 %v4250, %v4441
      %4443 = vmatmul.bf16.gmra.mxu0 %v4282
      %v4444 = vpop.f32.mrf.mxu0
      %v4445 = vadd.f32 %v4250, %v4444
      %v4446 = vpop.f32.mrf.mxu0
      %v4447 = vadd.f32 %v4250, %v4446
      %4448 = vmatmul.bf16.gmra.mxu0 %v4284
      %v4449 = vpop.f32.mrf.mxu0
      %v4450 = vadd.f32 %v4250, %v4449
      %v4451 = vpop.f32.mrf.mxu0
      %v4452 = vadd.f32 %v4250, %v4451
      %4453 = vmatmul.bf16.gmra.mxu0 %v4286
      %v4454 = vpop.f32.mrf.mxu0
      %v4455 = vadd.f32 %v4250, %v4454
      %v4456 = vpop.f32.mrf.mxu0
      %v4457 = vadd.f32 %v4250, %v4456
      %4458 = vmatmul.bf16.gmra.mxu0 %v4288
      %v4459 = vpop.f32.mrf.mxu0
      %v4460 = vadd.f32 %v4250, %v4459
      %v4461 = vpop.f32.mrf.mxu0
      %v4462 = vadd.f32 %v4250, %v4461
      %4463 = vmatmul.bf16.gmra.mxu0 %v4290
      %v4464 = vpop.f32.mrf.mxu0
      %v4465 = vadd.f32 %v4250, %v4464
      %v4466 = vpop.f32.mrf.mxu0
      %v4467 = vadd.f32 %v4250, %v4466
      %4468 = vmatmul.bf16.gmra.mxu0 %v4292
      %v4469 = vpop.f32.mrf.mxu0
      %v4470 = vadd.f32 %v4250, %v4469
      %v4471 = vpop.f32.mrf.mxu0
      %v4472 = vadd.f32 %v4250, %v4471
      %4473 = vmatmul.bf16.gmra.mxu0 %v4294
      %v4474 = vpop.f32.mrf.mxu0
      %v4475 = vadd.f32 %v4250, %v4474
      %v4476 = vpop.f32.mrf.mxu0
      %v4477 = vadd.f32 %v4250, %v4476
      %4478 = vmatmul.bf16.gmra.mxu0 %v4296
      %v4479 = vpop.f32.mrf.mxu0
      %v4480 = vadd.f32 %v4250, %v4479
      %v4481 = vpop.f32.mrf.mxu0
      %v4482 = vadd.f32 %v4250, %v4481
      %4483 = vmatmul.bf16.gmra.mxu0 %v4298
      %v4484 = vpop.f32.mrf.mxu0
      %v4485 = vadd.f32 %v4250, %v4484
      %v4486 = vpop.f32.mrf.mxu0
      %v4487 = vadd.f32 %v4250, %v4486
      %4488 = vmatmul.bf16.gmra.mxu0 %v4300
      %v4489 = vpop.f32.mrf.mxu0
      %v4490 = vadd.f32 %v4250, %v4489
      %v4491 = vpop.f32.mrf.mxu0
      %v4492 = vadd.f32 %v4250, %v4491
      %4493 = vmatmul.bf16.gmra.mxu0 %v4302
      %v4494 = vpop.f32.mrf.mxu0
      %v4495 = vadd.f32 %v4250, %v4494
      %v4496 = vpop.f32.mrf.mxu0
      %v4497 = vadd.f32 %v4250, %v4496
      %4498 = vmatmul.bf16.gmra.mxu0 %v4304
      %v4499 = vpop.f32.mrf.mxu0
      %v4500 = vadd.f32 %v4250, %v4499
      %v4501 = vpop.f32.mrf.mxu0
      %v4502 = vadd.f32 %v4250, %v4501
      %4503 = vmatmul.bf16.gmra.mxu0 %v4306
      %v4504 = vpop.f32.mrf.mxu0
      %v4505 = vadd.f32 %v4250, %v4504
      %v4506 = vpop.f32.mrf.mxu0
      %v4507 = vadd.f32 %v4250, %v4506
      %4508 = vmatmul.bf16.gmra.mxu0 %v4308
      %v4509 = vpop.f32.mrf.mxu0
      %v4510 = vadd.f32 %v4250, %v4509
      %v4511 = vpop.f32.mrf.mxu0
      %v4512 = vadd.f32 %v4250, %v4511
      %4513 = vmatmul.bf16.gmra.mxu0 %v4310
      %v4514 = vpop.f32.mrf.mxu0
      %v4515 = vadd.f32 %v4250, %v4514
      %v4516 = vpop.f32.mrf.mxu0
      %v4517 = vadd.f32 %v4250, %v4516
      %4518 = vmatmul.bf16.gmra.mxu0 %v4312
      %v4519 = vpop.f32.mrf.mxu0
      %v4520 = vadd.f32 %v4250, %v4519
      %v4521 = vpop.f32.mrf.mxu0
      %v4522 = vadd.f32 %v4250, %v4521
      %4523 = vmatmul.bf16.gmra.mxu0 %v4314
      %v4524 = vpop.f32.mrf.mxu0
      %v4525 = vadd.f32 %v4250, %v4524
      %v4526 = vpop.f32.mrf.mxu0
      %v4527 = vadd.f32 %v4250, %v4526
      %4528 = vmatmul.bf16.gmra.mxu0 %v4316
      %v4529 = vpop.f32.mrf.mxu0
      %v4530 = vadd.f32 %v4250, %v4529
      %v4531 = vpop.f32.mrf.mxu0
      %v4532 = vadd.f32 %v4250, %v4531
      %4533 = vmatmul.bf16.gmra.mxu0 %v4318
      %v4534 = vpop.f32.mrf.mxu0
      %v4535 = vadd.f32 %v4250, %v4534
      %v4536 = vpop.f32.mrf.mxu0
      %v4537 = vadd.f32 %v4250, %v4536
      %4538 = vmatmul.bf16.gmra.mxu0 %v4320
      %v4539 = vpop.f32.mrf.mxu0
      %v4540 = vadd.f32 %v4250, %v4539
      %v4541 = vpop.f32.mrf.mxu0
      %v4542 = vadd.f32 %v4250, %v4541
      %4543 = vmatmul.bf16.gmra.mxu0 %v4322
      %v4544 = vpop.f32.mrf.mxu0
      %v4545 = vadd.f32 %v4250, %v4544
      %v4546 = vpop.f32.mrf.mxu0
      %v4547 = vadd.f32 %v4250, %v4546
      %4548 = vmatmul.bf16.gmra.mxu0 %v4324
      %v4549 = vpop.f32.mrf.mxu0
      %v4550 = vadd.f32 %v4250, %v4549
      %v4551 = vpop.f32.mrf.mxu0
      %v4552 = vadd.f32 %v4250, %v4551
      %4553 = vmatmul.bf16.gmra.mxu0 %v4326
      %v4554 = vpop.f32.mrf.mxu0
      %v4555 = vadd.f32 %v4250, %v4554
      %v4556 = vpop.f32.mrf.mxu0
      %v4557 = vadd.f32 %v4250, %v4556
      %4558 = vmatmul.bf16.gmra.mxu0 %v4328
      %v4559 = vpop.f32.mrf.mxu0
      %v4560 = vadd.f32 %v4250, %v4559
      %v4561 = vpop.f32.mrf.mxu0
      %v4562 = vadd.f32 %v4250, %v4561
      %4563 = vmatmul.bf16.gmra.mxu0 %v4330
      %v4564 = vpop.f32.mrf.mxu0
      %v4565 = vadd.f32 %v4250, %v4564
      %v4566 = vpop.f32.mrf.mxu0
      %v4567 = vadd.f32 %v4250, %v4566
      %4568 = vmatmul.bf16.gmra.mxu0 %v4332
      %v4569 = vpop.f32.mrf.mxu0
      %v4570 = vadd.f32 %v4250, %v4569
      %v4571 = vpop.f32.mrf.mxu0
      %v4572 = vadd.f32 %v4250, %v4571
      %4573 = vmatmul.bf16.gmra.mxu0 %v4334
      %v4574 = vpop.f32.mrf.mxu0
      %v4575 = vadd.f32 %v4250, %v4574
      %v4576 = vpop.f32.mrf.mxu0
      %v4577 = vadd.f32 %v4250, %v4576
      %4578 = vmatmul.bf16.gmra.mxu0 %v4336
      %v4579 = vpop.f32.mrf.mxu0
      %v4580 = vadd.f32 %v4250, %v4579
      %v4581 = vpop.f32.mrf.mxu0
      %v4582 = vadd.f32 %v4250, %v4581
      %4583 = vmatmul.bf16.gmra.mxu0 %v4338
      %v4584 = vpop.f32.mrf.mxu0
      %v4585 = vadd.f32 %v4250, %v4584
      %v4586 = vpop.f32.mrf.mxu0
      %v4587 = vadd.f32 %v4250, %v4586
      %4588 = vmatmul.bf16.gmra.mxu0 %v4340
      %v4589 = vpop.f32.mrf.mxu0
      %v4590 = vadd.f32 %v4250, %v4589
      %v4591 = vpop.f32.mrf.mxu0
      %v4592 = vadd.f32 %v4250, %v4591
      %4593 = vmatmul.bf16.gmra.mxu0 %v4342
      %v4594 = vpop.f32.mrf.mxu0
      %v4595 = vadd.f32 %v4250, %v4594
      %v4596 = vpop.f32.mrf.mxu0
      %v4597 = vadd.f32 %v4250, %v4596
      %4598 = vmatmul.bf16.gmra.mxu0 %v4344
      %v4599 = vpop.f32.mrf.mxu0
      %v4600 = vadd.f32 %v4250, %v4599
      %v4601 = vpop.f32.mrf.mxu0
      %v4602 = vadd.f32 %v4250, %v4601
      %4603 = vmatmul.bf16.gmra.mxu0 %v4346
      %v4604 = vpop.f32.mrf.mxu0
      %v4605 = vadd.f32 %v4250, %v4604
      %v4606 = vpop.f32.mrf.mxu0
      %v4607 = vadd.f32 %v4250, %v4606
      %4608 = vmatmul.bf16.gmra.mxu0 %v4348
      %v4609 = vpop.f32.mrf.mxu0
      %v4610 = vadd.f32 %v4250, %v4609
      %v4611 = vpop.f32.mrf.mxu0
      %v4612 = vadd.f32 %v4250, %v4611
      %4613 = vmatmul.bf16.gmra.mxu0 %v4350
      %v4614 = vpop.f32.mrf.mxu0
      %v4615 = vadd.f32 %v4250, %v4614
      %v4616 = vpop.f32.mrf.mxu0
      %v4617 = vadd.f32 %v4250, %v4616
      %4618 = vmatmul.bf16.gmra.mxu0 %v4352
      %v4619 = vpop.f32.mrf.mxu0
      %v4620 = vadd.f32 %v4250, %v4619
      %v4621 = vpop.f32.mrf.mxu0
      %v4622 = vadd.f32 %v4250, %v4621
      %4623 = vmatmul.bf16.gmra.mxu0 %v4354
      %v4624 = vpop.f32.mrf.mxu0
      %v4625 = vadd.f32 %v4250, %v4624
      %v4626 = vpop.f32.mrf.mxu0
      %v4627 = vadd.f32 %v4250, %v4626
      %4628 = vmatmul.bf16.gmra.mxu0 %v4356
      %v4629 = vpop.f32.mrf.mxu0
      %v4630 = vadd.f32 %v4250, %v4629
      %v4631 = vpop.f32.mrf.mxu0
      %v4632 = vadd.f32 %v4250, %v4631
      %4633 = vmatmul.bf16.gmra.mxu0 %v4358
      %v4634 = vpop.f32.mrf.mxu0
      %v4635 = vadd.f32 %v4250, %v4634
      %v4636 = vpop.f32.mrf.mxu0
      %v4637 = vadd.f32 %v4250, %v4636
      %4638 = vmatmul.bf16.gmra.mxu0 %v4360
      %v4639 = vpop.f32.mrf.mxu0
      %v4640 = vadd.f32 %v4250, %v4639
      %v4641 = vpop.f32.mrf.mxu0
      %v4642 = vadd.f32 %v4250, %v4641
      %4643 = vmatmul.bf16.gmra.mxu0 %v4362
      %v4644 = vpop.f32.mrf.mxu0
      %v4645 = vadd.f32 %v4250, %v4644
      %v4646 = vpop.f32.mrf.mxu0
      %v4647 = vadd.f32 %v4250, %v4646
      %4648 = vmatmul.bf16.gmra.mxu0 %v4364
      %v4649 = vpop.f32.mrf.mxu0
      %v4650 = vadd.f32 %v4250, %v4649
      %v4651 = vpop.f32.mrf.mxu0
      %v4652 = vadd.f32 %v4250, %v4651
      %4653 = vmatmul.bf16.gmra.mxu0 %v4366
      %v4654 = vpop.f32.mrf.mxu0
      %v4655 = vadd.f32 %v4250, %v4654
      %v4656 = vpop.f32.mrf.mxu0
      %v4657 = vadd.f32 %v4250, %v4656
      %4658 = vmatmul.bf16.gmra.mxu0 %v4368
      %v4659 = vpop.f32.mrf.mxu0
      %v4660 = vadd.f32 %v4250, %v4659
      %v4661 = vpop.f32.mrf.mxu0
      %v4662 = vadd.f32 %v4250, %v4661
      %4663 = vmatmul.bf16.gmra.mxu0 %v4370
      %v4664 = vpop.f32.mrf.mxu0
      %v4665 = vadd.f32 %v4250, %v4664
      %v4666 = vpop.f32.mrf.mxu0
      %v4667 = vadd.f32 %v4250, %v4666
      %4668 = vmatmul.bf16.gmra.mxu0 %v4372
      %v4669 = vpop.f32.mrf.mxu0
      %v4670 = vadd.f32 %v4250, %v4669
      %v4671 = vpop.f32.mrf.mxu0
      %v4672 = vadd.f32 %v4250, %v4671
      %4673 = vmatmul.bf16.gmra.mxu0 %v4374
      %v4674 = vpop.f32.mrf.mxu0
      %v4675 = vadd.f32 %v4250, %v4674
      %v4676 = vpop.f32.mrf.mxu0
      %v4677 = vadd.f32 %v4250, %v4676
      %4678 = vmatmul.bf16.gmra.mxu0 %v4376
      %v4679 = vpop.f32.mrf.mxu0
      %v4680 = vadd.f32 %v4250, %v4679
      %v4681 = vpop.f32.mrf.mxu0
      %v4682 = vadd.f32 %v4250, %v4681
      %4683 = vmatmul.bf16.gmra.mxu0 %v4378
      %v4684 = vpop.f32.mrf.mxu0
      %v4685 = vadd.f32 %v4250, %v4684
      %v4686 = vpop.f32.mrf.mxu0
      %v4687 = vadd.f32 %v4250, %v4686
      %4688 = vmatmul.bf16.gmra.mxu0 %v4380
      %v4689 = vpop.f32.mrf.mxu0
      %v4690 = vadd.f32 %v4250, %v4689
      %v4691 = vpop.f32.mrf.mxu0
      %v4692 = vadd.f32 %v4250, %v4691
      %4693 = vmatmul.bf16.gmra.mxu0 %v4382
      %v4694 = vpop.f32.mrf.mxu0
      %v4695 = vadd.f32 %v4250, %v4694
      %v4696 = vpop.f32.mrf.mxu0
      %v4697 = vadd.f32 %v4250, %v4696
      %4698 = vmatmul.bf16.gmra.mxu0 %v4384
      %v4699 = vpop.f32.mrf.mxu0
      %v4700 = vadd.f32 %v4250, %v4699
      %v4701 = vpop.f32.mrf.mxu0
      %v4702 = vadd.f32 %v4250, %v4701
      %4703 = vmatmul.bf16.gmra.mxu0 %v4386
      %v4704 = vpop.f32.mrf.mxu0
      %v4705 = vadd.f32 %v4250, %v4704
      %v4706 = vpop.f32.mrf.mxu0
      %v4707 = vadd.f32 %v4250, %v4706
      %4708 = vmatmul.bf16.gmra.mxu0 %v4388
      %v4709 = vpop.f32.mrf.mxu0
      %v4710 = vadd.f32 %v4250, %v4709
      %v4711 = vpop.f32.mrf.mxu0
      %v4712 = vadd.f32 %v4250, %v4711
      %4713 = vmatmul.bf16.gmra.mxu0 %v4390
      %v4714 = vpop.f32.mrf.mxu0
      %v4715 = vadd.f32 %v4250, %v4714
      %v4716 = vpop.f32.mrf.mxu0
      %v4717 = vadd.f32 %v4250, %v4716
      %4718 = vmatmul.bf16.gmra.mxu0 %v4392
      %v4719 = vpop.f32.mrf.mxu0
      %v4720 = vadd.f32 %v4250, %v4719
      %v4721 = vpop.f32.mrf.mxu0
      %v4722 = vadd.f32 %v4250, %v4721
      %4723 = vmatmul.bf16.gmra.mxu0 %v4394
      %v4724 = vpop.f32.mrf.mxu0
      %v4725 = vadd.f32 %v4250, %v4724
      %v4726 = vpop.f32.mrf.mxu0
      %v4727 = vadd.f32 %v4250, %v4726
      %4728 = vdwg.mxu0
      %v4729 = vmul.f32 %v4410, %v4490
      %v4730 = vmul.f32 %v4412, %v4492
      %v4731 = vmul.f32 %v4415, %v4495
      %v4732 = vmul.f32 %v4417, %v4497
      %v4733 = vmul.f32 %v4420, %v4500
      %v4734 = vmul.f32 %v4422, %v4502
      %v4735 = vmul.f32 %v4425, %v4505
      %v4736 = vmul.f32 %v4427, %v4507
      %v4737 = vmul.f32 %v4430, %v4510
      %v4738 = vmul.f32 %v4432, %v4512
      %v4739 = vmul.f32 %v4435, %v4515
      %v4740 = vmul.f32 %v4437, %v4517
      %v4741 = vmul.f32 %v4440, %v4520
      %v4742 = vmul.f32 %v4442, %v4522
      %v4743 = vmul.f32 %v4445, %v4525
      %v4744 = vmul.f32 %v4447, %v4527
      %v4745 = vmul.f32 %v4450, %v4530
      %v4746 = vmul.f32 %v4452, %v4532
      %v4747 = vmul.f32 %v4455, %v4535
      %v4748 = vmul.f32 %v4457, %v4537
      %v4749 = vmul.f32 %v4460, %v4540
      %v4750 = vmul.f32 %v4462, %v4542
      %v4751 = vmul.f32 %v4465, %v4545
      %v4752 = vmul.f32 %v4467, %v4547
      %v4753 = vmul.f32 %v4470, %v4550
      %v4754 = vmul.f32 %v4472, %v4552
      %v4755 = vmul.f32 %v4475, %v4555
      %v4756 = vmul.f32 %v4477, %v4557
      %v4757 = vmul.f32 %v4480, %v4560
      %v4758 = vmul.f32 %v4482, %v4562
      %v4759 = vmul.f32 %v4485, %v4565
      %v4760 = vmul.f32 %v4487, %v4567
      %v4761 = vmul.f32 %v4729, %v4570
      %v4762 = vmul.f32 %v4730, %v4572
      %v4763 = vmul.f32 %v4731, %v4575
      %v4764 = vmul.f32 %v4732, %v4577
      %v4765 = vmul.f32 %v4733, %v4580
      %v4766 = vmul.f32 %v4734, %v4582
      %v4767 = vmul.f32 %v4735, %v4585
      %v4768 = vmul.f32 %v4736, %v4587
      %v4769 = vmul.f32 %v4737, %v4590
      %v4770 = vmul.f32 %v4738, %v4592
      %v4771 = vmul.f32 %v4739, %v4595
      %v4772 = vmul.f32 %v4740, %v4597
      %v4773 = vmul.f32 %v4741, %v4600
      %v4774 = vmul.f32 %v4742, %v4602
      %v4775 = vmul.f32 %v4743, %v4605
      %v4776 = vmul.f32 %v4744, %v4607
      %v4777 = vmul.f32 %v4745, %v4610
      %v4778 = vmul.f32 %v4746, %v4612
      %v4779 = vmul.f32 %v4747, %v4615
      %v4780 = vmul.f32 %v4748, %v4617
      %v4781 = vmul.f32 %v4749, %v4620
      %v4782 = vmul.f32 %v4750, %v4622
      %v4783 = vmul.f32 %v4751, %v4625
      %v4784 = vmul.f32 %v4752, %v4627
      %v4785 = vmul.f32 %v4753, %v4630
      %v4786 = vmul.f32 %v4754, %v4632
      %v4787 = vmul.f32 %v4755, %v4635
      %v4788 = vmul.f32 %v4756, %v4637
      %v4789 = vmul.f32 %v4757, %v4640
      %v4790 = vmul.f32 %v4758, %v4642
      %v4791 = vmul.f32 %v4759, %v4645
      %v4792 = vmul.f32 %v4760, %v4647
      %v4793 = vmul.f32 %v4761, %v4650
      %v4794 = vmul.f32 %v4762, %v4652
      %v4795 = vmul.f32 %v4763, %v4655
      %v4796 = vmul.f32 %v4764, %v4657
      %v4797 = vmul.f32 %v4765, %v4660
      %v4798 = vmul.f32 %v4766, %v4662
      %v4799 = vmul.f32 %v4767, %v4665
      %v4800 = vmul.f32 %v4768, %v4667
      %v4801 = vmul.f32 %v4769, %v4670
      %v4802 = vmul.f32 %v4770, %v4672
      %v4803 = vmul.f32 %v4771, %v4675
      %v4804 = vmul.f32 %v4772, %v4677
      %v4805 = vmul.f32 %v4773, %v4680
      %v4806 = vmul.f32 %v4774, %v4682
      %v4807 = vmul.f32 %v4775, %v4685
      %v4808 = vmul.f32 %v4776, %v4687
      %v4809 = vmul.f32 %v4777, %v4690
      %v4810 = vmul.f32 %v4778, %v4692
      %v4811 = vmul.f32 %v4779, %v4695
      %v4812 = vmul.f32 %v4780, %v4697
      %v4813 = vmul.f32 %v4781, %v4700
      %v4814 = vmul.f32 %v4782, %v4702
      %v4815 = vmul.f32 %v4783, %v4705
      %v4816 = vmul.f32 %v4784, %v4707
      %v4817 = vmul.f32 %v4785, %v4710
      %v4818 = vmul.f32 %v4786, %v4712
      %v4819 = vmul.f32 %v4787, %v4715
      %v4820 = vmul.f32 %v4788, %v4717
      %v4821 = vmul.f32 %v4789, %v4720
      %v4822 = vmul.f32 %v4790, %v4722
      %v4823 = vmul.f32 %v4791, %v4725
      %v4824 = vmul.f32 %v4792, %v4727
      %4825 = vxpose.xlu0.b32.start [1/16] %v4793, 128
      %4826 = vxpose.xlu0.b32.cont [2/16] %v4794, 128
      %4827 = vxpose.xlu0.b32.cont [3/16] %v4795, 128
      %4828 = vxpose.xlu0.b32.cont [4/16] %v4796, 128
      %4829 = vxpose.xlu0.b32.cont [5/16] %v4797, 128
      %4830 = vxpose.xlu0.b32.cont [6/16] %v4798, 128
      %4831 = vxpose.xlu0.b32.cont [7/16] %v4799, 128
      %4832 = vxpose.xlu0.b32.cont [8/16] %v4800, 128
      %4833 = vxpose.xlu0.b32.cont [9/16] %v4801, 128
      %4834 = vxpose.xlu0.b32.cont [10/16] %v4802, 128
      %4835 = vxpose.xlu0.b32.cont [11/16] %v4803, 128
      %4836 = vxpose.xlu0.b32.cont [12/16] %v4804, 128
      %4837 = vxpose.xlu0.b32.cont [13/16] %v4805, 128
      %4838 = vxpose.xlu0.b32.cont [14/16] %v4806, 128
      %4839 = vxpose.xlu0.b32.cont [15/16] %v4807, 128
      %4840 = vxpose.xlu0.b32.end [16/16] %v4808, 128
      %v4841 = vpop.trf.xlu0
      %v4842 = vpop.trf.xlu0
      %v4843 = vpop.trf.xlu0
      %v4844 = vpop.trf.xlu0
      %v4845 = vpop.trf.xlu0
      %v4846 = vpop.trf.xlu0
      %v4847 = vpop.trf.xlu0
      %v4848 = vpop.trf.xlu0
      %v4849 = vpop.trf.xlu0
      %v4850 = vpop.trf.xlu0
      %v4851 = vpop.trf.xlu0
      %v4852 = vpop.trf.xlu0
      %v4853 = vpop.trf.xlu0
      %v4854 = vpop.trf.xlu0
      %v4855 = vpop.trf.xlu0
      %v4856 = vpop.trf.xlu0
      %4857 = vxpose.xlu0.b32.start [1/16] %v4809, 128
      %4858 = vxpose.xlu0.b32.cont [2/16] %v4810, 128
      %4859 = vxpose.xlu0.b32.cont [3/16] %v4811, 128
      %4860 = vxpose.xlu0.b32.cont [4/16] %v4812, 128
      %4861 = vxpose.xlu0.b32.cont [5/16] %v4813, 128
      %4862 = vxpose.xlu0.b32.cont [6/16] %v4814, 128
      %4863 = vxpose.xlu0.b32.cont [7/16] %v4815, 128
      %4864 = vxpose.xlu0.b32.cont [8/16] %v4816, 128
      %4865 = vxpose.xlu0.b32.cont [9/16] %v4817, 128
      %4866 = vxpose.xlu0.b32.cont [10/16] %v4818, 128
      %4867 = vxpose.xlu0.b32.cont [11/16] %v4819, 128
      %4868 = vxpose.xlu0.b32.cont [12/16] %v4820, 128
      %4869 = vxpose.xlu0.b32.cont [13/16] %v4821, 128
      %4870 = vxpose.xlu0.b32.cont [14/16] %v4822, 128
      %4871 = vxpose.xlu0.b32.cont [15/16] %v4823, 128
      %4872 = vxpose.xlu0.b32.end [16/16] %v4824, 128
      %v4873 = vpop.trf.xlu0
      %v4874 = vpop.trf.xlu0
      %v4875 = vpop.trf.xlu0
      %v4876 = vpop.trf.xlu0
      %v4877 = vpop.trf.xlu0
      %v4878 = vpop.trf.xlu0
      %v4879 = vpop.trf.xlu0
      %v4880 = vpop.trf.xlu0
      %v4881 = vpop.trf.xlu0
      %v4882 = vpop.trf.xlu0
      %v4883 = vpop.trf.xlu0
      %v4884 = vpop.trf.xlu0
      %v4885 = vpop.trf.xlu0
      %v4886 = vpop.trf.xlu0
      %v4887 = vpop.trf.xlu0
      %v4888 = vpop.trf.xlu0
      %v4891 = vrot.slane %v4873, 4
      %vm4892 = vcmask 1043456
      %v4893 = vsel %vm4892, %v4841, %v4891
      %4895 = vst [vmem:[%s311] sm:$0xff] %v4893
      %p4896 = scmp.lt.s32.totalorder %s17, 1
      %s4897 = scalar_select %p4896, %s17, 1
      %s4898 = smul.addr %s4897, 2
      %s4899 = smul.addr %s4898, 4
      %s4900 = scalar_lea.vmem %s6, %s4899
      // Predicated region
      $region45: #{sdi_forward.1} parent=43 // pred_check
        %p4901 = pneg %p181
      $region46: #{sdi_forward.1} parent=43 // pred_check_branch
        %4903 = sbr.rel (%p4901) target = $region48
      $region47: #{sdi_forward.1} parent=43 // pred_region
        _
      $region48: #{sdi_forward.1} parent=43 // pred_fallthru
        _
    $region44: #{sdi_forward.1} parent=5 // pred_fallthru
      _
    %p4904 = scmp.le.s32.totalorder 2, %s12
    // Predicated region
    $region49: #{sdi_forward.1} parent=5 // pred_check
      %p4905 = pneg %p4904
    $region50: #{sdi_forward.1} parent=5 // pred_check_branch
      %4907 = sbr.rel (%p4905) target = $region52
    $region51: #{sdi_forward.1} parent=5 // pred_region
      %s4908 = ssub.s32 %s12, 2
      // Predicated region
      $region53: #{sdi_forward.1} parent=51 // pred_check
        %p4909 = pneg %p187
      $region54: #{sdi_forward.1} parent=51 // pred_check_branch
        %4911 = sbr.rel (%p4909) target = $region56
      $region55: #{sdi_forward.1} parent=51 // pred_region
        %p4912 = scmp.lt.s32.totalorder %s18, 1
        %s4913 = scalar_select %p4912, %s18, 1
        %s4914 = smul.addr %s4913, 2
        %s4915 = smul.addr %s4914, 4
        %s4916 = scalar_lea.vmem %s6, %s4915
      $region56: #{sdi_forward.1} parent=51 // pred_fallthru
        _
    $region52: #{sdi_forward.1} parent=5 // pred_fallthru
      _
  $region6: #{sdi_forward.1} parent=0 // loop_footer
    %s16 = sadd.s32 1, %s12
  $region7: #{sdi_forward.1} parent=0 // loop_footer_branch
    %11 = sbr.rel target = $region3
  $region8: #{sdi_forward.1} parent=0 // loop_exit
    _

</llo_original>
